<compile_context>
chip_gen: v7x
topology: tpu7x:2x2x1
jax: 0.10.0
libtpu: 0.0.40
codegen_flags: <defaults>
</compile_context>

<pallas_src>
import math

import jax
import jax.numpy as jnp
from jax.experimental import pallas as pl
from jax.experimental.pallas import tpu as pltpu


def _round_up(n, m):
    return ((n + m - 1) // m) * m


def _erf_poly(x):
    """Abramowitz & Stegun 7.1.26 polynomial erf (f32).

    Uses an exact divide (not pl.reciprocal(approx=True)) so the ~1e-6-level
    f32 accuracy actually holds and GELU tracks torch's exact erf GELU; the
    kernel's overall tolerance vs PyTorch is set by the bf16 matmul operands.
    """
    a1, a2, a3, a4, a5 = 0.254829592, -0.284496736, 1.421413741, -1.453152027, 1.061405429
    p = 0.3275911
    z = jnp.abs(x)
    t = 1.0 / (1.0 + p * z)
    poly = ((((a5 * t + a4) * t + a3) * t + a2) * t + a1) * t
    y = 1.0 - poly * jnp.exp(-z * z)
    return jnp.where(x >= 0, y, -y)


def _gelu(x):
    # nn.GELU() default (approximate='none'): 0.5 * x * (1 + erf(x / sqrt(2)))
    return 0.5 * x * (1.0 + _erf_poly(x * 0.7071067811865476))


def _make_kernel(H, W, Cp):
    HW = H * W

    def kernel(x_ref, w1_ref, b1_ref, w3_ref, b3_ref, o_ref, hpad_ref):
        C = o_ref.shape[-1]

        # ---- 1x1 conv (channel matmul, bf16 operands / f32 accum) + GELU ----
        h = jnp.dot(x_ref[0], w1_ref[...],
                    preferred_element_type=jnp.float32)            # [HW, Cp]
        h = _gelu(h + b1_ref[...])                                 # f32
        # Pad channels of h are exactly zero because the pad columns of w1/b1
        # are zero and GELU(0) == 0, so the 3x3 K-dim stays clean.  Do not add
        # nonzero bias pads or a different activation without masking here.

        # ---- zero-bordered h in VMEM (border only; interior overwritten) ----
        zrow = jnp.zeros((1, W + 2, Cp), jnp.bfloat16)
        hpad_ref[0:1, 0:W + 2, :] = zrow
        hpad_ref[H + 1:H + 2, 0:W + 2, :] = zrow
        zcol = jnp.zeros((H, 1, Cp), jnp.bfloat16)
        hpad_ref[1:H + 1, 0:1, :] = zcol
        hpad_ref[1:H + 1, W + 1:W + 2, :] = zcol
        hpad_ref[1:H + 1, 1:W + 1, :] = h.reshape(H, W, Cp).astype(jnp.bfloat16)

        # ---- 3x3 "same" conv: 9 shifted-window matmuls, one f32 accumulator -
        acc = jnp.zeros((HW, Cp), jnp.float32)
        for ky in range(3):
            for kx in range(3):
                win = hpad_ref[ky:ky + H, kx:kx + W, :].reshape(HW, Cp)
                acc = acc + jnp.dot(win, w3_ref[ky * 3 + kx],
                                    preferred_element_type=jnp.float32)

        out = _gelu(acc + b3_ref[...])
        o_ref[0] = out[:, :C].astype(o_ref.dtype)   # store only real channels

    return kernel


def convolution_layer(x, w1, b1, w3, b3):
    """Forward pass of ConvolutionLayer (inference).

    x : [B, H, W, input_size]         (the NHWC tensor forward() receives)
    w1: [input_size, channels]        (torch 1x1 weight [C, Cin, 1, 1] -> [Cin, C])
    b1: [channels]
    w3: [3, 3, channels, channels]    (torch 3x3 weight [Co, Ci, 3, 3] -> [ky, kx, Ci, Co])
    b3: [channels]
    returns [B, H, W, channels]
    """
    B, H, W, Cin = x.shape
    C = w1.shape[1]
    HW = H * W
    Cp = _round_up(C, 128)       # lane-dense internal channel width
    Wp = _round_up(W + 2, 16)    # bf16 sublane-tile aligned hpad width

    # Input: bf16, flattened spatial, channels unpadded (Cin == full array dim
    # so the (1, HW, Cin) block is legal); the cast fuses with the reshape.
    x_p = x.reshape(B, HW, Cin).astype(jnp.bfloat16)

    # Weights / biases (channel-padded to Cp for lane-dense internal tiles).
    w1_p = jnp.pad(w1, ((0, 0), (0, Cp - C))).astype(jnp.bfloat16)          # [Cin, Cp]
    b1_p = jnp.pad(b1, (0, Cp - C)).reshape(1, Cp).astype(jnp.float32)
    w3_p = jnp.pad(w3, ((0, 0), (0, 0), (0, Cp - C), (0, Cp - C)))
    w3_p = w3_p.reshape(9, Cp, Cp).astype(jnp.bfloat16)                     # tap = ky*3+kx
    b3_p = jnp.pad(b3, (0, Cp - C)).reshape(1, Cp).astype(jnp.float32)

    # Advisory cost estimate (two matmul stages + two GELUs).
    flops = int(B * HW * (2 * Cin * Cp + 2 * 9 * Cp * Cp))
    transcendentals = int(2 * B * HW * Cp)
    bytes_accessed = int(x_p.size * 2 + w1_p.size * 2 + w3_p.size * 2
                         + (b1_p.size + b3_p.size) * 4 + B * HW * C * 4)

    # Scoped-VMEM budget: pipelined blocks + single-buffered weights + scratch
    # + f32 temporaries headroom; clamped so it never undershoots the default.
    vmem_need = (2 * HW * Cin * 2                 # x block (bf16, 2-deep)
                 + 2 * HW * C * 4                 # out block (f32, 2-deep)
                 + Cin * Cp * 2 + 9 * Cp * Cp * 2 + 2 * Cp * 4  # weights/biases (1-deep)
                 + (H + 2) * Wp * Cp * 2          # hpad scratch (bf16)
                 + 8 * HW * Cp * 4)               # f32 h/acc/GELU temporaries
    vmem_limit = int(min(max(2 * vmem_need, 32 * 1024 * 1024), 64 * 1024 * 1024))

    const2 = lambda b: (0, 0)
    const3 = lambda b: (0, 0, 0)

    out = pl.pallas_call(
        _make_kernel(H, W, Cp),
        out_shape=jax.ShapeDtypeStruct((B, HW, C), x.dtype),
        grid_spec=pltpu.PrefetchScalarGridSpec(
            num_scalar_prefetch=0,
            grid=(B,),
            in_specs=[
                pl.BlockSpec((1, HW, Cin), lambda b: (b, 0, 0)),                  # x (bf16)
                pl.BlockSpec((Cin, Cp), const2, pipeline_mode=pl.Buffered(1)),    # w1
                pl.BlockSpec((1, Cp), const2, pipeline_mode=pl.Buffered(1)),      # b1
                pl.BlockSpec((9, Cp, Cp), const3, pipeline_mode=pl.Buffered(1)),  # w3
                pl.BlockSpec((1, Cp), const2, pipeline_mode=pl.Buffered(1)),      # b3
            ],
            out_specs=pl.BlockSpec((1, HW, C), lambda b: (b, 0, 0)),
            scratch_shapes=[
                pltpu.VMEM((H + 2, Wp, Cp), jnp.bfloat16),   # zero-bordered h
            ],
        ),
        compiler_params=pltpu.CompilerParams(
            dimension_semantics=("parallel",),
            vmem_limit_bytes=vmem_limit,
        ),
        cost_estimate=pl.CostEstimate(
            flops=flops, transcendentals=transcendentals,
            bytes_accessed=bytes_accessed),
    )(x_p, w1_p, b1_p, w3_p, b3_p)

    # Reshape back to NHWC (free: metadata only, no pad/slice HBM pass).
    return out.reshape(B, H, W, C)


if __name__ == "__main__":
    # Small shapes consistent with the module's forward:
    # x: [B, H, W, input_size]; 1x1 conv input_size->channels, 3x3 conv channels->channels.
    B, H, W = 2, 16, 16
    input_size, channels = 32, 32   # the module's `dilation` arg is unused by its convs

    key = jax.random.PRNGKey(0)
    k = jax.random.split(key, 5)

    x = jax.random.normal(k[0], (B, H, W, input_size), jnp.float32)

    # Deterministic PyTorch-layout parameters (Conv2d-style uniform init),
    # converted to the layouts the kernel consumes (cross-correlation kept):
    #   1x1: torch weight [C, Cin, 1, 1] -> [Cin, C]
    #   3x3: torch weight [Cout, Cin, 3, 3] -> [ky, kx, Cin, Cout]
    bound1 = 1.0 / math.sqrt(input_size * 1 * 1)
    w1_t = jax.random.uniform(k[1], (channels, input_size, 1, 1), jnp.float32, -bound1, bound1)
    b1_t = jax.random.uniform(k[2], (channels,), jnp.float32, -bound1, bound1)

    bound3 = 1.0 / math.sqrt(channels * 3 * 3)
    w3_t = jax.random.uniform(k[3], (channels, channels, 3, 3), jnp.float32, -bound3, bound3)
    b3_t = jax.random.uniform(k[4], (channels,), jnp.float32, -bound3, bound3)

    w1 = jnp.transpose(w1_t[:, :, 0, 0], (1, 0))        # [Cin, C]
    w3 = jnp.transpose(w3_t, (2, 3, 1, 0))              # [ky, kx, Cin, Cout]

    out = convolution_layer(x, w1, b1_t, w3, b3_t)
    jax.block_until_ready(out)

    assert out.shape == (B, H, W, channels), out.shape
    assert bool(jnp.all(jnp.isfinite(out)))
    print("KERNEL_OK")
</pallas_src>

<mosaic_0001>
module attributes {stable_mosaic.version = 11 : i64} {
  func.func @kernel(%arg0: i32, %arg1: memref<1x256x32xbf16, #tpu.memory_space<vmem>>, %arg2: memref<32x128xbf16, #tpu.memory_space<vmem>>, %arg3: memref<1x128xf32, #tpu.memory_space<vmem>>, %arg4: memref<9x128x128xbf16, #tpu.memory_space<vmem>>, %arg5: memref<1x128xf32, #tpu.memory_space<vmem>>, %arg6: memref<1x256x32xf32, #tpu.memory_space<vmem>>, %arg7: memref<18x32x128xbf16, #tpu.memory_space<vmem>>) attributes {dimension_semantics = [#tpu.dimension_semantics<parallel>], iteration_bounds = array<i64: 2>, scalar_prefetch = 0 : i64, scratch_operands = 1 : i64, tpu.core_type = #tpu.core_type<tc>, window_params = [{transform_indices = @transform_0, window_bounds = array<i64: 1, 256, 32>}, {pipeline_mode = #tpu.pipeline_mode<synchronous>, transform_indices = @transform_1, window_bounds = array<i64: 32, 128>}, {pipeline_mode = #tpu.pipeline_mode<synchronous>, transform_indices = @transform_2, window_bounds = array<i64: 1, 128>}, {pipeline_mode = #tpu.pipeline_mode<synchronous>, transform_indices = @transform_3, window_bounds = array<i64: 9, 128, 128>}, {pipeline_mode = #tpu.pipeline_mode<synchronous>, transform_indices = @transform_4, window_bounds = array<i64: 1, 128>}, {transform_indices = @transform_5, window_bounds = array<i64: 1, 256, 32>}]} {
    %c0 = arith.constant 0 : index
    %c0_0 = arith.constant 0 : index
    %c0_1 = arith.constant 0 : index
    %0 = vector.load %arg1[%c0, %c0_0, %c0_1] : memref<1x256x32xbf16, #tpu.memory_space<vmem>>, vector<1x256x32xbf16>
    %1 = vector.shape_cast %0 : vector<1x256x32xbf16> to vector<256x32xbf16>
    %c0_2 = arith.constant 0 : index
    %c0_3 = arith.constant 0 : index
    %2 = vector.load %arg2[%c0_2, %c0_3] : memref<32x128xbf16, #tpu.memory_space<vmem>>, vector<32x128xbf16>
    %cst = arith.constant dense<0.000000e+00> : vector<256x128xf32>
    %3 = tpu.matmul %1, %2, %cst {dimension_numbers = #tpu.dot_dimension_numbers<[1], [0], [0], [1], [0, 0, 1, 1], [], []>} : vector<256x32xbf16>, vector<32x128xbf16>, vector<256x128xf32> -> vector<256x128xf32>
    %c0_4 = arith.constant 0 : index
    %c0_5 = arith.constant 0 : index
    %4 = vector.load %arg3[%c0_4, %c0_5] : memref<1x128xf32, #tpu.memory_space<vmem>>, vector<1x128xf32>
    %5 = vector.broadcast %4 : vector<1x128xf32> to vector<256x128xf32>
    %6 = arith.addf %3, %5 : vector<256x128xf32>
    %cst_6 = arith.constant 5.000000e-01 : f32
    %7 = vector.broadcast %cst_6 : f32 to vector<256x128xf32>
    %8 = arith.mulf %7, %6 : vector<256x128xf32>
    %cst_7 = arith.constant 0.707106769 : f32
    %9 = vector.broadcast %cst_7 : f32 to vector<256x128xf32>
    %10 = arith.mulf %6, %9 : vector<256x128xf32>
    %11 = math.absf %10 : vector<256x128xf32>
    %cst_8 = arith.constant 0.327591091 : f32
    %12 = vector.broadcast %cst_8 : f32 to vector<256x128xf32>
    %13 = arith.mulf %12, %11 : vector<256x128xf32>
    %cst_9 = arith.constant 1.000000e+00 : f32
    %14 = vector.broadcast %cst_9 : f32 to vector<256x128xf32>
    %15 = arith.addf %14, %13 : vector<256x128xf32>
    %cst_10 = arith.constant 1.000000e+00 : f32
    %16 = vector.broadcast %cst_10 : f32 to vector<256x128xf32>
    %17 = arith.divf %16, %15 : vector<256x128xf32>
    %cst_11 = arith.constant 1.06140542 : f32
    %18 = vector.broadcast %cst_11 : f32 to vector<256x128xf32>
    %19 = arith.mulf %18, %17 : vector<256x128xf32>
    %cst_12 = arith.constant -1.45315206 : f32
    %20 = vector.broadcast %cst_12 : f32 to vector<256x128xf32>
    %21 = arith.addf %19, %20 : vector<256x128xf32>
    %22 = arith.mulf %21, %17 : vector<256x128xf32>
    %cst_13 = arith.constant 1.42141378 : f32
    %23 = vector.broadcast %cst_13 : f32 to vector<256x128xf32>
    %24 = arith.addf %22, %23 : vector<256x128xf32>
    %25 = arith.mulf %24, %17 : vector<256x128xf32>
    %cst_14 = arith.constant -0.284496725 : f32
    %26 = vector.broadcast %cst_14 : f32 to vector<256x128xf32>
    %27 = arith.addf %25, %26 : vector<256x128xf32>
    %28 = arith.mulf %27, %17 : vector<256x128xf32>
    %cst_15 = arith.constant 0.254829586 : f32
    %29 = vector.broadcast %cst_15 : f32 to vector<256x128xf32>
    %30 = arith.addf %28, %29 : vector<256x128xf32>
    %31 = arith.mulf %30, %17 : vector<256x128xf32>
    %cst_16 = arith.constant 0.000000e+00 : f32
    %32 = vector.broadcast %cst_16 : f32 to vector<256x128xf32>
    %33 = arith.subf %32, %11 : vector<256x128xf32>
    %34 = arith.mulf %33, %11 : vector<256x128xf32>
    %35 = math.exp %34 : vector<256x128xf32>
    %36 = arith.mulf %31, %35 : vector<256x128xf32>
    %cst_17 = arith.constant 1.000000e+00 : f32
    %37 = vector.broadcast %cst_17 : f32 to vector<256x128xf32>
    %38 = arith.subf %37, %36 : vector<256x128xf32>
    %cst_18 = arith.constant 0.000000e+00 : f32
    %39 = vector.broadcast %cst_18 : f32 to vector<256x128xf32>
    %40 = arith.cmpf oge, %10, %39 : vector<256x128xf32>
    %cst_19 = arith.constant 0.000000e+00 : f32
    %41 = vector.broadcast %cst_19 : f32 to vector<256x128xf32>
    %42 = arith.subf %41, %38 : vector<256x128xf32>
    %43 = arith.select %40, %38, %42 : vector<256x128xi1>, vector<256x128xf32>
    %cst_20 = arith.constant 1.000000e+00 : f32
    %44 = vector.broadcast %cst_20 : f32 to vector<256x128xf32>
    %45 = arith.addf %44, %43 : vector<256x128xf32>
    %46 = arith.mulf %8, %45 : vector<256x128xf32>
    %cst_21 = arith.constant 0.000000e+00 : bf16
    %47 = vector.broadcast %cst_21 : bf16 to vector<1x18x128xbf16>
    %c0_22 = arith.constant 0 : index
    %c0_23 = arith.constant 0 : index
    %c0_24 = arith.constant 0 : index
    %48 = vector.load %arg7[%c0_22, %c0_23, %c0_24] : memref<18x32x128xbf16, #tpu.memory_space<vmem>>, vector<1x18x128xbf16>
    tpu.vector_store %arg7[%c0_22, %c0_23, %c0_24], %47 {strides = array<i32>} : memref<18x32x128xbf16, #tpu.memory_space<vmem>>, vector<1x18x128xbf16>,
    %c17 = arith.constant 17 : index
    %c0_25 = arith.constant 0 : index
    %c0_26 = arith.constant 0 : index
    %49 = vector.load %arg7[%c17, %c0_25, %c0_26] : memref<18x32x128xbf16, #tpu.memory_space<vmem>>, vector<1x18x128xbf16>
    tpu.vector_store %arg7[%c17, %c0_25, %c0_26], %47 {strides = array<i32>} : memref<18x32x128xbf16, #tpu.memory_space<vmem>>, vector<1x18x128xbf16>,
    %cst_27 = arith.constant 0.000000e+00 : bf16
    %50 = vector.broadcast %cst_27 : bf16 to vector<16x1x128xbf16>
    %c1 = arith.constant 1 : index
    %c0_28 = arith.constant 0 : index
    %c0_29 = arith.constant 0 : index
    %51 = vector.load %arg7[%c1, %c0_28, %c0_29] : memref<18x32x128xbf16, #tpu.memory_space<vmem>>, vector<16x1x128xbf16>
    tpu.vector_store %arg7[%c1, %c0_28, %c0_29], %50 {strides = array<i32>} : memref<18x32x128xbf16, #tpu.memory_space<vmem>>, vector<16x1x128xbf16>,
    %c1_30 = arith.constant 1 : index
    %c17_31 = arith.constant 17 : index
    %c0_32 = arith.constant 0 : index
    %52 = vector.load %arg7[%c1_30, %c17_31, %c0_32] : memref<18x32x128xbf16, #tpu.memory_space<vmem>>, vector<16x1x128xbf16>
    tpu.vector_store %arg7[%c1_30, %c17_31, %c0_32], %50 {strides = array<i32>} : memref<18x32x128xbf16, #tpu.memory_space<vmem>>, vector<16x1x128xbf16>,
    %53 = vector.shape_cast %46 : vector<256x128xf32> to vector<16x16x128xf32>
    %54 = arith.truncf %53 : vector<16x16x128xf32> to vector<16x16x128xbf16>
    %c1_33 = arith.constant 1 : index
    %c1_34 = arith.constant 1 : index
    %c0_35 = arith.constant 0 : index
    %55 = vector.load %arg7[%c1_33, %c1_34, %c0_35] : memref<18x32x128xbf16, #tpu.memory_space<vmem>>, vector<16x16x128xbf16>
    tpu.vector_store %arg7[%c1_33, %c1_34, %c0_35], %54 {strides = array<i32>} : memref<18x32x128xbf16, #tpu.memory_space<vmem>>, vector<16x16x128xbf16>,
    %cst_36 = arith.constant 0.000000e+00 : f32
    %56 = vector.broadcast %cst_36 : f32 to vector<256x128xf32>
    %c0_37 = arith.constant 0 : index
    %c0_38 = arith.constant 0 : index
    %c0_39 = arith.constant 0 : index
    %57 = vector.load %arg7[%c0_37, %c0_38, %c0_39] : memref<18x32x128xbf16, #tpu.memory_space<vmem>>, vector<16x16x128xbf16>
    %58 = vector.shape_cast %57 : vector<16x16x128xbf16> to vector<256x128xbf16>
    %c0_40 = arith.constant 0 : index
    %c0_41 = arith.constant 0 : index
    %c0_42 = arith.constant 0 : index
    %59 = vector.load %arg4[%c0_40, %c0_41, %c0_42] : memref<9x128x128xbf16, #tpu.memory_space<vmem>>, vector<1x128x128xbf16>
    %60 = vector.shape_cast %59 : vector<1x128x128xbf16> to vector<128x128xbf16>
    %cst_43 = arith.constant dense<0.000000e+00> : vector<256x128xf32>
    %61 = tpu.matmul %58, %60, %cst_43 {dimension_numbers = #tpu.dot_dimension_numbers<[1], [0], [0], [1], [0, 0, 1, 1], [], []>} : vector<256x128xbf16>, vector<128x128xbf16>, vector<256x128xf32> -> vector<256x128xf32>
    %62 = arith.addf %56, %61 : vector<256x128xf32>
    %c0_44 = arith.constant 0 : index
    %c1_45 = arith.constant 1 : index
    %c0_46 = arith.constant 0 : index
    %63 = vector.load %arg7[%c0_44, %c1_45, %c0_46] : memref<18x32x128xbf16, #tpu.memory_space<vmem>>, vector<16x16x128xbf16>
    %64 = vector.shape_cast %63 : vector<16x16x128xbf16> to vector<256x128xbf16>
    %c1_47 = arith.constant 1 : index
    %c0_48 = arith.constant 0 : index
    %c0_49 = arith.constant 0 : index
    %65 = vector.load %arg4[%c1_47, %c0_48, %c0_49] : memref<9x128x128xbf16, #tpu.memory_space<vmem>>, vector<1x128x128xbf16>
    %66 = vector.shape_cast %65 : vector<1x128x128xbf16> to vector<128x128xbf16>
    %cst_50 = arith.constant dense<0.000000e+00> : vector<256x128xf32>
    %67 = tpu.matmul %64, %66, %cst_50 {dimension_numbers = #tpu.dot_dimension_numbers<[1], [0], [0], [1], [0, 0, 1, 1], [], []>} : vector<256x128xbf16>, vector<128x128xbf16>, vector<256x128xf32> -> vector<256x128xf32>
    %68 = arith.addf %62, %67 : vector<256x128xf32>
    %c0_51 = arith.constant 0 : index
    %c2 = arith.constant 2 : index
    %c0_52 = arith.constant 0 : index
    %69 = vector.load %arg7[%c0_51, %c2, %c0_52] : memref<18x32x128xbf16, #tpu.memory_space<vmem>>, vector<16x16x128xbf16>
    %70 = vector.shape_cast %69 : vector<16x16x128xbf16> to vector<256x128xbf16>
    %c2_53 = arith.constant 2 : index
    %c0_54 = arith.constant 0 : index
    %c0_55 = arith.constant 0 : index
    %71 = vector.load %arg4[%c2_53, %c0_54, %c0_55] : memref<9x128x128xbf16, #tpu.memory_space<vmem>>, vector<1x128x128xbf16>
    %72 = vector.shape_cast %71 : vector<1x128x128xbf16> to vector<128x128xbf16>
    %cst_56 = arith.constant dense<0.000000e+00> : vector<256x128xf32>
    %73 = tpu.matmul %70, %72, %cst_56 {dimension_numbers = #tpu.dot_dimension_numbers<[1], [0], [0], [1], [0, 0, 1, 1], [], []>} : vector<256x128xbf16>, vector<128x128xbf16>, vector<256x128xf32> -> vector<256x128xf32>
    %74 = arith.addf %68, %73 : vector<256x128xf32>
    %c1_57 = arith.constant 1 : index
    %c0_58 = arith.constant 0 : index
    %c0_59 = arith.constant 0 : index
    %75 = vector.load %arg7[%c1_57, %c0_58, %c0_59] : memref<18x32x128xbf16, #tpu.memory_space<vmem>>, vector<16x16x128xbf16>
    %76 = vector.shape_cast %75 : vector<16x16x128xbf16> to vector<256x128xbf16>
    %c3 = arith.constant 3 : index
    %c0_60 = arith.constant 0 : index
    %c0_61 = arith.constant 0 : index
    %77 = vector.load %arg4[%c3, %c0_60, %c0_61] : memref<9x128x128xbf16, #tpu.memory_space<vmem>>, vector<1x128x128xbf16>
    %78 = vector.shape_cast %77 : vector<1x128x128xbf16> to vector<128x128xbf16>
    %cst_62 = arith.constant dense<0.000000e+00> : vector<256x128xf32>
    %79 = tpu.matmul %76, %78, %cst_62 {dimension_numbers = #tpu.dot_dimension_numbers<[1], [0], [0], [1], [0, 0, 1, 1], [], []>} : vector<256x128xbf16>, vector<128x128xbf16>, vector<256x128xf32> -> vector<256x128xf32>
    %80 = arith.addf %74, %79 : vector<256x128xf32>
    %c1_63 = arith.constant 1 : index
    %c1_64 = arith.constant 1 : index
    %c0_65 = arith.constant 0 : index
    %81 = vector.load %arg7[%c1_63, %c1_64, %c0_65] : memref<18x32x128xbf16, #tpu.memory_space<vmem>>, vector<16x16x128xbf16>
    %82 = vector.shape_cast %81 : vector<16x16x128xbf16> to vector<256x128xbf16>
    %c4 = arith.constant 4 : index
    %c0_66 = arith.constant 0 : index
    %c0_67 = arith.constant 0 : index
    %83 = vector.load %arg4[%c4, %c0_66, %c0_67] : memref<9x128x128xbf16, #tpu.memory_space<vmem>>, vector<1x128x128xbf16>
    %84 = vector.shape_cast %83 : vector<1x128x128xbf16> to vector<128x128xbf16>
    %cst_68 = arith.constant dense<0.000000e+00> : vector<256x128xf32>
    %85 = tpu.matmul %82, %84, %cst_68 {dimension_numbers = #tpu.dot_dimension_numbers<[1], [0], [0], [1], [0, 0, 1, 1], [], []>} : vector<256x128xbf16>, vector<128x128xbf16>, vector<256x128xf32> -> vector<256x128xf32>
    %86 = arith.addf %80, %85 : vector<256x128xf32>
    %c1_69 = arith.constant 1 : index
    %c2_70 = arith.constant 2 : index
    %c0_71 = arith.constant 0 : index
    %87 = vector.load %arg7[%c1_69, %c2_70, %c0_71] : memref<18x32x128xbf16, #tpu.memory_space<vmem>>, vector<16x16x128xbf16>
    %88 = vector.shape_cast %87 : vector<16x16x128xbf16> to vector<256x128xbf16>
    %c5 = arith.constant 5 : index
    %c0_72 = arith.constant 0 : index
    %c0_73 = arith.constant 0 : index
    %89 = vector.load %arg4[%c5, %c0_72, %c0_73] : memref<9x128x128xbf16, #tpu.memory_space<vmem>>, vector<1x128x128xbf16>
    %90 = vector.shape_cast %89 : vector<1x128x128xbf16> to vector<128x128xbf16>
    %cst_74 = arith.constant dense<0.000000e+00> : vector<256x128xf32>
    %91 = tpu.matmul %88, %90, %cst_74 {dimension_numbers = #tpu.dot_dimension_numbers<[1], [0], [0], [1], [0, 0, 1, 1], [], []>} : vector<256x128xbf16>, vector<128x128xbf16>, vector<256x128xf32> -> vector<256x128xf32>
    %92 = arith.addf %86, %91 : vector<256x128xf32>
    %c2_75 = arith.constant 2 : index
    %c0_76 = arith.constant 0 : index
    %c0_77 = arith.constant 0 : index
    %93 = vector.load %arg7[%c2_75, %c0_76, %c0_77] : memref<18x32x128xbf16, #tpu.memory_space<vmem>>, vector<16x16x128xbf16>
    %94 = vector.shape_cast %93 : vector<16x16x128xbf16> to vector<256x128xbf16>
    %c6 = arith.constant 6 : index
    %c0_78 = arith.constant 0 : index
    %c0_79 = arith.constant 0 : index
    %95 = vector.load %arg4[%c6, %c0_78, %c0_79] : memref<9x128x128xbf16, #tpu.memory_space<vmem>>, vector<1x128x128xbf16>
    %96 = vector.shape_cast %95 : vector<1x128x128xbf16> to vector<128x128xbf16>
    %cst_80 = arith.constant dense<0.000000e+00> : vector<256x128xf32>
    %97 = tpu.matmul %94, %96, %cst_80 {dimension_numbers = #tpu.dot_dimension_numbers<[1], [0], [0], [1], [0, 0, 1, 1], [], []>} : vector<256x128xbf16>, vector<128x128xbf16>, vector<256x128xf32> -> vector<256x128xf32>
    %98 = arith.addf %92, %97 : vector<256x128xf32>
    %c2_81 = arith.constant 2 : index
    %c1_82 = arith.constant 1 : index
    %c0_83 = arith.constant 0 : index
    %99 = vector.load %arg7[%c2_81, %c1_82, %c0_83] : memref<18x32x128xbf16, #tpu.memory_space<vmem>>, vector<16x16x128xbf16>
    %100 = vector.shape_cast %99 : vector<16x16x128xbf16> to vector<256x128xbf16>
    %c7 = arith.constant 7 : index
    %c0_84 = arith.constant 0 : index
    %c0_85 = arith.constant 0 : index
    %101 = vector.load %arg4[%c7, %c0_84, %c0_85] : memref<9x128x128xbf16, #tpu.memory_space<vmem>>, vector<1x128x128xbf16>
    %102 = vector.shape_cast %101 : vector<1x128x128xbf16> to vector<128x128xbf16>
    %cst_86 = arith.constant dense<0.000000e+00> : vector<256x128xf32>
    %103 = tpu.matmul %100, %102, %cst_86 {dimension_numbers = #tpu.dot_dimension_numbers<[1], [0], [0], [1], [0, 0, 1, 1], [], []>} : vector<256x128xbf16>, vector<128x128xbf16>, vector<256x128xf32> -> vector<256x128xf32>
    %104 = arith.addf %98, %103 : vector<256x128xf32>
    %c2_87 = arith.constant 2 : index
    %c2_88 = arith.constant 2 : index
    %c0_89 = arith.constant 0 : index
    %105 = vector.load %arg7[%c2_87, %c2_88, %c0_89] : memref<18x32x128xbf16, #tpu.memory_space<vmem>>, vector<16x16x128xbf16>
    %106 = vector.shape_cast %105 : vector<16x16x128xbf16> to vector<256x128xbf16>
    %c8 = arith.constant 8 : index
    %c0_90 = arith.constant 0 : index
    %c0_91 = arith.constant 0 : index
    %107 = vector.load %arg4[%c8, %c0_90, %c0_91] : memref<9x128x128xbf16, #tpu.memory_space<vmem>>, vector<1x128x128xbf16>
    %108 = vector.shape_cast %107 : vector<1x128x128xbf16> to vector<128x128xbf16>
    %cst_92 = arith.constant dense<0.000000e+00> : vector<256x128xf32>
    %109 = tpu.matmul %106, %108, %cst_92 {dimension_numbers = #tpu.dot_dimension_numbers<[1], [0], [0], [1], [0, 0, 1, 1], [], []>} : vector<256x128xbf16>, vector<128x128xbf16>, vector<256x128xf32> -> vector<256x128xf32>
    %110 = arith.addf %104, %109 : vector<256x128xf32>
    %c0_93 = arith.constant 0 : index
    %c0_94 = arith.constant 0 : index
    %111 = vector.load %arg5[%c0_93, %c0_94] : memref<1x128xf32, #tpu.memory_space<vmem>>, vector<1x128xf32>
    %112 = vector.broadcast %111 : vector<1x128xf32> to vector<256x128xf32>
    %113 = arith.addf %110, %112 : vector<256x128xf32>
    %cst_95 = arith.constant 5.000000e-01 : f32
    %114 = vector.broadcast %cst_95 : f32 to vector<256x128xf32>
    %115 = arith.mulf %114, %113 : vector<256x128xf32>
    %cst_96 = arith.constant 0.707106769 : f32
    %116 = vector.broadcast %cst_96 : f32 to vector<256x128xf32>
    %117 = arith.mulf %113, %116 : vector<256x128xf32>
    %118 = math.absf %117 : vector<256x128xf32>
    %cst_97 = arith.constant 0.327591091 : f32
    %119 = vector.broadcast %cst_97 : f32 to vector<256x128xf32>
    %120 = arith.mulf %119, %118 : vector<256x128xf32>
    %cst_98 = arith.constant 1.000000e+00 : f32
    %121 = vector.broadcast %cst_98 : f32 to vector<256x128xf32>
    %122 = arith.addf %121, %120 : vector<256x128xf32>
    %cst_99 = arith.constant 1.000000e+00 : f32
    %123 = vector.broadcast %cst_99 : f32 to vector<256x128xf32>
    %124 = arith.divf %123, %122 : vector<256x128xf32>
    %cst_100 = arith.constant 1.06140542 : f32
    %125 = vector.broadcast %cst_100 : f32 to vector<256x128xf32>
    %126 = arith.mulf %125, %124 : vector<256x128xf32>
    %cst_101 = arith.constant -1.45315206 : f32
    %127 = vector.broadcast %cst_101 : f32 to vector<256x128xf32>
    %128 = arith.addf %126, %127 : vector<256x128xf32>
    %129 = arith.mulf %128, %124 : vector<256x128xf32>
    %cst_102 = arith.constant 1.42141378 : f32
    %130 = vector.broadcast %cst_102 : f32 to vector<256x128xf32>
    %131 = arith.addf %129, %130 : vector<256x128xf32>
    %132 = arith.mulf %131, %124 : vector<256x128xf32>
    %cst_103 = arith.constant -0.284496725 : f32
    %133 = vector.broadcast %cst_103 : f32 to vector<256x128xf32>
    %134 = arith.addf %132, %133 : vector<256x128xf32>
    %135 = arith.mulf %134, %124 : vector<256x128xf32>
    %cst_104 = arith.constant 0.254829586 : f32
    %136 = vector.broadcast %cst_104 : f32 to vector<256x128xf32>
    %137 = arith.addf %135, %136 : vector<256x128xf32>
    %138 = arith.mulf %137, %124 : vector<256x128xf32>
    %cst_105 = arith.constant 0.000000e+00 : f32
    %139 = vector.broadcast %cst_105 : f32 to vector<256x128xf32>
    %140 = arith.subf %139, %118 : vector<256x128xf32>
    %141 = arith.mulf %140, %118 : vector<256x128xf32>
    %142 = math.exp %141 : vector<256x128xf32>
    %143 = arith.mulf %138, %142 : vector<256x128xf32>
    %cst_106 = arith.constant 1.000000e+00 : f32
    %144 = vector.broadcast %cst_106 : f32 to vector<256x128xf32>
    %145 = arith.subf %144, %143 : vector<256x128xf32>
    %cst_107 = arith.constant 0.000000e+00 : f32
    %146 = vector.broadcast %cst_107 : f32 to vector<256x128xf32>
    %147 = arith.cmpf oge, %117, %146 : vector<256x128xf32>
    %cst_108 = arith.constant 0.000000e+00 : f32
    %148 = vector.broadcast %cst_108 : f32 to vector<256x128xf32>
    %149 = arith.subf %148, %145 : vector<256x128xf32>
    %150 = arith.select %147, %145, %149 : vector<256x128xi1>, vector<256x128xf32>
    %cst_109 = arith.constant 1.000000e+00 : f32
    %151 = vector.broadcast %cst_109 : f32 to vector<256x128xf32>
    %152 = arith.addf %151, %150 : vector<256x128xf32>
    %153 = arith.mulf %115, %152 : vector<256x128xf32>
    %154 = vector.extract_strided_slice %153 {offsets = [0, 0], sizes = [256, 32], strides = [1, 1]} : vector<256x128xf32> to vector<256x32xf32>
    %c0_110 = arith.constant 0 : index
    %c0_111 = arith.constant 0 : index
    %c0_112 = arith.constant 0 : index
    %155 = vector.load %arg6[%c0_110, %c0_111, %c0_112] : memref<1x256x32xf32, #tpu.memory_space<vmem>>, vector<1x256x32xf32>
    %156 = vector.shape_cast %155 : vector<1x256x32xf32> to vector<256x32xf32>
    %157 = vector.shape_cast %154 : vector<256x32xf32> to vector<1x256x32xf32>
    tpu.vector_store %arg6[%c0_110, %c0_111, %c0_112], %157 {strides = array<i32>} : memref<1x256x32xf32, #tpu.memory_space<vmem>>, vector<1x256x32xf32>,
    return
  }
  func.func @transform_0(%arg0: i32) -> (i32, i32, i32) {
    %c0_i32 = arith.constant 0 : i32
    %c0_i32_0 = arith.constant 0 : i32
    %c0_i32_1 = arith.constant 0 : i32
    return %arg0, %c0_i32, %c0_i32_0 : i32, i32, i32
  }
  func.func @transform_1(%arg0: i32) -> (i32, i32) {
    %c0_i32 = arith.constant 0 : i32
    %c0_i32_0 = arith.constant 0 : i32
    %c0_i32_1 = arith.constant 0 : i32
    return %c0_i32, %c0_i32_0 : i32, i32
  }
  func.func @transform_2(%arg0: i32) -> (i32, i32) {
    %c0_i32 = arith.constant 0 : i32
    %c0_i32_0 = arith.constant 0 : i32
    %c0_i32_1 = arith.constant 0 : i32
    return %c0_i32, %c0_i32_0 : i32, i32
  }
  func.func @transform_3(%arg0: i32) -> (i32, i32, i32) {
    %c0_i32 = arith.constant 0 : i32
    %c0_i32_0 = arith.constant 0 : i32
    %c0_i32_1 = arith.constant 0 : i32
    %c0_i32_2 = arith.constant 0 : i32
    return %c0_i32, %c0_i32_0, %c0_i32_1 : i32, i32, i32
  }
  func.func @transform_4(%arg0: i32) -> (i32, i32) {
    %c0_i32 = arith.constant 0 : i32
    %c0_i32_0 = arith.constant 0 : i32
    %c0_i32_1 = arith.constant 0 : i32
    return %c0_i32, %c0_i32_0 : i32, i32
  }
  func.func @transform_5(%arg0: i32) -> (i32, i32, i32) {
    %c0_i32 = arith.constant 0 : i32
    %c0_i32_0 = arith.constant 0 : i32
    %c0_i32_1 = arith.constant 0 : i32
    return %arg0, %c0_i32, %c0_i32_0 : i32, i32, i32
  }
}

</mosaic_0001>

<llo_original>
// kernel: tpu_custom_call.1
$region0: #{tpu_custom_call.1}
  #allocation0 [shape = 'u32[]', space=smem, size = 0x4, offset = 0x4, fixed_abs, tag = 'smem constant byte address 0x4 - core index']
  #allocation1 [shape = 'u32[144,128]{1,0:T(1,128)}', space=vmem, size = 0x12000, scoped, tag = 'internal scratch']
  #allocation2 [shape = 'bf16[18,32,128]{2,1,0:T(16,128)(2,1)}', space=vmem, size = 0x24000, scoped, tag = 'scratch operand']
  %s0 = inlined_call_operand.vmem [shape: bf16[2,256,32], index: 0, kind: input, shape index: {}]
  %s1 = inlined_call_operand.vmem [shape: bf16[32,128], index: 1, kind: input, shape index: {}]
  %s2 = inlined_call_operand.vmem [shape: f32[1,128], index: 2, kind: input, shape index: {}]
  %s3 = inlined_call_operand.hbm [shape: bf16[9,128,128], index: 3, kind: input, shape index: {}]
  %s4 = inlined_call_operand.vmem [shape: f32[1,128], index: 4, kind: input, shape index: {}]
  %s5 = inlined_call_operand.vmem [shape: f32[2,256,32], index: 5, kind: output, shape index: {}]
  %s6 = sld [smem:[#allocation0]]
  $region57: #{tpu_custom_call.1} parent=0
    _
  %s8 = ssub.s32 1, %s6
  %s9 = scalar_select 0, %s8, %s6
  $region1: #{tpu_custom_call.1} parent=0
    #allocation3 [shape = 'u8[294912]{0}', space=vmem, size = 0x48000, scoped, tag = 'input window, operand 3, single buffered']
    #allocation4 [shape = 's32[2]{0}', space=sflag, size = 0x8, scoped, tag = 'scoped memory for tpu_custom_call.1']
    %10 = vsyncpa [#allocation4], 0
    loop: start=0, step=1, limit=4
    $region2: #{tpu_custom_call.1} parent=1 // loop_pre_header
      _
    $region3: #{tpu_custom_call.1} parent=1 // loop_header
      %s12 = sphi 0, %s16
      %p13 = scmp.ge.s32.totalorder %s12, 4
      %s22 = sphi 0, %s24
      %s25 = sphi 0, %s22
      %s26 = sphi 0, %s25
      %s42 = sphi 0, %s26
      %s46 = sphi 0, %s46
      %s48 = sphi 0, %s46
      %s49 = sphi 0, %s48
      %s63 = sphi 0, %s49
      %s67 = sphi 0, %s67
      %s69 = sphi 0, %s67
      %s70 = sphi 0, %s69
      %s84 = sphi 0, %s70
      %s88 = sphi 0, %s88
      %s90 = sphi 0, %s88
      %s91 = sphi 0, %s90
      %s105 = sphi 0, %s91
      %s109 = sphi 0, %s109
      %s111 = sphi 0, %s109
      %s112 = sphi 0, %s111
      %s126 = sphi 0, %s112
      %s132 = sphi 0, %s134
      %s135 = sphi 0, %s132
      %s136 = sphi 0, %s135
      %s152 = sphi 0, %s136
    $region4: #{tpu_custom_call.1} parent=1 // loop_header_branch
      %15 = sbr.rel (%p13) target = $region8
    $region5: #{tpu_custom_call.1} parent=1 // loop_body
      %s17 = ssub.s32 %s12, 1
      %s18 = ssub.s32 %s12, 2
      %s19 = sadd.s32 %s12, 1
      %s20 = ssub.s32 %s12, %s19
      %p21 = scmp.eq.s32.totalorder %s20, 0
      %s23 = sadd.s32 %s22, 1
      %s24 = scalar_select %p21, %s22, %s23
      %p27 = pneg %p21
      %p28 = scmp.eq.s32.totalorder %s12, 1
      %p29 = por %p27, %p28
      %p30 = scmp.ne.s32.totalorder %s22, %s25
      %p31 = scmp.eq.s32.totalorder %s12, 0
      %p32 = por %p30, %p31
      %p33 = scmp.ne.s32.totalorder %s22, %s25
      %p34 = scmp.eq.s32.totalorder %s17, 1
      %p35 = por %p33, %p34
      %p36 = scmp.ne.s32.totalorder %s25, %s26
      %p37 = scmp.eq.s32.totalorder %s17, 0
      %p38 = por %p36, %p37
      %p39 = scmp.ne.s32.totalorder %s25, %s26
      %p40 = scmp.eq.s32.totalorder %s18, 1
      %p41 = por %p39, %p40
      %p43 = scmp.ne.s32.totalorder %s26, %s42
      %p44 = scmp.eq.s32.totalorder %s18, 0
      %p45 = por %p43, %p44
      %s47 = sadd.s32 %s46, 1
      %p50 = scmp.eq.s32.totalorder %s12, 1
      %p51 = scmp.ne.s32.totalorder %s46, %s48
      %p52 = scmp.eq.s32.totalorder %s12, 0
      %p53 = por %p51, %p52
      %p54 = scmp.ne.s32.totalorder %s46, %s48
      %p55 = scmp.eq.s32.totalorder %s17, 1
      %p56 = por %p54, %p55
      %p57 = scmp.ne.s32.totalorder %s48, %s49
      %p58 = scmp.eq.s32.totalorder %s17, 0
      %p59 = por %p57, %p58
      %p60 = scmp.ne.s32.totalorder %s48, %s49
      %p61 = scmp.eq.s32.totalorder %s18, 1
      %p62 = por %p60, %p61
      %p64 = scmp.ne.s32.totalorder %s49, %s63
      %p65 = scmp.eq.s32.totalorder %s18, 0
      %p66 = por %p64, %p65
      %s68 = sadd.s32 %s67, 1
      %p71 = scmp.eq.s32.totalorder %s12, 1
      %p72 = scmp.ne.s32.totalorder %s67, %s69
      %p73 = scmp.eq.s32.totalorder %s12, 0
      %p74 = por %p72, %p73
      %p75 = scmp.ne.s32.totalorder %s67, %s69
      %p76 = scmp.eq.s32.totalorder %s17, 1
      %p77 = por %p75, %p76
      %p78 = scmp.ne.s32.totalorder %s69, %s70
      %p79 = scmp.eq.s32.totalorder %s17, 0
      %p80 = por %p78, %p79
      %p81 = scmp.ne.s32.totalorder %s69, %s70
      %p82 = scmp.eq.s32.totalorder %s18, 1
      %p83 = por %p81, %p82
      %p85 = scmp.ne.s32.totalorder %s70, %s84
      %p86 = scmp.eq.s32.totalorder %s18, 0
      %p87 = por %p85, %p86
      %s89 = sadd.s32 %s88, 1
      %p92 = scmp.eq.s32.totalorder %s12, 1
      %p93 = scmp.ne.s32.totalorder %s88, %s90
      %p94 = scmp.eq.s32.totalorder %s12, 0
      %p95 = por %p93, %p94
      %p96 = scmp.ne.s32.totalorder %s88, %s90
      %p97 = scmp.eq.s32.totalorder %s17, 1
      %p98 = por %p96, %p97
      %p99 = scmp.ne.s32.totalorder %s90, %s91
      %p100 = scmp.eq.s32.totalorder %s17, 0
      %p101 = por %p99, %p100
      %p102 = scmp.ne.s32.totalorder %s90, %s91
      %p103 = scmp.eq.s32.totalorder %s18, 1
      %p104 = por %p102, %p103
      %p106 = scmp.ne.s32.totalorder %s91, %s105
      %p107 = scmp.eq.s32.totalorder %s18, 0
      %p108 = por %p106, %p107
      %s110 = sadd.s32 %s109, 1
      %p113 = scmp.eq.s32.totalorder %s12, 1
      %p114 = scmp.ne.s32.totalorder %s109, %s111
      %p115 = scmp.eq.s32.totalorder %s12, 0
      %p116 = por %p114, %p115
      %p117 = scmp.ne.s32.totalorder %s109, %s111
      %p118 = scmp.eq.s32.totalorder %s17, 1
      %p119 = por %p117, %p118
      %p120 = scmp.ne.s32.totalorder %s111, %s112
      %p121 = scmp.eq.s32.totalorder %s17, 0
      %p122 = por %p120, %p121
      %p123 = scmp.ne.s32.totalorder %s111, %s112
      %p124 = scmp.eq.s32.totalorder %s18, 1
      %p125 = por %p123, %p124
      %p127 = scmp.ne.s32.totalorder %s112, %s126
      %p128 = scmp.eq.s32.totalorder %s18, 0
      %p129 = por %p127, %p128
      %s130 = ssub.s32 %s12, %s19
      %p131 = scmp.eq.s32.totalorder %s130, 0
      %s133 = sadd.s32 %s132, 1
      %s134 = scalar_select %p131, %s132, %s133
      %p137 = pneg %p131
      %p138 = scmp.eq.s32.totalorder %s12, 1
      %p139 = por %p137, %p138
      %p140 = scmp.ne.s32.totalorder %s132, %s135
      %p141 = scmp.eq.s32.totalorder %s12, 0
      %p142 = por %p140, %p141
      %p143 = scmp.ne.s32.totalorder %s132, %s135
      %p144 = scmp.eq.s32.totalorder %s17, 1
      %p145 = por %p143, %p144
      %p146 = scmp.ne.s32.totalorder %s135, %s136
      %p147 = scmp.eq.s32.totalorder %s17, 0
      %p148 = por %p146, %p147
      %p149 = scmp.ne.s32.totalorder %s135, %s136
      %p150 = scmp.eq.s32.totalorder %s18, 1
      %p151 = por %p149, %p150
      %p153 = scmp.ne.s32.totalorder %s136, %s152
      %p154 = scmp.eq.s32.totalorder %s18, 0
      %p155 = por %p153, %p154
      %p156 = scmp.le.s32.totalorder 1, %s12
      %p157 = scmp.lt.s32.totalorder %s12, 3
      %p158 = pnand %p156, %p157
      %p159 = pneg %p158
      // Predicated region
      $region9: #{tpu_custom_call.1} parent=5 // pred_check
        _
      $region10: #{tpu_custom_call.1} parent=5 // pred_check_branch
        %161 = sbr.rel (%p158) target = $region12
      $region11: #{tpu_custom_call.1} parent=5 // pred_region
        %s162 = ssub.s32 %s12, 1
        // Predicated region
        $region13: #{tpu_custom_call.1} parent=11 // pred_check
          %p163 = pneg %p59
        $region14: #{tpu_custom_call.1} parent=11 // pred_check_branch
          %165 = sbr.rel (%p163) target = $region16
        $region15: #{tpu_custom_call.1} parent=11 // pred_region
          _
        $region16: #{tpu_custom_call.1} parent=11 // pred_fallthru
          _
        // Predicated region
        $region17: #{tpu_custom_call.1} parent=11 // pred_check
          %p166 = pneg %p80
        $region18: #{tpu_custom_call.1} parent=11 // pred_check_branch
          %168 = sbr.rel (%p166) target = $region20
        $region19: #{tpu_custom_call.1} parent=11 // pred_region
          _
        $region20: #{tpu_custom_call.1} parent=11 // pred_fallthru
          _
        // Predicated region
        $region21: #{tpu_custom_call.1} parent=11 // pred_check
          %p169 = pneg %p101
        $region22: #{tpu_custom_call.1} parent=11 // pred_check_branch
          %171 = sbr.rel (%p169) target = $region24
        $region23: #{tpu_custom_call.1} parent=11 // pred_region
          %s173 = ssub.s32 9216, 9216
          %174 = vsyncadd [#allocation4], %s173
          %s175 = sshll.u32 [#allocation3], 4
          %s176 = int_to_ptr.vmem [resolvable:$true] %s175
          %181 = dma.hbm_to_vmem [thread:$0]  %s3, 9216, %s176, [#allocation4], 64, 64, 4
        $region24: #{tpu_custom_call.1} parent=11 // pred_fallthru
          _
        // Predicated region
        $region25: #{tpu_custom_call.1} parent=11 // pred_check
          %p182 = pneg %p122
        $region26: #{tpu_custom_call.1} parent=11 // pred_check_branch
          %184 = sbr.rel (%p182) target = $region28
        $region27: #{tpu_custom_call.1} parent=11 // pred_region
          _
        $region28: #{tpu_custom_call.1} parent=11 // pred_fallthru
          _
      $region12: #{tpu_custom_call.1} parent=5 // pred_fallthru
        _
      %p185 = scmp.lt.s32.totalorder %s12, 2
      // Predicated region
      $region29: #{tpu_custom_call.1} parent=5 // pred_check
        %p186 = pneg %p185
      $region30: #{tpu_custom_call.1} parent=5 // pred_check_branch
        %188 = sbr.rel (%p186) target = $region32
      $region31: #{tpu_custom_call.1} parent=5 // pred_region
        // Predicated region
        $region33: #{tpu_custom_call.1} parent=31 // pred_check
          %p189 = pneg %p32
        $region34: #{tpu_custom_call.1} parent=31 // pred_check_branch
          %191 = sbr.rel (%p189) target = $region36
        $region35: #{tpu_custom_call.1} parent=31 // pred_region
          %p192 = scmp.lt.s32.totalorder %s12, 1
          %s193 = scalar_select %p192, %s12, 1
          %s194 = smul.addr %s193, 32
          %s195 = smul.addr %s194, 4
          %s196 = scalar_lea.vmem %s0, %s195
        $region36: #{tpu_custom_call.1} parent=31 // pred_fallthru
          _
      $region32: #{tpu_custom_call.1} parent=5 // pred_fallthru
        _
      %p197 = scmp.le.s32.totalorder 1, %s12
      %p198 = scmp.lt.s32.totalorder %s12, 3
      %p199 = pnand %p197, %p198
      %p200 = pneg %p199
      // Predicated region
      $region37: #{tpu_custom_call.1} parent=5 // pred_check
        _
      $region38: #{tpu_custom_call.1} parent=5 // pred_check_branch
        %202 = sbr.rel (%p199) target = $region40
      $region39: #{tpu_custom_call.1} parent=5 // pred_region
        %s203 = ssub.s32 %s12, 1
        // Predicated region
        $region41: #{tpu_custom_call.1} parent=39 // pred_check
          %p204 = pneg %p101
        $region42: #{tpu_custom_call.1} parent=39 // pred_check_branch
          %206 = sbr.rel (%p204) target = $region44
        $region43: #{tpu_custom_call.1} parent=39 // pred_region
          %207 = dma.done [#allocation4], 9216
        $region44: #{tpu_custom_call.1} parent=39 // pred_fallthru
          _
        %p208 = scmp.lt.s32.totalorder %s17, 1
        %s209 = scalar_select %p208, %s17, 1
        %s210 = smul.addr %s209, 32
        %s211 = smul.addr %s210, 4
        %s212 = scalar_lea.vmem %s0, %s211
        %p213 = pneg %p38
        %p214 = pneg %p35
        %p215 = pneg %p59
        %p216 = pneg %p56
        %p217 = pneg %p80
        %p218 = pneg %p77
        %p219 = pneg %p101
        %p220 = pneg %p98
        %p221 = pneg %p122
        %p222 = pneg %p119
        %p223 = pneg %p148
        %p224 = pneg %p145
        %p225 = scmp.lt.s32.totalorder %s17, 1
        %s226 = scalar_select %p225, %s17, 1
        %s227 = smul.addr %s226, 32
        %s228 = smul.addr %s227, 8
        %s229 = scalar_lea.vmem %s5, %s228
        %p230 = scmp.lt.s32.totalorder %s17, 1
        %s231 = scalar_select %p230, %s17, 1
        %s232 = smul.addr %s231, 32
        %s233 = smul.addr %s232, 4
        %s234 = scalar_lea.vmem %s0, %s233
        %p235 = scmp.lt.s32.totalorder %s17, 1
        %s236 = scalar_select %p235, %s17, 1
        %s237 = smul.addr %s236, 32
        %s238 = smul.addr %s237, 8
        %s239 = scalar_lea.vmem %s5, %s238
        %v241 = vld [vmem:[%s234] sm:$0xf]
        %v242 = vld [vmem:[%s234 + $0x4] sm:$0xf]
        %v243 = vld [vmem:[%s234 + $0x8] sm:$0xf]
        %v244 = vld [vmem:[%s234 + $0xc] sm:$0xf]
        %v245 = vld [vmem:[%s234 + $0x10] sm:$0xf]
        %v246 = vld [vmem:[%s234 + $0x14] sm:$0xf]
        %v247 = vld [vmem:[%s234 + $0x18] sm:$0xf]
        %v248 = vld [vmem:[%s234 + $0x1c] sm:$0xf]
        %v249 = vld [vmem:[%s234 + $0x20] sm:$0xf]
        %v250 = vld [vmem:[%s234 + $0x24] sm:$0xf]
        %v251 = vld [vmem:[%s234 + $0x28] sm:$0xf]
        %v252 = vld [vmem:[%s234 + $0x2c] sm:$0xf]
        %v253 = vld [vmem:[%s234 + $0x30] sm:$0xf]
        %v254 = vld [vmem:[%s234 + $0x34] sm:$0xf]
        %v255 = vld [vmem:[%s234 + $0x38] sm:$0xf]
        %v256 = vld [vmem:[%s234 + $0x3c] sm:$0xf]
        %v257 = vld [vmem:[%s234 + $0x40] sm:$0xf]
        %v258 = vld [vmem:[%s234 + $0x44] sm:$0xf]
        %v259 = vld [vmem:[%s234 + $0x48] sm:$0xf]
        %v260 = vld [vmem:[%s234 + $0x4c] sm:$0xf]
        %v261 = vld [vmem:[%s234 + $0x50] sm:$0xf]
        %v262 = vld [vmem:[%s234 + $0x54] sm:$0xf]
        %v263 = vld [vmem:[%s234 + $0x58] sm:$0xf]
        %v264 = vld [vmem:[%s234 + $0x5c] sm:$0xf]
        %v265 = vld [vmem:[%s234 + $0x60] sm:$0xf]
        %v266 = vld [vmem:[%s234 + $0x64] sm:$0xf]
        %v267 = vld [vmem:[%s234 + $0x68] sm:$0xf]
        %v268 = vld [vmem:[%s234 + $0x6c] sm:$0xf]
        %v269 = vld [vmem:[%s234 + $0x70] sm:$0xf]
        %v270 = vld [vmem:[%s234 + $0x74] sm:$0xf]
        %v271 = vld [vmem:[%s234 + $0x78] sm:$0xf]
        %v272 = vld [vmem:[%s234 + $0x7c] sm:$0xf]
        %v273 = vld [vmem:[%s1] sm:$0xf]
        %v274 = vld [vmem:[%s1 + $0x4] sm:$0xf]
        %v275 = vld [vmem:[%s1 + $0x8] sm:$0xf]
        %v276 = vld [vmem:[%s1 + $0xc] sm:$0xf]
        %v277 = vld [vmem:[%s2] sm:$0x1]
        %v279 = vlaneseq
        %v280 = vshrl.u32 %v279, 7
        %v281 = vsub.s32 0, %v280
        %v282 = vrot.slane %v277, %v281
        %v316 = vunpack.c.l.b16 %v241
        %v317 = vunpack.c.l.b16 %v242
        %v318 = vunpack.c.l.b16 %v243
        %v319 = vunpack.c.l.b16 %v244
        %v320 = vunpack.c.l.b16 %v245
        %v321 = vunpack.c.l.b16 %v246
        %v322 = vunpack.c.l.b16 %v247
        %v323 = vunpack.c.l.b16 %v248
        %v324 = vunpack.c.l.b16 %v249
        %v325 = vunpack.c.l.b16 %v250
        %v326 = vunpack.c.l.b16 %v251
        %v327 = vunpack.c.l.b16 %v252
        %v328 = vunpack.c.l.b16 %v253
        %v329 = vunpack.c.l.b16 %v254
        %v330 = vunpack.c.l.b16 %v255
        %v331 = vunpack.c.l.b16 %v256
        %v332 = vunpack.c.l.b16 %v257
        %v333 = vunpack.c.l.b16 %v258
        %v334 = vunpack.c.l.b16 %v259
        %v335 = vunpack.c.l.b16 %v260
        %v336 = vunpack.c.l.b16 %v261
        %v337 = vunpack.c.l.b16 %v262
        %v338 = vunpack.c.l.b16 %v263
        %v339 = vunpack.c.l.b16 %v264
        %v340 = vunpack.c.l.b16 %v265
        %v341 = vunpack.c.l.b16 %v266
        %v342 = vunpack.c.l.b16 %v267
        %v343 = vunpack.c.l.b16 %v268
        %v344 = vunpack.c.l.b16 %v269
        %v345 = vunpack.c.l.b16 %v270
        %v346 = vunpack.c.l.b16 %v271
        %v347 = vunpack.c.l.b16 %v272
        %v348 = vpack.c.b16 %v317, %v316
        %v349 = vpack.c.b16 %v319, %v318
        %v350 = vpack.c.b16 %v321, %v320
        %v351 = vpack.c.b16 %v323, %v322
        %v352 = vpack.c.b16 %v325, %v324
        %v353 = vpack.c.b16 %v327, %v326
        %v354 = vpack.c.b16 %v329, %v328
        %v355 = vpack.c.b16 %v331, %v330
        %v356 = vpack.c.b16 %v333, %v332
        %v357 = vpack.c.b16 %v335, %v334
        %v358 = vpack.c.b16 %v337, %v336
        %v359 = vpack.c.b16 %v339, %v338
        %v360 = vpack.c.b16 %v341, %v340
        %v361 = vpack.c.b16 %v343, %v342
        %v362 = vpack.c.b16 %v345, %v344
        %v363 = vpack.c.b16 %v347, %v346
        %v368 = vunpack.c.l.b16 %v273
        %v369 = vunpack.c.l.b16 %v274
        %v370 = vunpack.c.l.b16 %v275
        %v371 = vunpack.c.l.b16 %v276
        %v372 = vpack.c.b16 %v369, %v368
        %v373 = vpack.c.b16 %v371, %v370
        %vm376 = vcmask 261120
        %v378 = vsel %vm376, %v348, 0
        %v381 = vsel %vm376, %v349, 0
        %v384 = vsel %vm376, %v350, 0
        %v387 = vsel %vm376, %v351, 0
        %v390 = vsel %vm376, %v352, 0
        %v393 = vsel %vm376, %v353, 0
        %v396 = vsel %vm376, %v354, 0
        %v399 = vsel %vm376, %v355, 0
        %v402 = vsel %vm376, %v356, 0
        %v405 = vsel %vm376, %v357, 0
        %v408 = vsel %vm376, %v358, 0
        %v411 = vsel %vm376, %v359, 0
        %v414 = vsel %vm376, %v360, 0
        %v417 = vsel %vm376, %v361, 0
        %v420 = vsel %vm376, %v362, 0
        %v423 = vsel %vm376, %v363, 0
        %425 = vmatprep.subr.bf16.mxu0 0
        %426 = vmatpush1.bf16.msra.mxu0 %v372
        %427 = vmatprep.subr.bf16.mxu0 0
        %428 = vmatpush1.bf16.msra.mxu0 %v373
        %429 = vmatprep.subr.bf16.mxu0 0
        %430 = vmatpush1.bf16.msra.mxu0 0
        %431 = vmatprep.subr.bf16.mxu0 0
        %432 = vmatpush1.bf16.msra.mxu0 0
        %433 = vmatprep.subr.bf16.mxu0 0
        %434 = vmatpush1.bf16.msra.mxu0 0
        %435 = vmatprep.subr.bf16.mxu0 0
        %436 = vmatpush1.bf16.msra.mxu0 0
        %437 = vmatprep.subr.bf16.mxu0 0
        %438 = vmatpush1.bf16.msra.mxu0 0
        %439 = vmatprep.subr.bf16.mxu0 0
        %440 = vmatpush1.bf16.msra.mxu0 0
        %441 = vmatprep.subr.bf16.mxu0 0
        %442 = vmatpush1.bf16.msra.mxu0 0
        %443 = vmatprep.subr.bf16.mxu0 0
        %444 = vmatpush1.bf16.msra.mxu0 0
        %445 = vmatprep.subr.bf16.mxu0 0
        %446 = vmatpush1.bf16.msra.mxu0 0
        %447 = vmatprep.subr.bf16.mxu0 0
        %448 = vmatpush1.bf16.msra.mxu0 0
        %449 = vmatprep.subr.bf16.mxu0 0
        %450 = vmatpush1.bf16.msra.mxu0 0
        %451 = vmatprep.subr.bf16.mxu0 0
        %452 = vmatpush1.bf16.msra.mxu0 0
        %453 = vmatprep.subr.bf16.mxu0 0
        %454 = vmatpush1.bf16.msra.mxu0 0
        %455 = vmatprep.subr.bf16.mxu0 0
        %456 = vmatpush1.bf16.msra.mxu0 0
        %457 = vmatprep.mubr.bf16.mxu0 0
        %458 = vmatmul.mubr.bf16.gmra.mrb[0].mxu0 %v378
        %v459 = vpop.f32.mrb[0].mxu0
        %v460 = vadd.f32 %v282, %v459
        %v461 = vpop.f32.mrb[0].mxu0
        %v462 = vpop.f32.mrb[0].mxu0
        %v463 = vadd.f32 %v282, %v462
        %v464 = vpop.f32.mrb[0].mxu0
        %465 = vmatprep.mubr.bf16.mxu0 0
        %466 = vmatmul.mubr.bf16.gmra.mrb[0].mxu0 %v381
        %v467 = vpop.f32.mrb[0].mxu0
        %v468 = vadd.f32 %v282, %v467
        %v469 = vpop.f32.mrb[0].mxu0
        %v470 = vpop.f32.mrb[0].mxu0
        %v471 = vadd.f32 %v282, %v470
        %v472 = vpop.f32.mrb[0].mxu0
        %473 = vmatprep.mubr.bf16.mxu0 0
        %474 = vmatmul.mubr.bf16.gmra.mrb[0].mxu0 %v384
        %v475 = vpop.f32.mrb[0].mxu0
        %v476 = vadd.f32 %v282, %v475
        %v477 = vpop.f32.mrb[0].mxu0
        %v478 = vpop.f32.mrb[0].mxu0
        %v479 = vadd.f32 %v282, %v478
        %v480 = vpop.f32.mrb[0].mxu0
        %481 = vmatprep.mubr.bf16.mxu0 0
        %482 = vmatmul.mubr.bf16.gmra.mrb[0].mxu0 %v387
        %v483 = vpop.f32.mrb[0].mxu0
        %v484 = vadd.f32 %v282, %v483
        %v485 = vpop.f32.mrb[0].mxu0
        %v486 = vpop.f32.mrb[0].mxu0
        %v487 = vadd.f32 %v282, %v486
        %v488 = vpop.f32.mrb[0].mxu0
        %489 = vmatprep.mubr.bf16.mxu0 0
        %490 = vmatmul.mubr.bf16.gmra.mrb[0].mxu0 %v390
        %v491 = vpop.f32.mrb[0].mxu0
        %v492 = vadd.f32 %v282, %v491
        %v493 = vpop.f32.mrb[0].mxu0
        %v494 = vpop.f32.mrb[0].mxu0
        %v495 = vadd.f32 %v282, %v494
        %v496 = vpop.f32.mrb[0].mxu0
        %497 = vmatprep.mubr.bf16.mxu0 0
        %498 = vmatmul.mubr.bf16.gmra.mrb[0].mxu0 %v393
        %v499 = vpop.f32.mrb[0].mxu0
        %v500 = vadd.f32 %v282, %v499
        %v501 = vpop.f32.mrb[0].mxu0
        %v502 = vpop.f32.mrb[0].mxu0
        %v503 = vadd.f32 %v282, %v502
        %v504 = vpop.f32.mrb[0].mxu0
        %505 = vmatprep.mubr.bf16.mxu0 0
        %506 = vmatmul.mubr.bf16.gmra.mrb[0].mxu0 %v396
        %v507 = vpop.f32.mrb[0].mxu0
        %v508 = vadd.f32 %v282, %v507
        %v509 = vpop.f32.mrb[0].mxu0
        %v510 = vpop.f32.mrb[0].mxu0
        %v511 = vadd.f32 %v282, %v510
        %v512 = vpop.f32.mrb[0].mxu0
        %513 = vmatprep.mubr.bf16.mxu0 0
        %514 = vmatmul.mubr.bf16.gmra.mrb[0].mxu0 %v399
        %v515 = vpop.f32.mrb[0].mxu0
        %v516 = vadd.f32 %v282, %v515
        %v517 = vpop.f32.mrb[0].mxu0
        %v518 = vpop.f32.mrb[0].mxu0
        %v519 = vadd.f32 %v282, %v518
        %v520 = vpop.f32.mrb[0].mxu0
        %521 = vmatprep.mubr.bf16.mxu0 0
        %522 = vmatmul.mubr.bf16.gmra.mrb[0].mxu0 %v402
        %v523 = vpop.f32.mrb[0].mxu0
        %v524 = vadd.f32 %v282, %v523
        %v525 = vpop.f32.mrb[0].mxu0
        %v526 = vpop.f32.mrb[0].mxu0
        %v527 = vadd.f32 %v282, %v526
        %v528 = vpop.f32.mrb[0].mxu0
        %529 = vmatprep.mubr.bf16.mxu0 0
        %530 = vmatmul.mubr.bf16.gmra.mrb[0].mxu0 %v405
        %v531 = vpop.f32.mrb[0].mxu0
        %v532 = vadd.f32 %v282, %v531
        %v533 = vpop.f32.mrb[0].mxu0
        %v534 = vpop.f32.mrb[0].mxu0
        %v535 = vadd.f32 %v282, %v534
        %v536 = vpop.f32.mrb[0].mxu0
        %537 = vmatprep.mubr.bf16.mxu0 0
        %538 = vmatmul.mubr.bf16.gmra.mrb[0].mxu0 %v408
        %v539 = vpop.f32.mrb[0].mxu0
        %v540 = vadd.f32 %v282, %v539
        %v541 = vpop.f32.mrb[0].mxu0
        %v542 = vpop.f32.mrb[0].mxu0
        %v543 = vadd.f32 %v282, %v542
        %v544 = vpop.f32.mrb[0].mxu0
        %545 = vmatprep.mubr.bf16.mxu0 0
        %546 = vmatmul.mubr.bf16.gmra.mrb[0].mxu0 %v411
        %v547 = vpop.f32.mrb[0].mxu0
        %v548 = vadd.f32 %v282, %v547
        %v549 = vpop.f32.mrb[0].mxu0
        %v550 = vpop.f32.mrb[0].mxu0
        %v551 = vadd.f32 %v282, %v550
        %v552 = vpop.f32.mrb[0].mxu0
        %553 = vmatprep.mubr.bf16.mxu0 0
        %554 = vmatmul.mubr.bf16.gmra.mrb[0].mxu0 %v414
        %v555 = vpop.f32.mrb[0].mxu0
        %v556 = vadd.f32 %v282, %v555
        %v557 = vpop.f32.mrb[0].mxu0
        %v558 = vpop.f32.mrb[0].mxu0
        %v559 = vadd.f32 %v282, %v558
        %v560 = vpop.f32.mrb[0].mxu0
        %561 = vmatprep.mubr.bf16.mxu0 0
        %562 = vmatmul.mubr.bf16.gmra.mrb[0].mxu0 %v417
        %v563 = vpop.f32.mrb[0].mxu0
        %v564 = vadd.f32 %v282, %v563
        %v565 = vpop.f32.mrb[0].mxu0
        %v566 = vpop.f32.mrb[0].mxu0
        %v567 = vadd.f32 %v282, %v566
        %v568 = vpop.f32.mrb[0].mxu0
        %569 = vmatprep.mubr.bf16.mxu0 0
        %570 = vmatmul.mubr.bf16.gmra.mrb[0].mxu0 %v420
        %v571 = vpop.f32.mrb[0].mxu0
        %v572 = vadd.f32 %v282, %v571
        %v573 = vpop.f32.mrb[0].mxu0
        %v574 = vpop.f32.mrb[0].mxu0
        %v575 = vadd.f32 %v282, %v574
        %v576 = vpop.f32.mrb[0].mxu0
        %577 = vmatprep.mubr.bf16.mxu0 0
        %578 = vmatmul.mubr.bf16.gmra.mrb[0].mxu0 %v423
        %v579 = vpop.f32.mrb[0].mxu0
        %v580 = vadd.f32 %v282, %v579
        %v581 = vpop.f32.mrb[0].mxu0
        %v582 = vpop.f32.mrb[0].mxu0
        %v583 = vadd.f32 %v282, %v582
        %v584 = vpop.f32.mrb[0].mxu0
        %585 = vdwg.mxu0
        %v586 = vmul.f32 %v460, 0.5
        %v587 = vmul.f32 %v463, 0.5
        %v588 = vmul.f32 %v468, 0.5
        %v589 = vmul.f32 %v471, 0.5
        %v590 = vmul.f32 %v476, 0.5
        %v591 = vmul.f32 %v479, 0.5
        %v592 = vmul.f32 %v484, 0.5
        %v593 = vmul.f32 %v487, 0.5
        %v594 = vmul.f32 %v492, 0.5
        %v595 = vmul.f32 %v495, 0.5
        %v596 = vmul.f32 %v500, 0.5
        %v597 = vmul.f32 %v503, 0.5
        %v598 = vmul.f32 %v508, 0.5
        %v599 = vmul.f32 %v511, 0.5
        %v600 = vmul.f32 %v516, 0.5
        %v601 = vmul.f32 %v519, 0.5
        %v602 = vmul.f32 %v524, 0.5
        %v603 = vmul.f32 %v527, 0.5
        %v604 = vmul.f32 %v532, 0.5
        %v605 = vmul.f32 %v535, 0.5
        %v606 = vmul.f32 %v540, 0.5
        %v607 = vmul.f32 %v543, 0.5
        %v608 = vmul.f32 %v548, 0.5
        %v609 = vmul.f32 %v551, 0.5
        %v610 = vmul.f32 %v556, 0.5
        %v611 = vmul.f32 %v559, 0.5
        %v612 = vmul.f32 %v564, 0.5
        %v613 = vmul.f32 %v567, 0.5
        %v614 = vmul.f32 %v572, 0.5
        %v615 = vmul.f32 %v575, 0.5
        %v616 = vmul.f32 %v580, 0.5
        %v617 = vmul.f32 %v583, 0.5
        %v618 = vmul.f32 %v460, 0.70710677
        %v619 = vmul.f32 %v463, 0.70710677
        %v620 = vmul.f32 %v468, 0.70710677
        %v621 = vmul.f32 %v471, 0.70710677
        %v622 = vmul.f32 %v476, 0.70710677
        %v623 = vmul.f32 %v479, 0.70710677
        %v624 = vmul.f32 %v484, 0.70710677
        %v625 = vmul.f32 %v487, 0.70710677
        %v626 = vmul.f32 %v492, 0.70710677
        %v627 = vmul.f32 %v495, 0.70710677
        %v628 = vmul.f32 %v500, 0.70710677
        %v629 = vmul.f32 %v503, 0.70710677
        %v630 = vmul.f32 %v508, 0.70710677
        %v631 = vmul.f32 %v511, 0.70710677
        %v632 = vmul.f32 %v516, 0.70710677
        %v633 = vmul.f32 %v519, 0.70710677
        %v634 = vmul.f32 %v524, 0.70710677
        %v635 = vmul.f32 %v527, 0.70710677
        %v636 = vmul.f32 %v532, 0.70710677
        %v637 = vmul.f32 %v535, 0.70710677
        %v638 = vmul.f32 %v540, 0.70710677
        %v639 = vmul.f32 %v543, 0.70710677
        %v640 = vmul.f32 %v548, 0.70710677
        %v641 = vmul.f32 %v551, 0.70710677
        %v642 = vmul.f32 %v556, 0.70710677
        %v643 = vmul.f32 %v559, 0.70710677
        %v644 = vmul.f32 %v564, 0.70710677
        %v645 = vmul.f32 %v567, 0.70710677
        %v646 = vmul.f32 %v572, 0.70710677
        %v647 = vmul.f32 %v575, 0.70710677
        %v648 = vmul.f32 %v580, 0.70710677
        %v649 = vmul.f32 %v583, 0.70710677
        %v650 = vand.u32 2147483647, %v618
        %v651 = vand.u32 2147483647, %v619
        %v652 = vand.u32 2147483647, %v620
        %v653 = vand.u32 2147483647, %v621
        %v654 = vand.u32 2147483647, %v622
        %v655 = vand.u32 2147483647, %v623
        %v656 = vand.u32 2147483647, %v624
        %v657 = vand.u32 2147483647, %v625
        %v658 = vand.u32 2147483647, %v626
        %v659 = vand.u32 2147483647, %v627
        %v660 = vand.u32 2147483647, %v628
        %v661 = vand.u32 2147483647, %v629
        %v662 = vand.u32 2147483647, %v630
        %v663 = vand.u32 2147483647, %v631
        %v664 = vand.u32 2147483647, %v632
        %v665 = vand.u32 2147483647, %v633
        %v666 = vand.u32 2147483647, %v634
        %v667 = vand.u32 2147483647, %v635
        %v668 = vand.u32 2147483647, %v636
        %v669 = vand.u32 2147483647, %v637
        %v670 = vand.u32 2147483647, %v638
        %v671 = vand.u32 2147483647, %v639
        %v672 = vand.u32 2147483647, %v640
        %v673 = vand.u32 2147483647, %v641
        %v674 = vand.u32 2147483647, %v642
        %v675 = vand.u32 2147483647, %v643
        %v676 = vand.u32 2147483647, %v644
        %v677 = vand.u32 2147483647, %v645
        %v678 = vand.u32 2147483647, %v646
        %v679 = vand.u32 2147483647, %v647
        %v680 = vand.u32 2147483647, %v648
        %v681 = vand.u32 2147483647, %v649
        %v682 = vmul.f32 %v650, 0.3275911
        %v683 = vmul.f32 %v651, 0.3275911
        %v684 = vmul.f32 %v652, 0.3275911
        %v685 = vmul.f32 %v653, 0.3275911
        %v686 = vmul.f32 %v654, 0.3275911
        %v687 = vmul.f32 %v655, 0.3275911
        %v688 = vmul.f32 %v656, 0.3275911
        %v689 = vmul.f32 %v657, 0.3275911
        %v690 = vmul.f32 %v658, 0.3275911
        %v691 = vmul.f32 %v659, 0.3275911
        %v692 = vmul.f32 %v660, 0.3275911
        %v693 = vmul.f32 %v661, 0.3275911
        %v694 = vmul.f32 %v662, 0.3275911
        %v695 = vmul.f32 %v663, 0.3275911
        %v696 = vmul.f32 %v664, 0.3275911
        %v697 = vmul.f32 %v665, 0.3275911
        %v698 = vmul.f32 %v666, 0.3275911
        %v699 = vmul.f32 %v667, 0.3275911
        %v700 = vmul.f32 %v668, 0.3275911
        %v701 = vmul.f32 %v669, 0.3275911
        %v702 = vmul.f32 %v670, 0.3275911
        %v703 = vmul.f32 %v671, 0.3275911
        %v704 = vmul.f32 %v672, 0.3275911
        %v705 = vmul.f32 %v673, 0.3275911
        %v706 = vmul.f32 %v674, 0.3275911
        %v707 = vmul.f32 %v675, 0.3275911
        %v708 = vmul.f32 %v676, 0.3275911
        %v709 = vmul.f32 %v677, 0.3275911
        %v710 = vmul.f32 %v678, 0.3275911
        %v711 = vmul.f32 %v679, 0.3275911
        %v712 = vmul.f32 %v680, 0.3275911
        %v713 = vmul.f32 %v681, 0.3275911
        %v714 = vadd.f32 %v682, 1.0
        %v715 = vadd.f32 %v683, 1.0
        %v716 = vadd.f32 %v684, 1.0
        %v717 = vadd.f32 %v685, 1.0
        %v718 = vadd.f32 %v686, 1.0
        %v719 = vadd.f32 %v687, 1.0
        %v720 = vadd.f32 %v688, 1.0
        %v721 = vadd.f32 %v689, 1.0
        %v722 = vadd.f32 %v690, 1.0
        %v723 = vadd.f32 %v691, 1.0
        %v724 = vadd.f32 %v692, 1.0
        %v725 = vadd.f32 %v693, 1.0
        %v726 = vadd.f32 %v694, 1.0
        %v727 = vadd.f32 %v695, 1.0
        %v728 = vadd.f32 %v696, 1.0
        %v729 = vadd.f32 %v697, 1.0
        %v730 = vadd.f32 %v698, 1.0
        %v731 = vadd.f32 %v699, 1.0
        %v732 = vadd.f32 %v700, 1.0
        %v733 = vadd.f32 %v701, 1.0
        %v734 = vadd.f32 %v702, 1.0
        %v735 = vadd.f32 %v703, 1.0
        %v736 = vadd.f32 %v704, 1.0
        %v737 = vadd.f32 %v705, 1.0
        %v738 = vadd.f32 %v706, 1.0
        %v739 = vadd.f32 %v707, 1.0
        %v740 = vadd.f32 %v708, 1.0
        %v741 = vadd.f32 %v709, 1.0
        %v742 = vadd.f32 %v710, 1.0
        %v743 = vadd.f32 %v711, 1.0
        %v744 = vadd.f32 %v712, 1.0
        %v745 = vadd.f32 %v713, 1.0
        %v746 = vrcp.pop %v714
        %v747 = vmul.f32 1.0, %v746
        %v748 = vrcp.pop %v715
        %v749 = vmul.f32 1.0, %v748
        %v750 = vrcp.pop %v716
        %v751 = vmul.f32 1.0, %v750
        %v752 = vrcp.pop %v717
        %v753 = vmul.f32 1.0, %v752
        %v754 = vrcp.pop %v718
        %v755 = vmul.f32 1.0, %v754
        %v756 = vrcp.pop %v719
        %v757 = vmul.f32 1.0, %v756
        %v758 = vrcp.pop %v720
        %v759 = vmul.f32 1.0, %v758
        %v760 = vrcp.pop %v721
        %v761 = vmul.f32 1.0, %v760
        %v762 = vrcp.pop %v722
        %v763 = vmul.f32 1.0, %v762
        %v764 = vrcp.pop %v723
        %v765 = vmul.f32 1.0, %v764
        %v766 = vrcp.pop %v724
        %v767 = vmul.f32 1.0, %v766
        %v768 = vrcp.pop %v725
        %v769 = vmul.f32 1.0, %v768
        %v770 = vrcp.pop %v726
        %v771 = vmul.f32 1.0, %v770
        %v772 = vrcp.pop %v727
        %v773 = vmul.f32 1.0, %v772
        %v774 = vrcp.pop %v728
        %v775 = vmul.f32 1.0, %v774
        %v776 = vrcp.pop %v729
        %v777 = vmul.f32 1.0, %v776
        %v778 = vrcp.pop %v730
        %v779 = vmul.f32 1.0, %v778
        %v780 = vrcp.pop %v731
        %v781 = vmul.f32 1.0, %v780
        %v782 = vrcp.pop %v732
        %v783 = vmul.f32 1.0, %v782
        %v784 = vrcp.pop %v733
        %v785 = vmul.f32 1.0, %v784
        %v786 = vrcp.pop %v734
        %v787 = vmul.f32 1.0, %v786
        %v788 = vrcp.pop %v735
        %v789 = vmul.f32 1.0, %v788
        %v790 = vrcp.pop %v736
        %v791 = vmul.f32 1.0, %v790
        %v792 = vrcp.pop %v737
        %v793 = vmul.f32 1.0, %v792
        %v794 = vrcp.pop %v738
        %v795 = vmul.f32 1.0, %v794
        %v796 = vrcp.pop %v739
        %v797 = vmul.f32 1.0, %v796
        %v798 = vrcp.pop %v740
        %v799 = vmul.f32 1.0, %v798
        %v800 = vrcp.pop %v741
        %v801 = vmul.f32 1.0, %v800
        %v802 = vrcp.pop %v742
        %v803 = vmul.f32 1.0, %v802
        %v804 = vrcp.pop %v743
        %v805 = vmul.f32 1.0, %v804
        %v806 = vrcp.pop %v744
        %v807 = vmul.f32 1.0, %v806
        %v808 = vrcp.pop %v745
        %v809 = vmul.f32 1.0, %v808
        %v810 = vmul.f32 %v747, 1.0614054
        %v811 = vmul.f32 %v749, 1.0614054
        %v812 = vmul.f32 %v751, 1.0614054
        %v813 = vmul.f32 %v753, 1.0614054
        %v814 = vmul.f32 %v755, 1.0614054
        %v815 = vmul.f32 %v757, 1.0614054
        %v816 = vmul.f32 %v759, 1.0614054
        %v817 = vmul.f32 %v761, 1.0614054
        %v818 = vmul.f32 %v763, 1.0614054
        %v819 = vmul.f32 %v765, 1.0614054
        %v820 = vmul.f32 %v767, 1.0614054
        %v821 = vmul.f32 %v769, 1.0614054
        %v822 = vmul.f32 %v771, 1.0614054
        %v823 = vmul.f32 %v773, 1.0614054
        %v824 = vmul.f32 %v775, 1.0614054
        %v825 = vmul.f32 %v777, 1.0614054
        %v826 = vmul.f32 %v779, 1.0614054
        %v827 = vmul.f32 %v781, 1.0614054
        %v828 = vmul.f32 %v783, 1.0614054
        %v829 = vmul.f32 %v785, 1.0614054
        %v830 = vmul.f32 %v787, 1.0614054
        %v831 = vmul.f32 %v789, 1.0614054
        %v832 = vmul.f32 %v791, 1.0614054
        %v833 = vmul.f32 %v793, 1.0614054
        %v834 = vmul.f32 %v795, 1.0614054
        %v835 = vmul.f32 %v797, 1.0614054
        %v836 = vmul.f32 %v799, 1.0614054
        %v837 = vmul.f32 %v801, 1.0614054
        %v838 = vmul.f32 %v803, 1.0614054
        %v839 = vmul.f32 %v805, 1.0614054
        %v840 = vmul.f32 %v807, 1.0614054
        %v841 = vmul.f32 %v809, 1.0614054
        %v842 = vadd.f32 %v810, -1.4531521
        %v843 = vadd.f32 %v811, -1.4531521
        %v844 = vadd.f32 %v812, -1.4531521
        %v845 = vadd.f32 %v813, -1.4531521
        %v846 = vadd.f32 %v814, -1.4531521
        %v847 = vadd.f32 %v815, -1.4531521
        %v848 = vadd.f32 %v816, -1.4531521
        %v849 = vadd.f32 %v817, -1.4531521
        %v850 = vadd.f32 %v818, -1.4531521
        %v851 = vadd.f32 %v819, -1.4531521
        %v852 = vadd.f32 %v820, -1.4531521
        %v853 = vadd.f32 %v821, -1.4531521
        %v854 = vadd.f32 %v822, -1.4531521
        %v855 = vadd.f32 %v823, -1.4531521
        %v856 = vadd.f32 %v824, -1.4531521
        %v857 = vadd.f32 %v825, -1.4531521
        %v858 = vadd.f32 %v826, -1.4531521
        %v859 = vadd.f32 %v827, -1.4531521
        %v860 = vadd.f32 %v828, -1.4531521
        %v861 = vadd.f32 %v829, -1.4531521
        %v862 = vadd.f32 %v830, -1.4531521
        %v863 = vadd.f32 %v831, -1.4531521
        %v864 = vadd.f32 %v832, -1.4531521
        %v865 = vadd.f32 %v833, -1.4531521
        %v866 = vadd.f32 %v834, -1.4531521
        %v867 = vadd.f32 %v835, -1.4531521
        %v868 = vadd.f32 %v836, -1.4531521
        %v869 = vadd.f32 %v837, -1.4531521
        %v870 = vadd.f32 %v838, -1.4531521
        %v871 = vadd.f32 %v839, -1.4531521
        %v872 = vadd.f32 %v840, -1.4531521
        %v873 = vadd.f32 %v841, -1.4531521
        %v874 = vmul.f32 %v842, %v747
        %v875 = vmul.f32 %v843, %v749
        %v876 = vmul.f32 %v844, %v751
        %v877 = vmul.f32 %v845, %v753
        %v878 = vmul.f32 %v846, %v755
        %v879 = vmul.f32 %v847, %v757
        %v880 = vmul.f32 %v848, %v759
        %v881 = vmul.f32 %v849, %v761
        %v882 = vmul.f32 %v850, %v763
        %v883 = vmul.f32 %v851, %v765
        %v884 = vmul.f32 %v852, %v767
        %v885 = vmul.f32 %v853, %v769
        %v886 = vmul.f32 %v854, %v771
        %v887 = vmul.f32 %v855, %v773
        %v888 = vmul.f32 %v856, %v775
        %v889 = vmul.f32 %v857, %v777
        %v890 = vmul.f32 %v858, %v779
        %v891 = vmul.f32 %v859, %v781
        %v892 = vmul.f32 %v860, %v783
        %v893 = vmul.f32 %v861, %v785
        %v894 = vmul.f32 %v862, %v787
        %v895 = vmul.f32 %v863, %v789
        %v896 = vmul.f32 %v864, %v791
        %v897 = vmul.f32 %v865, %v793
        %v898 = vmul.f32 %v866, %v795
        %v899 = vmul.f32 %v867, %v797
        %v900 = vmul.f32 %v868, %v799
        %v901 = vmul.f32 %v869, %v801
        %v902 = vmul.f32 %v870, %v803
        %v903 = vmul.f32 %v871, %v805
        %v904 = vmul.f32 %v872, %v807
        %v905 = vmul.f32 %v873, %v809
        %v906 = vadd.f32 %v874, 1.4214138
        %v907 = vadd.f32 %v875, 1.4214138
        %v908 = vadd.f32 %v876, 1.4214138
        %v909 = vadd.f32 %v877, 1.4214138
        %v910 = vadd.f32 %v878, 1.4214138
        %v911 = vadd.f32 %v879, 1.4214138
        %v912 = vadd.f32 %v880, 1.4214138
        %v913 = vadd.f32 %v881, 1.4214138
        %v914 = vadd.f32 %v882, 1.4214138
        %v915 = vadd.f32 %v883, 1.4214138
        %v916 = vadd.f32 %v884, 1.4214138
        %v917 = vadd.f32 %v885, 1.4214138
        %v918 = vadd.f32 %v886, 1.4214138
        %v919 = vadd.f32 %v887, 1.4214138
        %v920 = vadd.f32 %v888, 1.4214138
        %v921 = vadd.f32 %v889, 1.4214138
        %v922 = vadd.f32 %v890, 1.4214138
        %v923 = vadd.f32 %v891, 1.4214138
        %v924 = vadd.f32 %v892, 1.4214138
        %v925 = vadd.f32 %v893, 1.4214138
        %v926 = vadd.f32 %v894, 1.4214138
        %v927 = vadd.f32 %v895, 1.4214138
        %v928 = vadd.f32 %v896, 1.4214138
        %v929 = vadd.f32 %v897, 1.4214138
        %v930 = vadd.f32 %v898, 1.4214138
        %v931 = vadd.f32 %v899, 1.4214138
        %v932 = vadd.f32 %v900, 1.4214138
        %v933 = vadd.f32 %v901, 1.4214138
        %v934 = vadd.f32 %v902, 1.4214138
        %v935 = vadd.f32 %v903, 1.4214138
        %v936 = vadd.f32 %v904, 1.4214138
        %v937 = vadd.f32 %v905, 1.4214138
        %v938 = vmul.f32 %v906, %v747
        %v939 = vmul.f32 %v907, %v749
        %v940 = vmul.f32 %v908, %v751
        %v941 = vmul.f32 %v909, %v753
        %v942 = vmul.f32 %v910, %v755
        %v943 = vmul.f32 %v911, %v757
        %v944 = vmul.f32 %v912, %v759
        %v945 = vmul.f32 %v913, %v761
        %v946 = vmul.f32 %v914, %v763
        %v947 = vmul.f32 %v915, %v765
        %v948 = vmul.f32 %v916, %v767
        %v949 = vmul.f32 %v917, %v769
        %v950 = vmul.f32 %v918, %v771
        %v951 = vmul.f32 %v919, %v773
        %v952 = vmul.f32 %v920, %v775
        %v953 = vmul.f32 %v921, %v777
        %v954 = vmul.f32 %v922, %v779
        %v955 = vmul.f32 %v923, %v781
        %v956 = vmul.f32 %v924, %v783
        %v957 = vmul.f32 %v925, %v785
        %v958 = vmul.f32 %v926, %v787
        %v959 = vmul.f32 %v927, %v789
        %v960 = vmul.f32 %v928, %v791
        %v961 = vmul.f32 %v929, %v793
        %v962 = vmul.f32 %v930, %v795
        %v963 = vmul.f32 %v931, %v797
        %v964 = vmul.f32 %v932, %v799
        %v965 = vmul.f32 %v933, %v801
        %v966 = vmul.f32 %v934, %v803
        %v967 = vmul.f32 %v935, %v805
        %v968 = vmul.f32 %v936, %v807
        %v969 = vmul.f32 %v937, %v809
        %v970 = vadd.f32 %v938, -0.28449672
        %v971 = vadd.f32 %v939, -0.28449672
        %v972 = vadd.f32 %v940, -0.28449672
        %v973 = vadd.f32 %v941, -0.28449672
        %v974 = vadd.f32 %v942, -0.28449672
        %v975 = vadd.f32 %v943, -0.28449672
        %v976 = vadd.f32 %v944, -0.28449672
        %v977 = vadd.f32 %v945, -0.28449672
        %v978 = vadd.f32 %v946, -0.28449672
        %v979 = vadd.f32 %v947, -0.28449672
        %v980 = vadd.f32 %v948, -0.28449672
        %v981 = vadd.f32 %v949, -0.28449672
        %v982 = vadd.f32 %v950, -0.28449672
        %v983 = vadd.f32 %v951, -0.28449672
        %v984 = vadd.f32 %v952, -0.28449672
        %v985 = vadd.f32 %v953, -0.28449672
        %v986 = vadd.f32 %v954, -0.28449672
        %v987 = vadd.f32 %v955, -0.28449672
        %v988 = vadd.f32 %v956, -0.28449672
        %v989 = vadd.f32 %v957, -0.28449672
        %v990 = vadd.f32 %v958, -0.28449672
        %v991 = vadd.f32 %v959, -0.28449672
        %v992 = vadd.f32 %v960, -0.28449672
        %v993 = vadd.f32 %v961, -0.28449672
        %v994 = vadd.f32 %v962, -0.28449672
        %v995 = vadd.f32 %v963, -0.28449672
        %v996 = vadd.f32 %v964, -0.28449672
        %v997 = vadd.f32 %v965, -0.28449672
        %v998 = vadd.f32 %v966, -0.28449672
        %v999 = vadd.f32 %v967, -0.28449672
        %v1000 = vadd.f32 %v968, -0.28449672
        %v1001 = vadd.f32 %v969, -0.28449672
        %v1002 = vmul.f32 %v970, %v747
        %v1003 = vmul.f32 %v971, %v749
        %v1004 = vmul.f32 %v972, %v751
        %v1005 = vmul.f32 %v973, %v753
        %v1006 = vmul.f32 %v974, %v755
        %v1007 = vmul.f32 %v975, %v757
        %v1008 = vmul.f32 %v976, %v759
        %v1009 = vmul.f32 %v977, %v761
        %v1010 = vmul.f32 %v978, %v763
        %v1011 = vmul.f32 %v979, %v765
        %v1012 = vmul.f32 %v980, %v767
        %v1013 = vmul.f32 %v981, %v769
        %v1014 = vmul.f32 %v982, %v771
        %v1015 = vmul.f32 %v983, %v773
        %v1016 = vmul.f32 %v984, %v775
        %v1017 = vmul.f32 %v985, %v777
        %v1018 = vmul.f32 %v986, %v779
        %v1019 = vmul.f32 %v987, %v781
        %v1020 = vmul.f32 %v988, %v783
        %v1021 = vmul.f32 %v989, %v785
        %v1022 = vmul.f32 %v990, %v787
        %v1023 = vmul.f32 %v991, %v789
        %v1024 = vmul.f32 %v992, %v791
        %v1025 = vmul.f32 %v993, %v793
        %v1026 = vmul.f32 %v994, %v795
        %v1027 = vmul.f32 %v995, %v797
        %v1028 = vmul.f32 %v996, %v799
        %v1029 = vmul.f32 %v997, %v801
        %v1030 = vmul.f32 %v998, %v803
        %v1031 = vmul.f32 %v999, %v805
        %v1032 = vmul.f32 %v1000, %v807
        %v1033 = vmul.f32 %v1001, %v809
        %v1034 = vadd.f32 %v1002, 0.2548296
        %v1035 = vadd.f32 %v1003, 0.2548296
        %v1036 = vadd.f32 %v1004, 0.2548296
        %v1037 = vadd.f32 %v1005, 0.2548296
        %v1038 = vadd.f32 %v1006, 0.2548296
        %v1039 = vadd.f32 %v1007, 0.2548296
        %v1040 = vadd.f32 %v1008, 0.2548296
        %v1041 = vadd.f32 %v1009, 0.2548296
        %v1042 = vadd.f32 %v1010, 0.2548296
        %v1043 = vadd.f32 %v1011, 0.2548296
        %v1044 = vadd.f32 %v1012, 0.2548296
        %v1045 = vadd.f32 %v1013, 0.2548296
        %v1046 = vadd.f32 %v1014, 0.2548296
        %v1047 = vadd.f32 %v1015, 0.2548296
        %v1048 = vadd.f32 %v1016, 0.2548296
        %v1049 = vadd.f32 %v1017, 0.2548296
        %v1050 = vadd.f32 %v1018, 0.2548296
        %v1051 = vadd.f32 %v1019, 0.2548296
        %v1052 = vadd.f32 %v1020, 0.2548296
        %v1053 = vadd.f32 %v1021, 0.2548296
        %v1054 = vadd.f32 %v1022, 0.2548296
        %v1055 = vadd.f32 %v1023, 0.2548296
        %v1056 = vadd.f32 %v1024, 0.2548296
        %v1057 = vadd.f32 %v1025, 0.2548296
        %v1058 = vadd.f32 %v1026, 0.2548296
        %v1059 = vadd.f32 %v1027, 0.2548296
        %v1060 = vadd.f32 %v1028, 0.2548296
        %v1061 = vadd.f32 %v1029, 0.2548296
        %v1062 = vadd.f32 %v1030, 0.2548296
        %v1063 = vadd.f32 %v1031, 0.2548296
        %v1064 = vadd.f32 %v1032, 0.2548296
        %v1065 = vadd.f32 %v1033, 0.2548296
        %v1066 = vmul.f32 %v1034, %v747
        %v1067 = vmul.f32 %v1035, %v749
        %v1068 = vmul.f32 %v1036, %v751
        %v1069 = vmul.f32 %v1037, %v753
        %v1070 = vmul.f32 %v1038, %v755
        %v1071 = vmul.f32 %v1039, %v757
        %v1072 = vmul.f32 %v1040, %v759
        %v1073 = vmul.f32 %v1041, %v761
        %v1074 = vmul.f32 %v1042, %v763
        %v1075 = vmul.f32 %v1043, %v765
        %v1076 = vmul.f32 %v1044, %v767
        %v1077 = vmul.f32 %v1045, %v769
        %v1078 = vmul.f32 %v1046, %v771
        %v1079 = vmul.f32 %v1047, %v773
        %v1080 = vmul.f32 %v1048, %v775
        %v1081 = vmul.f32 %v1049, %v777
        %v1082 = vmul.f32 %v1050, %v779
        %v1083 = vmul.f32 %v1051, %v781
        %v1084 = vmul.f32 %v1052, %v783
        %v1085 = vmul.f32 %v1053, %v785
        %v1086 = vmul.f32 %v1054, %v787
        %v1087 = vmul.f32 %v1055, %v789
        %v1088 = vmul.f32 %v1056, %v791
        %v1089 = vmul.f32 %v1057, %v793
        %v1090 = vmul.f32 %v1058, %v795
        %v1091 = vmul.f32 %v1059, %v797
        %v1092 = vmul.f32 %v1060, %v799
        %v1093 = vmul.f32 %v1061, %v801
        %v1094 = vmul.f32 %v1062, %v803
        %v1095 = vmul.f32 %v1063, %v805
        %v1096 = vmul.f32 %v1064, %v807
        %v1097 = vmul.f32 %v1065, %v809
        %v1098 = vsub.f32 0.0, %v650
        %v1099 = vsub.f32 0.0, %v651
        %v1100 = vsub.f32 0.0, %v652
        %v1101 = vsub.f32 0.0, %v653
        %v1102 = vsub.f32 0.0, %v654
        %v1103 = vsub.f32 0.0, %v655
        %v1104 = vsub.f32 0.0, %v656
        %v1105 = vsub.f32 0.0, %v657
        %v1106 = vsub.f32 0.0, %v658
        %v1107 = vsub.f32 0.0, %v659
        %v1108 = vsub.f32 0.0, %v660
        %v1109 = vsub.f32 0.0, %v661
        %v1110 = vsub.f32 0.0, %v662
        %v1111 = vsub.f32 0.0, %v663
        %v1112 = vsub.f32 0.0, %v664
        %v1113 = vsub.f32 0.0, %v665
        %v1114 = vsub.f32 0.0, %v666
        %v1115 = vsub.f32 0.0, %v667
        %v1116 = vsub.f32 0.0, %v668
        %v1117 = vsub.f32 0.0, %v669
        %v1118 = vsub.f32 0.0, %v670
        %v1119 = vsub.f32 0.0, %v671
        %v1120 = vsub.f32 0.0, %v672
        %v1121 = vsub.f32 0.0, %v673
        %v1122 = vsub.f32 0.0, %v674
        %v1123 = vsub.f32 0.0, %v675
        %v1124 = vsub.f32 0.0, %v676
        %v1125 = vsub.f32 0.0, %v677
        %v1126 = vsub.f32 0.0, %v678
        %v1127 = vsub.f32 0.0, %v679
        %v1128 = vsub.f32 0.0, %v680
        %v1129 = vsub.f32 0.0, %v681
        %v1130 = vmul.f32 %v1098, %v650
        %v1131 = vmul.f32 %v1099, %v651
        %v1132 = vmul.f32 %v1100, %v652
        %v1133 = vmul.f32 %v1101, %v653
        %v1134 = vmul.f32 %v1102, %v654
        %v1135 = vmul.f32 %v1103, %v655
        %v1136 = vmul.f32 %v1104, %v656
        %v1137 = vmul.f32 %v1105, %v657
        %v1138 = vmul.f32 %v1106, %v658
        %v1139 = vmul.f32 %v1107, %v659
        %v1140 = vmul.f32 %v1108, %v660
        %v1141 = vmul.f32 %v1109, %v661
        %v1142 = vmul.f32 %v1110, %v662
        %v1143 = vmul.f32 %v1111, %v663
        %v1144 = vmul.f32 %v1112, %v664
        %v1145 = vmul.f32 %v1113, %v665
        %v1146 = vmul.f32 %v1114, %v666
        %v1147 = vmul.f32 %v1115, %v667
        %v1148 = vmul.f32 %v1116, %v668
        %v1149 = vmul.f32 %v1117, %v669
        %v1150 = vmul.f32 %v1118, %v670
        %v1151 = vmul.f32 %v1119, %v671
        %v1152 = vmul.f32 %v1120, %v672
        %v1153 = vmul.f32 %v1121, %v673
        %v1154 = vmul.f32 %v1122, %v674
        %v1155 = vmul.f32 %v1123, %v675
        %v1156 = vmul.f32 %v1124, %v676
        %v1157 = vmul.f32 %v1125, %v677
        %v1158 = vmul.f32 %v1126, %v678
        %v1159 = vmul.f32 %v1127, %v679
        %v1160 = vmul.f32 %v1128, %v680
        %v1161 = vmul.f32 %v1129, %v681
        %v1162 = vmul.f32 %v1130, 1.442695
        %v1163 = vpow.pop %v1162
        %v1164 = vmul.f32 %v1131, 1.442695
        %v1165 = vpow.pop %v1164
        %v1166 = vmul.f32 %v1132, 1.442695
        %v1167 = vpow.pop %v1166
        %v1168 = vmul.f32 %v1133, 1.442695
        %v1169 = vpow.pop %v1168
        %v1170 = vmul.f32 %v1134, 1.442695
        %v1171 = vpow.pop %v1170
        %v1172 = vmul.f32 %v1135, 1.442695
        %v1173 = vpow.pop %v1172
        %v1174 = vmul.f32 %v1136, 1.442695
        %v1175 = vpow.pop %v1174
        %v1176 = vmul.f32 %v1137, 1.442695
        %v1177 = vpow.pop %v1176
        %v1178 = vmul.f32 %v1138, 1.442695
        %v1179 = vpow.pop %v1178
        %v1180 = vmul.f32 %v1139, 1.442695
        %v1181 = vpow.pop %v1180
        %v1182 = vmul.f32 %v1140, 1.442695
        %v1183 = vpow.pop %v1182
        %v1184 = vmul.f32 %v1141, 1.442695
        %v1185 = vpow.pop %v1184
        %v1186 = vmul.f32 %v1142, 1.442695
        %v1187 = vpow.pop %v1186
        %v1188 = vmul.f32 %v1143, 1.442695
        %v1189 = vpow.pop %v1188
        %v1190 = vmul.f32 %v1144, 1.442695
        %v1191 = vpow.pop %v1190
        %v1192 = vmul.f32 %v1145, 1.442695
        %v1193 = vpow.pop %v1192
        %v1194 = vmul.f32 %v1146, 1.442695
        %v1195 = vpow.pop %v1194
        %v1196 = vmul.f32 %v1147, 1.442695
        %v1197 = vpow.pop %v1196
        %v1198 = vmul.f32 %v1148, 1.442695
        %v1199 = vpow.pop %v1198
        %v1200 = vmul.f32 %v1149, 1.442695
        %v1201 = vpow.pop %v1200
        %v1202 = vmul.f32 %v1150, 1.442695
        %v1203 = vpow.pop %v1202
        %v1204 = vmul.f32 %v1151, 1.442695
        %v1205 = vpow.pop %v1204
        %v1206 = vmul.f32 %v1152, 1.442695
        %v1207 = vpow.pop %v1206
        %v1208 = vmul.f32 %v1153, 1.442695
        %v1209 = vpow.pop %v1208
        %v1210 = vmul.f32 %v1154, 1.442695
        %v1211 = vpow.pop %v1210
        %v1212 = vmul.f32 %v1155, 1.442695
        %v1213 = vpow.pop %v1212
        %v1214 = vmul.f32 %v1156, 1.442695
        %v1215 = vpow.pop %v1214
        %v1216 = vmul.f32 %v1157, 1.442695
        %v1217 = vpow.pop %v1216
        %v1218 = vmul.f32 %v1158, 1.442695
        %v1219 = vpow.pop %v1218
        %v1220 = vmul.f32 %v1159, 1.442695
        %v1221 = vpow.pop %v1220
        %v1222 = vmul.f32 %v1160, 1.442695
        %v1223 = vpow.pop %v1222
        %v1224 = vmul.f32 %v1161, 1.442695
        %v1225 = vpow.pop %v1224
        %v1226 = vmul.f32 %v1066, %v1163
        %v1227 = vmul.f32 %v1067, %v1165
        %v1228 = vmul.f32 %v1068, %v1167
        %v1229 = vmul.f32 %v1069, %v1169
        %v1230 = vmul.f32 %v1070, %v1171
        %v1231 = vmul.f32 %v1071, %v1173
        %v1232 = vmul.f32 %v1072, %v1175
        %v1233 = vmul.f32 %v1073, %v1177
        %v1234 = vmul.f32 %v1074, %v1179
        %v1235 = vmul.f32 %v1075, %v1181
        %v1236 = vmul.f32 %v1076, %v1183
        %v1237 = vmul.f32 %v1077, %v1185
        %v1238 = vmul.f32 %v1078, %v1187
        %v1239 = vmul.f32 %v1079, %v1189
        %v1240 = vmul.f32 %v1080, %v1191
        %v1241 = vmul.f32 %v1081, %v1193
        %v1242 = vmul.f32 %v1082, %v1195
        %v1243 = vmul.f32 %v1083, %v1197
        %v1244 = vmul.f32 %v1084, %v1199
        %v1245 = vmul.f32 %v1085, %v1201
        %v1246 = vmul.f32 %v1086, %v1203
        %v1247 = vmul.f32 %v1087, %v1205
        %v1248 = vmul.f32 %v1088, %v1207
        %v1249 = vmul.f32 %v1089, %v1209
        %v1250 = vmul.f32 %v1090, %v1211
        %v1251 = vmul.f32 %v1091, %v1213
        %v1252 = vmul.f32 %v1092, %v1215
        %v1253 = vmul.f32 %v1093, %v1217
        %v1254 = vmul.f32 %v1094, %v1219
        %v1255 = vmul.f32 %v1095, %v1221
        %v1256 = vmul.f32 %v1096, %v1223
        %v1257 = vmul.f32 %v1097, %v1225
        %v1258 = vsub.f32 1.0, %v1226
        %v1259 = vsub.f32 1.0, %v1227
        %v1260 = vsub.f32 1.0, %v1228
        %v1261 = vsub.f32 1.0, %v1229
        %v1262 = vsub.f32 1.0, %v1230
        %v1263 = vsub.f32 1.0, %v1231
        %v1264 = vsub.f32 1.0, %v1232
        %v1265 = vsub.f32 1.0, %v1233
        %v1266 = vsub.f32 1.0, %v1234
        %v1267 = vsub.f32 1.0, %v1235
        %v1268 = vsub.f32 1.0, %v1236
        %v1269 = vsub.f32 1.0, %v1237
        %v1270 = vsub.f32 1.0, %v1238
        %v1271 = vsub.f32 1.0, %v1239
        %v1272 = vsub.f32 1.0, %v1240
        %v1273 = vsub.f32 1.0, %v1241
        %v1274 = vsub.f32 1.0, %v1242
        %v1275 = vsub.f32 1.0, %v1243
        %v1276 = vsub.f32 1.0, %v1244
        %v1277 = vsub.f32 1.0, %v1245
        %v1278 = vsub.f32 1.0, %v1246
        %v1279 = vsub.f32 1.0, %v1247
        %v1280 = vsub.f32 1.0, %v1248
        %v1281 = vsub.f32 1.0, %v1249
        %v1282 = vsub.f32 1.0, %v1250
        %v1283 = vsub.f32 1.0, %v1251
        %v1284 = vsub.f32 1.0, %v1252
        %v1285 = vsub.f32 1.0, %v1253
        %v1286 = vsub.f32 1.0, %v1254
        %v1287 = vsub.f32 1.0, %v1255
        %v1288 = vsub.f32 1.0, %v1256
        %v1289 = vsub.f32 1.0, %v1257
        %vm1290 = vcmp.ge.f32.partialorder %v618, 0.0
        %vm1291 = vcmp.ge.f32.partialorder %v619, 0.0
        %vm1292 = vcmp.ge.f32.partialorder %v620, 0.0
        %vm1293 = vcmp.ge.f32.partialorder %v621, 0.0
        %vm1294 = vcmp.ge.f32.partialorder %v622, 0.0
        %vm1295 = vcmp.ge.f32.partialorder %v623, 0.0
        %vm1296 = vcmp.ge.f32.partialorder %v624, 0.0
        %vm1297 = vcmp.ge.f32.partialorder %v625, 0.0
        %vm1298 = vcmp.ge.f32.partialorder %v626, 0.0
        %vm1299 = vcmp.ge.f32.partialorder %v627, 0.0
        %vm1300 = vcmp.ge.f32.partialorder %v628, 0.0
        %vm1301 = vcmp.ge.f32.partialorder %v629, 0.0
        %vm1302 = vcmp.ge.f32.partialorder %v630, 0.0
        %vm1303 = vcmp.ge.f32.partialorder %v631, 0.0
        %vm1304 = vcmp.ge.f32.partialorder %v632, 0.0
        %vm1305 = vcmp.ge.f32.partialorder %v633, 0.0
        %vm1306 = vcmp.ge.f32.partialorder %v634, 0.0
        %vm1307 = vcmp.ge.f32.partialorder %v635, 0.0
        %vm1308 = vcmp.ge.f32.partialorder %v636, 0.0
        %vm1309 = vcmp.ge.f32.partialorder %v637, 0.0
        %vm1310 = vcmp.ge.f32.partialorder %v638, 0.0
        %vm1311 = vcmp.ge.f32.partialorder %v639, 0.0
        %vm1312 = vcmp.ge.f32.partialorder %v640, 0.0
        %vm1313 = vcmp.ge.f32.partialorder %v641, 0.0
        %vm1314 = vcmp.ge.f32.partialorder %v642, 0.0
        %vm1315 = vcmp.ge.f32.partialorder %v643, 0.0
        %vm1316 = vcmp.ge.f32.partialorder %v644, 0.0
        %vm1317 = vcmp.ge.f32.partialorder %v645, 0.0
        %vm1318 = vcmp.ge.f32.partialorder %v646, 0.0
        %vm1319 = vcmp.ge.f32.partialorder %v647, 0.0
        %vm1320 = vcmp.ge.f32.partialorder %v648, 0.0
        %vm1321 = vcmp.ge.f32.partialorder %v649, 0.0
        %v1322 = vsub.f32 0.0, %v1258
        %v1323 = vsub.f32 0.0, %v1259
        %v1324 = vsub.f32 0.0, %v1260
        %v1325 = vsub.f32 0.0, %v1261
        %v1326 = vsub.f32 0.0, %v1262
        %v1327 = vsub.f32 0.0, %v1263
        %v1328 = vsub.f32 0.0, %v1264
        %v1329 = vsub.f32 0.0, %v1265
        %v1330 = vsub.f32 0.0, %v1266
        %v1331 = vsub.f32 0.0, %v1267
        %v1332 = vsub.f32 0.0, %v1268
        %v1333 = vsub.f32 0.0, %v1269
        %v1334 = vsub.f32 0.0, %v1270
        %v1335 = vsub.f32 0.0, %v1271
        %v1336 = vsub.f32 0.0, %v1272
        %v1337 = vsub.f32 0.0, %v1273
        %v1338 = vsub.f32 0.0, %v1274
        %v1339 = vsub.f32 0.0, %v1275
        %v1340 = vsub.f32 0.0, %v1276
        %v1341 = vsub.f32 0.0, %v1277
        %v1342 = vsub.f32 0.0, %v1278
        %v1343 = vsub.f32 0.0, %v1279
        %v1344 = vsub.f32 0.0, %v1280
        %v1345 = vsub.f32 0.0, %v1281
        %v1346 = vsub.f32 0.0, %v1282
        %v1347 = vsub.f32 0.0, %v1283
        %v1348 = vsub.f32 0.0, %v1284
        %v1349 = vsub.f32 0.0, %v1285
        %v1350 = vsub.f32 0.0, %v1286
        %v1351 = vsub.f32 0.0, %v1287
        %v1352 = vsub.f32 0.0, %v1288
        %v1353 = vsub.f32 0.0, %v1289
        %v1354 = vsel %vm1290, %v1258, %v1322
        %v1355 = vsel %vm1291, %v1259, %v1323
        %v1356 = vsel %vm1292, %v1260, %v1324
        %v1357 = vsel %vm1293, %v1261, %v1325
        %v1358 = vsel %vm1294, %v1262, %v1326
        %v1359 = vsel %vm1295, %v1263, %v1327
        %v1360 = vsel %vm1296, %v1264, %v1328
        %v1361 = vsel %vm1297, %v1265, %v1329
        %v1362 = vsel %vm1298, %v1266, %v1330
        %v1363 = vsel %vm1299, %v1267, %v1331
        %v1364 = vsel %vm1300, %v1268, %v1332
        %v1365 = vsel %vm1301, %v1269, %v1333
        %v1366 = vsel %vm1302, %v1270, %v1334
        %v1367 = vsel %vm1303, %v1271, %v1335
        %v1368 = vsel %vm1304, %v1272, %v1336
        %v1369 = vsel %vm1305, %v1273, %v1337
        %v1370 = vsel %vm1306, %v1274, %v1338
        %v1371 = vsel %vm1307, %v1275, %v1339
        %v1372 = vsel %vm1308, %v1276, %v1340
        %v1373 = vsel %vm1309, %v1277, %v1341
        %v1374 = vsel %vm1310, %v1278, %v1342
        %v1375 = vsel %vm1311, %v1279, %v1343
        %v1376 = vsel %vm1312, %v1280, %v1344
        %v1377 = vsel %vm1313, %v1281, %v1345
        %v1378 = vsel %vm1314, %v1282, %v1346
        %v1379 = vsel %vm1315, %v1283, %v1347
        %v1380 = vsel %vm1316, %v1284, %v1348
        %v1381 = vsel %vm1317, %v1285, %v1349
        %v1382 = vsel %vm1318, %v1286, %v1350
        %v1383 = vsel %vm1319, %v1287, %v1351
        %v1384 = vsel %vm1320, %v1288, %v1352
        %v1385 = vsel %vm1321, %v1289, %v1353
        %v1386 = vadd.f32 %v1354, 1.0
        %v1387 = vadd.f32 %v1355, 1.0
        %v1388 = vadd.f32 %v1356, 1.0
        %v1389 = vadd.f32 %v1357, 1.0
        %v1390 = vadd.f32 %v1358, 1.0
        %v1391 = vadd.f32 %v1359, 1.0
        %v1392 = vadd.f32 %v1360, 1.0
        %v1393 = vadd.f32 %v1361, 1.0
        %v1394 = vadd.f32 %v1362, 1.0
        %v1395 = vadd.f32 %v1363, 1.0
        %v1396 = vadd.f32 %v1364, 1.0
        %v1397 = vadd.f32 %v1365, 1.0
        %v1398 = vadd.f32 %v1366, 1.0
        %v1399 = vadd.f32 %v1367, 1.0
        %v1400 = vadd.f32 %v1368, 1.0
        %v1401 = vadd.f32 %v1369, 1.0
        %v1402 = vadd.f32 %v1370, 1.0
        %v1403 = vadd.f32 %v1371, 1.0
        %v1404 = vadd.f32 %v1372, 1.0
        %v1405 = vadd.f32 %v1373, 1.0
        %v1406 = vadd.f32 %v1374, 1.0
        %v1407 = vadd.f32 %v1375, 1.0
        %v1408 = vadd.f32 %v1376, 1.0
        %v1409 = vadd.f32 %v1377, 1.0
        %v1410 = vadd.f32 %v1378, 1.0
        %v1411 = vadd.f32 %v1379, 1.0
        %v1412 = vadd.f32 %v1380, 1.0
        %v1413 = vadd.f32 %v1381, 1.0
        %v1414 = vadd.f32 %v1382, 1.0
        %v1415 = vadd.f32 %v1383, 1.0
        %v1416 = vadd.f32 %v1384, 1.0
        %v1417 = vadd.f32 %v1385, 1.0
        %v1418 = vmul.f32 %v586, %v1386
        %v1419 = vmul.f32 %v587, %v1387
        %v1420 = vmul.f32 %v588, %v1388
        %v1421 = vmul.f32 %v589, %v1389
        %v1422 = vmul.f32 %v590, %v1390
        %v1423 = vmul.f32 %v591, %v1391
        %v1424 = vmul.f32 %v592, %v1392
        %v1425 = vmul.f32 %v593, %v1393
        %v1426 = vmul.f32 %v594, %v1394
        %v1427 = vmul.f32 %v595, %v1395
        %v1428 = vmul.f32 %v596, %v1396
        %v1429 = vmul.f32 %v597, %v1397
        %v1430 = vmul.f32 %v598, %v1398
        %v1431 = vmul.f32 %v599, %v1399
        %v1432 = vmul.f32 %v600, %v1400
        %v1433 = vmul.f32 %v601, %v1401
        %v1434 = vmul.f32 %v602, %v1402
        %v1435 = vmul.f32 %v603, %v1403
        %v1436 = vmul.f32 %v604, %v1404
        %v1437 = vmul.f32 %v605, %v1405
        %v1438 = vmul.f32 %v606, %v1406
        %v1439 = vmul.f32 %v607, %v1407
        %v1440 = vmul.f32 %v608, %v1408
        %v1441 = vmul.f32 %v609, %v1409
        %v1442 = vmul.f32 %v610, %v1410
        %v1443 = vmul.f32 %v611, %v1411
        %v1444 = vmul.f32 %v612, %v1412
        %v1445 = vmul.f32 %v613, %v1413
        %v1446 = vmul.f32 %v614, %v1414
        %v1447 = vmul.f32 %v615, %v1415
        %v1448 = vmul.f32 %v616, %v1416
        %v1449 = vmul.f32 %v617, %v1417
        %1450 = vst [vmem:[#allocation2] sm:$0xff] 0
        %1451 = vst [vmem:[#allocation2 + $0x8] sm:$0x1] 0
        %s1452 = scalar_lea.vmem [#allocation2], 272
        %1453 = vst [vmem:[%s1452] sm:$0xff] 0
        %1454 = vst [vmem:[%s1452 + $0x8] sm:$0x1] 0
        %s1455 = scalar_lea.vmem [#allocation2], 16
        %vm1456 = vcmask 1040384
        %vm1457 = vsmask.f32 256
        %vm1458 = vmand %vm1456, %vm1457
        %v1459 = vld [vmem:[%s1455] sm:$0x1]
        %v1460 = vsel %vm1458, 0, %v1459
        %1461 = vst [vmem:[%s1455] sm:$0x1] %v1460
        %v1462 = vld [vmem:[%s1455 + $0x10] sm:$0x1]
        %v1463 = vsel %vm1458, 0, %v1462
        %1464 = vst [vmem:[%s1455 + $0x10] sm:$0x1] %v1463
        %v1465 = vld [vmem:[%s1455 + $0x20] sm:$0x1]
        %v1466 = vsel %vm1458, 0, %v1465
        %1467 = vst [vmem:[%s1455 + $0x20] sm:$0x1] %v1466
        %v1468 = vld [vmem:[%s1455 + $0x30] sm:$0x1]
        %v1469 = vsel %vm1458, 0, %v1468
        %1470 = vst [vmem:[%s1455 + $0x30] sm:$0x1] %v1469
        %v1471 = vld [vmem:[%s1455 + $0x40] sm:$0x1]
        %v1472 = vsel %vm1458, 0, %v1471
        %1473 = vst [vmem:[%s1455 + $0x40] sm:$0x1] %v1472
        %v1474 = vld [vmem:[%s1455 + $0x50] sm:$0x1]
        %v1475 = vsel %vm1458, 0, %v1474
        %1476 = vst [vmem:[%s1455 + $0x50] sm:$0x1] %v1475
        %v1477 = vld [vmem:[%s1455 + $0x60] sm:$0x1]
        %v1478 = vsel %vm1458, 0, %v1477
        %1479 = vst [vmem:[%s1455 + $0x60] sm:$0x1] %v1478
        %v1480 = vld [vmem:[%s1455 + $0x70] sm:$0x1]
        %v1481 = vsel %vm1458, 0, %v1480
        %1482 = vst [vmem:[%s1455 + $0x70] sm:$0x1] %v1481
        %v1483 = vld [vmem:[%s1455 + $0x80] sm:$0x1]
        %v1484 = vsel %vm1458, 0, %v1483
        %1485 = vst [vmem:[%s1455 + $0x80] sm:$0x1] %v1484
        %v1486 = vld [vmem:[%s1455 + $0x90] sm:$0x1]
        %v1487 = vsel %vm1458, 0, %v1486
        %1488 = vst [vmem:[%s1455 + $0x90] sm:$0x1] %v1487
        %v1489 = vld [vmem:[%s1455 + $0xa0] sm:$0x1]
        %v1490 = vsel %vm1458, 0, %v1489
        %1491 = vst [vmem:[%s1455 + $0xa0] sm:$0x1] %v1490
        %v1492 = vld [vmem:[%s1455 + $0xb0] sm:$0x1]
        %v1493 = vsel %vm1458, 0, %v1492
        %1494 = vst [vmem:[%s1455 + $0xb0] sm:$0x1] %v1493
        %v1495 = vld [vmem:[%s1455 + $0xc0] sm:$0x1]
        %v1496 = vsel %vm1458, 0, %v1495
        %1497 = vst [vmem:[%s1455 + $0xc0] sm:$0x1] %v1496
        %v1498 = vld [vmem:[%s1455 + $0xd0] sm:$0x1]
        %v1499 = vsel %vm1458, 0, %v1498
        %1500 = vst [vmem:[%s1455 + $0xd0] sm:$0x1] %v1499
        %v1501 = vld [vmem:[%s1455 + $0xe0] sm:$0x1]
        %v1502 = vsel %vm1458, 0, %v1501
        %1503 = vst [vmem:[%s1455 + $0xe0] sm:$0x1] %v1502
        %v1504 = vld [vmem:[%s1455 + $0xf0] sm:$0x1]
        %v1505 = vsel %vm1458, 0, %v1504
        %1506 = vst [vmem:[%s1455 + $0xf0] sm:$0x1] %v1505
        %vm1507 = vsmask.f32 7938
        %vm1508 = vmand %vm1456, %vm1507
        %v1509 = vld [vmem:[%s1455 + $0x8] sm:$0x1]
        %v1510 = vsel %vm1508, 0, %v1509
        %1511 = vst [vmem:[%s1455 + $0x8] sm:$0x1] %v1510
        %v1512 = vld [vmem:[%s1455 + $0x18] sm:$0x1]
        %v1513 = vsel %vm1508, 0, %v1512
        %1514 = vst [vmem:[%s1455 + $0x18] sm:$0x1] %v1513
        %v1515 = vld [vmem:[%s1455 + $0x28] sm:$0x1]
        %v1516 = vsel %vm1508, 0, %v1515
        %1517 = vst [vmem:[%s1455 + $0x28] sm:$0x1] %v1516
        %v1518 = vld [vmem:[%s1455 + $0x38] sm:$0x1]
        %v1519 = vsel %vm1508, 0, %v1518
        %1520 = vst [vmem:[%s1455 + $0x38] sm:$0x1] %v1519
        %v1521 = vld [vmem:[%s1455 + $0x48] sm:$0x1]
        %v1522 = vsel %vm1508, 0, %v1521
        %1523 = vst [vmem:[%s1455 + $0x48] sm:$0x1] %v1522
        %v1524 = vld [vmem:[%s1455 + $0x58] sm:$0x1]
        %v1525 = vsel %vm1508, 0, %v1524
        %1526 = vst [vmem:[%s1455 + $0x58] sm:$0x1] %v1525
        %v1527 = vld [vmem:[%s1455 + $0x68] sm:$0x1]
        %v1528 = vsel %vm1508, 0, %v1527
        %1529 = vst [vmem:[%s1455 + $0x68] sm:$0x1] %v1528
        %v1530 = vld [vmem:[%s1455 + $0x78] sm:$0x1]
        %v1531 = vsel %vm1508, 0, %v1530
        %1532 = vst [vmem:[%s1455 + $0x78] sm:$0x1] %v1531
        %v1533 = vld [vmem:[%s1455 + $0x88] sm:$0x1]
        %v1534 = vsel %vm1508, 0, %v1533
        %1535 = vst [vmem:[%s1455 + $0x88] sm:$0x1] %v1534
        %v1536 = vld [vmem:[%s1455 + $0x98] sm:$0x1]
        %v1537 = vsel %vm1508, 0, %v1536
        %1538 = vst [vmem:[%s1455 + $0x98] sm:$0x1] %v1537
        %v1539 = vld [vmem:[%s1455 + $0xa8] sm:$0x1]
        %v1540 = vsel %vm1508, 0, %v1539
        %1541 = vst [vmem:[%s1455 + $0xa8] sm:$0x1] %v1540
        %v1542 = vld [vmem:[%s1455 + $0xb8] sm:$0x1]
        %v1543 = vsel %vm1508, 0, %v1542
        %1544 = vst [vmem:[%s1455 + $0xb8] sm:$0x1] %v1543
        %v1545 = vld [vmem:[%s1455 + $0xc8] sm:$0x1]
        %v1546 = vsel %vm1508, 0, %v1545
        %1547 = vst [vmem:[%s1455 + $0xc8] sm:$0x1] %v1546
        %v1548 = vld [vmem:[%s1455 + $0xd8] sm:$0x1]
        %v1549 = vsel %vm1508, 0, %v1548
        %1550 = vst [vmem:[%s1455 + $0xd8] sm:$0x1] %v1549
        %v1551 = vld [vmem:[%s1455 + $0xe8] sm:$0x1]
        %v1552 = vsel %vm1508, 0, %v1551
        %1553 = vst [vmem:[%s1455 + $0xe8] sm:$0x1] %v1552
        %v1554 = vld [vmem:[%s1455 + $0xf8] sm:$0x1]
        %v1555 = vsel %vm1508, 0, %v1554
        %1556 = vst [vmem:[%s1455 + $0xf8] sm:$0x1] %v1555
        %v1557 = vpack.c.bf16 %v1419, %v1418
        %v1558 = vpack.c.bf16 %v1421, %v1420
        %v1559 = vpack.c.bf16 %v1423, %v1422
        %v1560 = vpack.c.bf16 %v1425, %v1424
        %v1561 = vpack.c.bf16 %v1427, %v1426
        %v1562 = vpack.c.bf16 %v1429, %v1428
        %v1563 = vpack.c.bf16 %v1431, %v1430
        %v1564 = vpack.c.bf16 %v1433, %v1432
        %v1565 = vpack.c.bf16 %v1435, %v1434
        %v1566 = vpack.c.bf16 %v1437, %v1436
        %v1567 = vpack.c.bf16 %v1439, %v1438
        %v1568 = vpack.c.bf16 %v1441, %v1440
        %v1569 = vpack.c.bf16 %v1443, %v1442
        %v1570 = vpack.c.bf16 %v1445, %v1444
        %v1571 = vpack.c.bf16 %v1447, %v1446
        %v1572 = vpack.c.bf16 %v1449, %v1448
        %v1574 = vshrl.u32 %v1557, 16
        %v1576 = vrot.slane %v1574, 7
        %v1577 = vshll.u32 %v1557, 16
        %v1579 = vor.u32 %v1576, %v1577
        %v1581 = vshrl.u32 %v1558, 16
        %v1583 = vrot.slane %v1581, 7
        %v1584 = vshll.u32 %v1558, 16
        %v1586 = vor.u32 %v1583, %v1584
        %v1588 = vshrl.u32 %v1559, 16
        %v1590 = vrot.slane %v1588, 7
        %v1591 = vshll.u32 %v1559, 16
        %v1593 = vor.u32 %v1590, %v1591
        %v1595 = vshrl.u32 %v1560, 16
        %v1597 = vrot.slane %v1595, 7
        %v1598 = vshll.u32 %v1560, 16
        %v1600 = vor.u32 %v1597, %v1598
        %v1602 = vshrl.u32 %v1561, 16
        %v1604 = vrot.slane %v1602, 7
        %v1605 = vshll.u32 %v1561, 16
        %v1607 = vor.u32 %v1604, %v1605
        %v1609 = vshrl.u32 %v1562, 16
        %v1611 = vrot.slane %v1609, 7
        %v1612 = vshll.u32 %v1562, 16
        %v1614 = vor.u32 %v1611, %v1612
        %v1616 = vshrl.u32 %v1563, 16
        %v1618 = vrot.slane %v1616, 7
        %v1619 = vshll.u32 %v1563, 16
        %v1621 = vor.u32 %v1618, %v1619
        %v1623 = vshrl.u32 %v1564, 16
        %v1625 = vrot.slane %v1623, 7
        %v1626 = vshll.u32 %v1564, 16
        %v1628 = vor.u32 %v1625, %v1626
        %v1630 = vshrl.u32 %v1565, 16
        %v1632 = vrot.slane %v1630, 7
        %v1633 = vshll.u32 %v1565, 16
        %v1635 = vor.u32 %v1632, %v1633
        %v1637 = vshrl.u32 %v1566, 16
        %v1639 = vrot.slane %v1637, 7
        %v1640 = vshll.u32 %v1566, 16
        %v1642 = vor.u32 %v1639, %v1640
        %v1644 = vshrl.u32 %v1567, 16
        %v1646 = vrot.slane %v1644, 7
        %v1647 = vshll.u32 %v1567, 16
        %v1649 = vor.u32 %v1646, %v1647
        %v1651 = vshrl.u32 %v1568, 16
        %v1653 = vrot.slane %v1651, 7
        %v1654 = vshll.u32 %v1568, 16
        %v1656 = vor.u32 %v1653, %v1654
        %v1658 = vshrl.u32 %v1569, 16
        %v1660 = vrot.slane %v1658, 7
        %v1661 = vshll.u32 %v1569, 16
        %v1663 = vor.u32 %v1660, %v1661
        %v1665 = vshrl.u32 %v1570, 16
        %v1667 = vrot.slane %v1665, 7
        %v1668 = vshll.u32 %v1570, 16
        %v1670 = vor.u32 %v1667, %v1668
        %v1672 = vshrl.u32 %v1571, 16
        %v1674 = vrot.slane %v1672, 7
        %v1675 = vshll.u32 %v1571, 16
        %v1677 = vor.u32 %v1674, %v1675
        %v1679 = vshrl.u32 %v1572, 16
        %v1681 = vrot.slane %v1679, 7
        %v1682 = vshll.u32 %v1572, 16
        %v1684 = vor.u32 %v1681, %v1682
        %vm1717 = vcmask 1047552
        %vm1718 = vmand %vm1717, %vm1507
        %v1719 = vld [vmem:[%s1455] sm:$0xff]
        %v1720 = vsel %vm1718, %v1579, %v1719
        %1721 = vst [vmem:[%s1455] sm:$0xff] %v1720
        %v1722 = vld [vmem:[%s1455 + $0x8] sm:$0x1]
        %v1723 = vsel %vm1458, %v1576, %v1722
        %1724 = vst [vmem:[%s1455 + $0x8] sm:$0x1] %v1723
        %v1725 = vld [vmem:[%s1455 + $0x10] sm:$0xff]
        %v1726 = vsel %vm1718, %v1586, %v1725
        %1727 = vst [vmem:[%s1455 + $0x10] sm:$0xff] %v1726
        %v1728 = vld [vmem:[%s1455 + $0x18] sm:$0x1]
        %v1729 = vsel %vm1458, %v1583, %v1728
        %1730 = vst [vmem:[%s1455 + $0x18] sm:$0x1] %v1729
        %v1731 = vld [vmem:[%s1455 + $0x20] sm:$0xff]
        %v1732 = vsel %vm1718, %v1593, %v1731
        %1733 = vst [vmem:[%s1455 + $0x20] sm:$0xff] %v1732
        %v1734 = vld [vmem:[%s1455 + $0x28] sm:$0x1]
        %v1735 = vsel %vm1458, %v1590, %v1734
        %1736 = vst [vmem:[%s1455 + $0x28] sm:$0x1] %v1735
        %v1737 = vld [vmem:[%s1455 + $0x30] sm:$0xff]
        %v1738 = vsel %vm1718, %v1600, %v1737
        %1739 = vst [vmem:[%s1455 + $0x30] sm:$0xff] %v1738
        %v1740 = vld [vmem:[%s1455 + $0x38] sm:$0x1]
        %v1741 = vsel %vm1458, %v1597, %v1740
        %1742 = vst [vmem:[%s1455 + $0x38] sm:$0x1] %v1741
        %v1743 = vld [vmem:[%s1455 + $0x40] sm:$0xff]
        %v1744 = vsel %vm1718, %v1607, %v1743
        %1745 = vst [vmem:[%s1455 + $0x40] sm:$0xff] %v1744
        %v1746 = vld [vmem:[%s1455 + $0x48] sm:$0x1]
        %v1747 = vsel %vm1458, %v1604, %v1746
        %1748 = vst [vmem:[%s1455 + $0x48] sm:$0x1] %v1747
        %v1749 = vld [vmem:[%s1455 + $0x50] sm:$0xff]
        %v1750 = vsel %vm1718, %v1614, %v1749
        %1751 = vst [vmem:[%s1455 + $0x50] sm:$0xff] %v1750
        %v1752 = vld [vmem:[%s1455 + $0x58] sm:$0x1]
        %v1753 = vsel %vm1458, %v1611, %v1752
        %1754 = vst [vmem:[%s1455 + $0x58] sm:$0x1] %v1753
        %v1755 = vld [vmem:[%s1455 + $0x60] sm:$0xff]
        %v1756 = vsel %vm1718, %v1621, %v1755
        %1757 = vst [vmem:[%s1455 + $0x60] sm:$0xff] %v1756
        %v1758 = vld [vmem:[%s1455 + $0x68] sm:$0x1]
        %v1759 = vsel %vm1458, %v1618, %v1758
        %1760 = vst [vmem:[%s1455 + $0x68] sm:$0x1] %v1759
        %v1761 = vld [vmem:[%s1455 + $0x70] sm:$0xff]
        %v1762 = vsel %vm1718, %v1628, %v1761
        %1763 = vst [vmem:[%s1455 + $0x70] sm:$0xff] %v1762
        %v1764 = vld [vmem:[%s1455 + $0x78] sm:$0x1]
        %v1765 = vsel %vm1458, %v1625, %v1764
        %1766 = vst [vmem:[%s1455 + $0x78] sm:$0x1] %v1765
        %v1767 = vld [vmem:[%s1455 + $0x80] sm:$0xff]
        %v1768 = vsel %vm1718, %v1635, %v1767
        %1769 = vst [vmem:[%s1455 + $0x80] sm:$0xff] %v1768
        %v1770 = vld [vmem:[%s1455 + $0x88] sm:$0x1]
        %v1771 = vsel %vm1458, %v1632, %v1770
        %1772 = vst [vmem:[%s1455 + $0x88] sm:$0x1] %v1771
        %v1773 = vld [vmem:[%s1455 + $0x90] sm:$0xff]
        %v1774 = vsel %vm1718, %v1642, %v1773
        %1775 = vst [vmem:[%s1455 + $0x90] sm:$0xff] %v1774
        %v1776 = vld [vmem:[%s1455 + $0x98] sm:$0x1]
        %v1777 = vsel %vm1458, %v1639, %v1776
        %1778 = vst [vmem:[%s1455 + $0x98] sm:$0x1] %v1777
        %v1779 = vld [vmem:[%s1455 + $0xa0] sm:$0xff]
        %v1780 = vsel %vm1718, %v1649, %v1779
        %1781 = vst [vmem:[%s1455 + $0xa0] sm:$0xff] %v1780
        %v1782 = vld [vmem:[%s1455 + $0xa8] sm:$0x1]
        %v1783 = vsel %vm1458, %v1646, %v1782
        %1784 = vst [vmem:[%s1455 + $0xa8] sm:$0x1] %v1783
        %v1785 = vld [vmem:[%s1455 + $0xb0] sm:$0xff]
        %v1786 = vsel %vm1718, %v1656, %v1785
        %1787 = vst [vmem:[%s1455 + $0xb0] sm:$0xff] %v1786
        %v1788 = vld [vmem:[%s1455 + $0xb8] sm:$0x1]
        %v1789 = vsel %vm1458, %v1653, %v1788
        %1790 = vst [vmem:[%s1455 + $0xb8] sm:$0x1] %v1789
        %v1791 = vld [vmem:[%s1455 + $0xc0] sm:$0xff]
        %v1792 = vsel %vm1718, %v1663, %v1791
        %1793 = vst [vmem:[%s1455 + $0xc0] sm:$0xff] %v1792
        %v1794 = vld [vmem:[%s1455 + $0xc8] sm:$0x1]
        %v1795 = vsel %vm1458, %v1660, %v1794
        %1796 = vst [vmem:[%s1455 + $0xc8] sm:$0x1] %v1795
        %v1797 = vld [vmem:[%s1455 + $0xd0] sm:$0xff]
        %v1798 = vsel %vm1718, %v1670, %v1797
        %1799 = vst [vmem:[%s1455 + $0xd0] sm:$0xff] %v1798
        %v1800 = vld [vmem:[%s1455 + $0xd8] sm:$0x1]
        %v1801 = vsel %vm1458, %v1667, %v1800
        %1802 = vst [vmem:[%s1455 + $0xd8] sm:$0x1] %v1801
        %v1803 = vld [vmem:[%s1455 + $0xe0] sm:$0xff]
        %v1804 = vsel %vm1718, %v1677, %v1803
        %1805 = vst [vmem:[%s1455 + $0xe0] sm:$0xff] %v1804
        %v1806 = vld [vmem:[%s1455 + $0xe8] sm:$0x1]
        %v1807 = vsel %vm1458, %v1674, %v1806
        %1808 = vst [vmem:[%s1455 + $0xe8] sm:$0x1] %v1807
        %v1809 = vld [vmem:[%s1455 + $0xf0] sm:$0xff]
        %v1810 = vsel %vm1718, %v1684, %v1809
        %1811 = vst [vmem:[%s1455 + $0xf0] sm:$0xff] %v1810
        %v1812 = vld [vmem:[%s1455 + $0xf8] sm:$0x1]
        %v1813 = vsel %vm1458, %v1681, %v1812
        %1814 = vst [vmem:[%s1455 + $0xf8] sm:$0x1] %v1813
        %v1815 = vld [vmem:[#allocation2] sm:$0xff]
        %v1816 = vld [vmem:[#allocation2 + $0x10] sm:$0xff]
        %v1817 = vld [vmem:[#allocation2 + $0x20] sm:$0xff]
        %v1818 = vld [vmem:[#allocation2 + $0x30] sm:$0xff]
        %v1819 = vld [vmem:[#allocation2 + $0x40] sm:$0xff]
        %v1820 = vld [vmem:[#allocation2 + $0x50] sm:$0xff]
        %v1821 = vld [vmem:[#allocation2 + $0x60] sm:$0xff]
        %v1822 = vld [vmem:[#allocation2 + $0x70] sm:$0xff]
        %v1823 = vld [vmem:[#allocation2 + $0x80] sm:$0xff]
        %v1824 = vld [vmem:[#allocation2 + $0x90] sm:$0xff]
        %v1825 = vld [vmem:[#allocation2 + $0xa0] sm:$0xff]
        %v1826 = vld [vmem:[#allocation2 + $0xb0] sm:$0xff]
        %v1827 = vld [vmem:[#allocation2 + $0xc0] sm:$0xff]
        %v1828 = vld [vmem:[#allocation2 + $0xd0] sm:$0xff]
        %v1829 = vld [vmem:[#allocation2 + $0xe0] sm:$0xff]
        %v1830 = vld [vmem:[#allocation2 + $0xf0] sm:$0xff]
        %v1831 = vld [vmem:[#allocation3] sm:$0xf]
        %v1832 = vld [vmem:[#allocation3 + $0x4] sm:$0xf]
        %v1833 = vld [vmem:[#allocation3 + $0x8] sm:$0xf]
        %v1834 = vld [vmem:[#allocation3 + $0xc] sm:$0xf]
        %v1835 = vld [vmem:[#allocation3 + $0x10] sm:$0xf]
        %v1836 = vld [vmem:[#allocation3 + $0x14] sm:$0xf]
        %v1837 = vld [vmem:[#allocation3 + $0x18] sm:$0xf]
        %v1838 = vld [vmem:[#allocation3 + $0x1c] sm:$0xf]
        %v1839 = vld [vmem:[#allocation3 + $0x20] sm:$0xf]
        %v1840 = vld [vmem:[#allocation3 + $0x24] sm:$0xf]
        %v1841 = vld [vmem:[#allocation3 + $0x28] sm:$0xf]
        %v1842 = vld [vmem:[#allocation3 + $0x2c] sm:$0xf]
        %v1843 = vld [vmem:[#allocation3 + $0x30] sm:$0xf]
        %v1844 = vld [vmem:[#allocation3 + $0x34] sm:$0xf]
        %v1845 = vld [vmem:[#allocation3 + $0x38] sm:$0xf]
        %v1846 = vld [vmem:[#allocation3 + $0x3c] sm:$0xf]
        %v1847 = vld [vmem:[#allocation2 + $0x8] sm:$0x1]
        %v1848 = vld [vmem:[#allocation2 + $0x18] sm:$0x1]
        %v1849 = vld [vmem:[#allocation2 + $0x28] sm:$0x1]
        %v1850 = vld [vmem:[#allocation2 + $0x38] sm:$0x1]
        %v1851 = vld [vmem:[#allocation2 + $0x48] sm:$0x1]
        %v1852 = vld [vmem:[#allocation2 + $0x58] sm:$0x1]
        %v1853 = vld [vmem:[#allocation2 + $0x68] sm:$0x1]
        %v1854 = vld [vmem:[#allocation2 + $0x78] sm:$0x1]
        %v1855 = vld [vmem:[#allocation2 + $0x88] sm:$0x1]
        %v1856 = vld [vmem:[#allocation2 + $0x98] sm:$0x1]
        %v1857 = vld [vmem:[#allocation2 + $0xa8] sm:$0x1]
        %v1858 = vld [vmem:[#allocation2 + $0xb8] sm:$0x1]
        %v1859 = vld [vmem:[#allocation2 + $0xc8] sm:$0x1]
        %v1860 = vld [vmem:[#allocation2 + $0xd8] sm:$0x1]
        %v1861 = vld [vmem:[#allocation2 + $0xe8] sm:$0x1]
        %v1862 = vld [vmem:[#allocation2 + $0xf8] sm:$0x1]
        %vm1863 = vsmask.f32 7424
        %v1865 = vshrl.u32 %v1815, 16
        %v1867 = vshll.u32 %v1815, 16
        %v1869 = vrot.slane %v1867, 1
        %v1870 = vor.u32 %v1865, %v1869
        %v1872 = vshll.u32 %v1847, 16
        %v1874 = vrot.slane %v1872, 1
        %v1875 = vsel %vm1863, %v1870, %v1874
        %v1877 = vshrl.u32 %v1816, 16
        %v1879 = vshll.u32 %v1816, 16
        %v1881 = vrot.slane %v1879, 1
        %v1882 = vor.u32 %v1877, %v1881
        %v1884 = vshll.u32 %v1848, 16
        %v1886 = vrot.slane %v1884, 1
        %v1887 = vsel %vm1863, %v1882, %v1886
        %v1889 = vshrl.u32 %v1817, 16
        %v1891 = vshll.u32 %v1817, 16
        %v1893 = vrot.slane %v1891, 1
        %v1894 = vor.u32 %v1889, %v1893
        %v1896 = vshll.u32 %v1849, 16
        %v1898 = vrot.slane %v1896, 1
        %v1899 = vsel %vm1863, %v1894, %v1898
        %v1901 = vshrl.u32 %v1818, 16
        %v1903 = vshll.u32 %v1818, 16
        %v1905 = vrot.slane %v1903, 1
        %v1906 = vor.u32 %v1901, %v1905
        %v1908 = vshll.u32 %v1850, 16
        %v1910 = vrot.slane %v1908, 1
        %v1911 = vsel %vm1863, %v1906, %v1910
        %v1913 = vshrl.u32 %v1819, 16
        %v1915 = vshll.u32 %v1819, 16
        %v1917 = vrot.slane %v1915, 1
        %v1918 = vor.u32 %v1913, %v1917
        %v1920 = vshll.u32 %v1851, 16
        %v1922 = vrot.slane %v1920, 1
        %v1923 = vsel %vm1863, %v1918, %v1922
        %v1925 = vshrl.u32 %v1820, 16
        %v1927 = vshll.u32 %v1820, 16
        %v1929 = vrot.slane %v1927, 1
        %v1930 = vor.u32 %v1925, %v1929
        %v1932 = vshll.u32 %v1852, 16
        %v1934 = vrot.slane %v1932, 1
        %v1935 = vsel %vm1863, %v1930, %v1934
        %v1937 = vshrl.u32 %v1821, 16
        %v1939 = vshll.u32 %v1821, 16
        %v1941 = vrot.slane %v1939, 1
        %v1942 = vor.u32 %v1937, %v1941
        %v1944 = vshll.u32 %v1853, 16
        %v1946 = vrot.slane %v1944, 1
        %v1947 = vsel %vm1863, %v1942, %v1946
        %v1949 = vshrl.u32 %v1822, 16
        %v1951 = vshll.u32 %v1822, 16
        %v1953 = vrot.slane %v1951, 1
        %v1954 = vor.u32 %v1949, %v1953
        %v1956 = vshll.u32 %v1854, 16
        %v1958 = vrot.slane %v1956, 1
        %v1959 = vsel %vm1863, %v1954, %v1958
        %v1961 = vshrl.u32 %v1823, 16
        %v1963 = vshll.u32 %v1823, 16
        %v1965 = vrot.slane %v1963, 1
        %v1966 = vor.u32 %v1961, %v1965
        %v1968 = vshll.u32 %v1855, 16
        %v1970 = vrot.slane %v1968, 1
        %v1971 = vsel %vm1863, %v1966, %v1970
        %v1973 = vshrl.u32 %v1824, 16
        %v1975 = vshll.u32 %v1824, 16
        %v1977 = vrot.slane %v1975, 1
        %v1978 = vor.u32 %v1973, %v1977
        %v1980 = vshll.u32 %v1856, 16
        %v1982 = vrot.slane %v1980, 1
        %v1983 = vsel %vm1863, %v1978, %v1982
        %v1985 = vshrl.u32 %v1825, 16
        %v1987 = vshll.u32 %v1825, 16
        %v1989 = vrot.slane %v1987, 1
        %v1990 = vor.u32 %v1985, %v1989
        %v1992 = vshll.u32 %v1857, 16
        %v1994 = vrot.slane %v1992, 1
        %v1995 = vsel %vm1863, %v1990, %v1994
        %v1997 = vshrl.u32 %v1826, 16
        %v1999 = vshll.u32 %v1826, 16
        %v2001 = vrot.slane %v1999, 1
        %v2002 = vor.u32 %v1997, %v2001
        %v2004 = vshll.u32 %v1858, 16
        %v2006 = vrot.slane %v2004, 1
        %v2007 = vsel %vm1863, %v2002, %v2006
        %v2009 = vshrl.u32 %v1827, 16
        %v2011 = vshll.u32 %v1827, 16
        %v2013 = vrot.slane %v2011, 1
        %v2014 = vor.u32 %v2009, %v2013
        %v2016 = vshll.u32 %v1859, 16
        %v2018 = vrot.slane %v2016, 1
        %v2019 = vsel %vm1863, %v2014, %v2018
        %v2021 = vshrl.u32 %v1828, 16
        %v2023 = vshll.u32 %v1828, 16
        %v2025 = vrot.slane %v2023, 1
        %v2026 = vor.u32 %v2021, %v2025
        %v2028 = vshll.u32 %v1860, 16
        %v2030 = vrot.slane %v2028, 1
        %v2031 = vsel %vm1863, %v2026, %v2030
        %v2033 = vshrl.u32 %v1829, 16
        %v2035 = vshll.u32 %v1829, 16
        %v2037 = vrot.slane %v2035, 1
        %v2038 = vor.u32 %v2033, %v2037
        %v2040 = vshll.u32 %v1861, 16
        %v2042 = vrot.slane %v2040, 1
        %v2043 = vsel %vm1863, %v2038, %v2042
        %v2045 = vshrl.u32 %v1830, 16
        %v2047 = vshll.u32 %v1830, 16
        %v2049 = vrot.slane %v2047, 1
        %v2050 = vor.u32 %v2045, %v2049
        %v2052 = vshll.u32 %v1862, 16
        %v2054 = vrot.slane %v2052, 1
        %v2055 = vsel %vm1863, %v2050, %v2054
        %s2072 = scalar_lea.vmem [#allocation3], 64
        %v2073 = vld [vmem:[%s2072] sm:$0xf]
        %v2074 = vld [vmem:[%s2072 + $0x4] sm:$0xf]
        %v2075 = vld [vmem:[%s2072 + $0x8] sm:$0xf]
        %v2076 = vld [vmem:[%s2072 + $0xc] sm:$0xf]
        %v2077 = vld [vmem:[%s2072 + $0x10] sm:$0xf]
        %v2078 = vld [vmem:[%s2072 + $0x14] sm:$0xf]
        %v2079 = vld [vmem:[%s2072 + $0x18] sm:$0xf]
        %v2080 = vld [vmem:[%s2072 + $0x1c] sm:$0xf]
        %v2081 = vld [vmem:[%s2072 + $0x20] sm:$0xf]
        %v2082 = vld [vmem:[%s2072 + $0x24] sm:$0xf]
        %v2083 = vld [vmem:[%s2072 + $0x28] sm:$0xf]
        %v2084 = vld [vmem:[%s2072 + $0x2c] sm:$0xf]
        %v2085 = vld [vmem:[%s2072 + $0x30] sm:$0xf]
        %v2086 = vld [vmem:[%s2072 + $0x34] sm:$0xf]
        %v2087 = vld [vmem:[%s2072 + $0x38] sm:$0xf]
        %v2088 = vld [vmem:[%s2072 + $0x3c] sm:$0xf]
        %v2105 = vunpack.c.l.b16 %v2073
        %v2106 = vunpack.c.l.b16 %v2074
        %v2107 = vunpack.c.l.b16 %v2075
        %v2108 = vunpack.c.l.b16 %v2076
        %v2109 = vunpack.c.l.b16 %v2077
        %v2110 = vunpack.c.l.b16 %v2078
        %v2111 = vunpack.c.l.b16 %v2079
        %v2112 = vunpack.c.l.b16 %v2080
        %v2113 = vunpack.c.l.b16 %v2081
        %v2114 = vunpack.c.l.b16 %v2082
        %v2115 = vunpack.c.l.b16 %v2083
        %v2116 = vunpack.c.l.b16 %v2084
        %v2117 = vunpack.c.l.b16 %v2085
        %v2118 = vunpack.c.l.b16 %v2086
        %v2119 = vunpack.c.l.b16 %v2087
        %v2120 = vunpack.c.l.b16 %v2088
        %v2121 = vpack.c.b16 %v2106, %v2105
        %v2122 = vpack.c.b16 %v2108, %v2107
        %v2123 = vpack.c.b16 %v2110, %v2109
        %v2124 = vpack.c.b16 %v2112, %v2111
        %v2125 = vpack.c.b16 %v2114, %v2113
        %v2126 = vpack.c.b16 %v2116, %v2115
        %v2127 = vpack.c.b16 %v2118, %v2117
        %v2128 = vpack.c.b16 %v2120, %v2119
        %2137 = vmatprep.subr.bf16.mxu0 0
        %2138 = vmatpush1.bf16.msra.mxu0 %v2121
        %2139 = vmatprep.subr.bf16.mxu0 0
        %2140 = vmatpush1.bf16.msra.mxu0 %v2122
        %2141 = vmatprep.subr.bf16.mxu0 0
        %2142 = vmatpush1.bf16.msra.mxu0 %v2123
        %2143 = vmatprep.subr.bf16.mxu0 0
        %2144 = vmatpush1.bf16.msra.mxu0 %v2124
        %2145 = vmatprep.subr.bf16.mxu0 0
        %2146 = vmatpush1.bf16.msra.mxu0 %v2125
        %2147 = vmatprep.subr.bf16.mxu0 0
        %2148 = vmatpush1.bf16.msra.mxu0 %v2126
        %2149 = vmatprep.subr.bf16.mxu0 0
        %2150 = vmatpush1.bf16.msra.mxu0 %v2127
        %2151 = vmatprep.subr.bf16.mxu0 0
        %2152 = vmatpush1.bf16.msra.mxu0 %v2128
        %2153 = vmatprep.subr.bf16.mxu0 0
        %2154 = vmatpush1.bf16.msra.mxu0 0
        %2155 = vmatprep.subr.bf16.mxu0 0
        %2156 = vmatpush1.bf16.msra.mxu0 0
        %2157 = vmatprep.subr.bf16.mxu0 0
        %2158 = vmatpush1.bf16.msra.mxu0 0
        %2159 = vmatprep.subr.bf16.mxu0 0
        %2160 = vmatpush1.bf16.msra.mxu0 0
        %2161 = vmatprep.subr.bf16.mxu0 0
        %2162 = vmatpush1.bf16.msra.mxu0 0
        %2163 = vmatprep.subr.bf16.mxu0 0
        %2164 = vmatpush1.bf16.msra.mxu0 0
        %2165 = vmatprep.subr.bf16.mxu0 0
        %2166 = vmatpush1.bf16.msra.mxu0 0
        %2167 = vmatprep.subr.bf16.mxu0 0
        %2168 = vmatpush1.bf16.msra.mxu0 0
        %2169 = vmatprep.mubr.bf16.mxu0 0
        %2170 = vmatmul.mubr.bf16.gmra.mrb[0].mxu0 %v1875
        %v2171 = vpop.f32.mrb[0].mxu0
        %v2172 = vadd.f32 0.0, %v2171
        %v2173 = vpop.f32.mrb[0].mxu0
        %v2174 = vpop.f32.mrb[0].mxu0
        %v2175 = vadd.f32 0.0, %v2174
        %v2176 = vpop.f32.mrb[0].mxu0
        %2177 = vmatprep.mubr.bf16.mxu0 0
        %2178 = vmatmul.mubr.bf16.gmra.mrb[0].mxu0 %v1887
        %v2179 = vpop.f32.mrb[0].mxu0
        %v2180 = vadd.f32 0.0, %v2179
        %v2181 = vpop.f32.mrb[0].mxu0
        %v2182 = vpop.f32.mrb[0].mxu0
        %v2183 = vadd.f32 0.0, %v2182
        %v2184 = vpop.f32.mrb[0].mxu0
        %2185 = vmatprep.mubr.bf16.mxu0 0
        %2186 = vmatmul.mubr.bf16.gmra.mrb[0].mxu0 %v1899
        %v2187 = vpop.f32.mrb[0].mxu0
        %v2188 = vadd.f32 0.0, %v2187
        %v2189 = vpop.f32.mrb[0].mxu0
        %v2190 = vpop.f32.mrb[0].mxu0
        %v2191 = vadd.f32 0.0, %v2190
        %v2192 = vpop.f32.mrb[0].mxu0
        %2193 = vmatprep.mubr.bf16.mxu0 0
        %2194 = vmatmul.mubr.bf16.gmra.mrb[0].mxu0 %v1911
        %v2195 = vpop.f32.mrb[0].mxu0
        %v2196 = vadd.f32 0.0, %v2195
        %v2197 = vpop.f32.mrb[0].mxu0
        %v2198 = vpop.f32.mrb[0].mxu0
        %v2199 = vadd.f32 0.0, %v2198
        %v2200 = vpop.f32.mrb[0].mxu0
        %2201 = vmatprep.mubr.bf16.mxu0 0
        %2202 = vmatmul.mubr.bf16.gmra.mrb[0].mxu0 %v1923
        %v2203 = vpop.f32.mrb[0].mxu0
        %v2204 = vadd.f32 0.0, %v2203
        %v2205 = vpop.f32.mrb[0].mxu0
        %v2206 = vpop.f32.mrb[0].mxu0
        %v2207 = vadd.f32 0.0, %v2206
        %v2208 = vpop.f32.mrb[0].mxu0
        %2209 = vmatprep.mubr.bf16.mxu0 0
        %2210 = vmatmul.mubr.bf16.gmra.mrb[0].mxu0 %v1935
        %v2211 = vpop.f32.mrb[0].mxu0
        %v2212 = vadd.f32 0.0, %v2211
        %v2213 = vpop.f32.mrb[0].mxu0
        %v2214 = vpop.f32.mrb[0].mxu0
        %v2215 = vadd.f32 0.0, %v2214
        %v2216 = vpop.f32.mrb[0].mxu0
        %2217 = vmatprep.mubr.bf16.mxu0 0
        %2218 = vmatmul.mubr.bf16.gmra.mrb[0].mxu0 %v1947
        %v2219 = vpop.f32.mrb[0].mxu0
        %v2220 = vadd.f32 0.0, %v2219
        %v2221 = vpop.f32.mrb[0].mxu0
        %v2222 = vpop.f32.mrb[0].mxu0
        %v2223 = vadd.f32 0.0, %v2222
        %v2224 = vpop.f32.mrb[0].mxu0
        %2225 = vmatprep.mubr.bf16.mxu0 0
        %2226 = vmatmul.mubr.bf16.gmra.mrb[0].mxu0 %v1959
        %v2227 = vpop.f32.mrb[0].mxu0
        %v2228 = vadd.f32 0.0, %v2227
        %v2229 = vpop.f32.mrb[0].mxu0
        %v2230 = vpop.f32.mrb[0].mxu0
        %v2231 = vadd.f32 0.0, %v2230
        %v2232 = vpop.f32.mrb[0].mxu0
        %2233 = vmatprep.mubr.bf16.mxu0 0
        %2234 = vmatmul.mubr.bf16.gmra.mrb[0].mxu0 %v1971
        %v2235 = vpop.f32.mrb[0].mxu0
        %v2236 = vadd.f32 0.0, %v2235
        %v2237 = vpop.f32.mrb[0].mxu0
        %v2238 = vpop.f32.mrb[0].mxu0
        %v2239 = vadd.f32 0.0, %v2238
        %v2240 = vpop.f32.mrb[0].mxu0
        %2241 = vmatprep.mubr.bf16.mxu0 0
        %2242 = vmatmul.mubr.bf16.gmra.mrb[0].mxu0 %v1983
        %v2243 = vpop.f32.mrb[0].mxu0
        %v2244 = vadd.f32 0.0, %v2243
        %v2245 = vpop.f32.mrb[0].mxu0
        %v2246 = vpop.f32.mrb[0].mxu0
        %v2247 = vadd.f32 0.0, %v2246
        %v2248 = vpop.f32.mrb[0].mxu0
        %2249 = vmatprep.mubr.bf16.mxu0 0
        %2250 = vmatmul.mubr.bf16.gmra.mrb[0].mxu0 %v1995
        %v2251 = vpop.f32.mrb[0].mxu0
        %v2252 = vadd.f32 0.0, %v2251
        %v2253 = vpop.f32.mrb[0].mxu0
        %v2254 = vpop.f32.mrb[0].mxu0
        %v2255 = vadd.f32 0.0, %v2254
        %v2256 = vpop.f32.mrb[0].mxu0
        %2257 = vmatprep.mubr.bf16.mxu0 0
        %2258 = vmatmul.mubr.bf16.gmra.mrb[0].mxu0 %v2007
        %v2259 = vpop.f32.mrb[0].mxu0
        %v2260 = vadd.f32 0.0, %v2259
        %v2261 = vpop.f32.mrb[0].mxu0
        %v2262 = vpop.f32.mrb[0].mxu0
        %v2263 = vadd.f32 0.0, %v2262
        %v2264 = vpop.f32.mrb[0].mxu0
        %2265 = vmatprep.mubr.bf16.mxu0 0
        %2266 = vmatmul.mubr.bf16.gmra.mrb[0].mxu0 %v2019
        %v2267 = vpop.f32.mrb[0].mxu0
        %v2268 = vadd.f32 0.0, %v2267
        %v2269 = vpop.f32.mrb[0].mxu0
        %v2270 = vpop.f32.mrb[0].mxu0
        %v2271 = vadd.f32 0.0, %v2270
        %v2272 = vpop.f32.mrb[0].mxu0
        %2273 = vmatprep.mubr.bf16.mxu0 0
        %2274 = vmatmul.mubr.bf16.gmra.mrb[0].mxu0 %v2031
        %v2275 = vpop.f32.mrb[0].mxu0
        %v2276 = vadd.f32 0.0, %v2275
        %v2277 = vpop.f32.mrb[0].mxu0
        %v2278 = vpop.f32.mrb[0].mxu0
        %v2279 = vadd.f32 0.0, %v2278
        %v2280 = vpop.f32.mrb[0].mxu0
        %2281 = vmatprep.mubr.bf16.mxu0 0
        %2282 = vmatmul.mubr.bf16.gmra.mrb[0].mxu0 %v2043
        %v2283 = vpop.f32.mrb[0].mxu0
        %v2284 = vadd.f32 0.0, %v2283
        %v2285 = vpop.f32.mrb[0].mxu0
        %v2286 = vpop.f32.mrb[0].mxu0
        %v2287 = vadd.f32 0.0, %v2286
        %v2288 = vpop.f32.mrb[0].mxu0
        %2289 = vmatprep.mubr.bf16.mxu0 0
        %2290 = vmatmul.mubr.bf16.gmra.mrb[0].mxu0 %v2055
        %v2291 = vpop.f32.mrb[0].mxu0
        %v2292 = vadd.f32 0.0, %v2291
        %v2293 = vpop.f32.mrb[0].mxu0
        %v2294 = vpop.f32.mrb[0].mxu0
        %v2295 = vadd.f32 0.0, %v2294
        %v2296 = vpop.f32.mrb[0].mxu0
        %2297 = vdwg.mxu0
        %v2314 = vunpack.c.l.b16 %v1831
        %v2315 = vunpack.c.l.b16 %v1832
        %v2316 = vunpack.c.l.b16 %v1833
        %v2317 = vunpack.c.l.b16 %v1834
        %v2318 = vunpack.c.l.b16 %v1835
        %v2319 = vunpack.c.l.b16 %v1836
        %v2320 = vunpack.c.l.b16 %v1837
        %v2321 = vunpack.c.l.b16 %v1838
        %v2322 = vunpack.c.l.b16 %v1839
        %v2323 = vunpack.c.l.b16 %v1840
        %v2324 = vunpack.c.l.b16 %v1841
        %v2325 = vunpack.c.l.b16 %v1842
        %v2326 = vunpack.c.l.b16 %v1843
        %v2327 = vunpack.c.l.b16 %v1844
        %v2328 = vunpack.c.l.b16 %v1845
        %v2329 = vunpack.c.l.b16 %v1846
        %v2330 = vpack.c.b16 %v2315, %v2314
        %v2331 = vpack.c.b16 %v2317, %v2316
        %v2332 = vpack.c.b16 %v2319, %v2318
        %v2333 = vpack.c.b16 %v2321, %v2320
        %v2334 = vpack.c.b16 %v2323, %v2322
        %v2335 = vpack.c.b16 %v2325, %v2324
        %v2336 = vpack.c.b16 %v2327, %v2326
        %v2337 = vpack.c.b16 %v2329, %v2328
        %2346 = vmatprep.subr.bf16.mxu0 0
        %2347 = vmatpush1.bf16.msra.mxu0 %v2330
        %2348 = vmatprep.subr.bf16.mxu0 0
        %2349 = vmatpush1.bf16.msra.mxu0 %v2331
        %2350 = vmatprep.subr.bf16.mxu0 0
        %2351 = vmatpush1.bf16.msra.mxu0 %v2332
        %2352 = vmatprep.subr.bf16.mxu0 0
        %2353 = vmatpush1.bf16.msra.mxu0 %v2333
        %2354 = vmatprep.subr.bf16.mxu0 0
        %2355 = vmatpush1.bf16.msra.mxu0 %v2334
        %2356 = vmatprep.subr.bf16.mxu0 0
        %2357 = vmatpush1.bf16.msra.mxu0 %v2335
        %2358 = vmatprep.subr.bf16.mxu0 0
        %2359 = vmatpush1.bf16.msra.mxu0 %v2336
        %2360 = vmatprep.subr.bf16.mxu0 0
        %2361 = vmatpush1.bf16.msra.mxu0 %v2337
        %2362 = vmatprep.subr.bf16.mxu0 0
        %2363 = vmatpush1.bf16.msra.mxu0 0
        %2364 = vmatprep.subr.bf16.mxu0 0
        %2365 = vmatpush1.bf16.msra.mxu0 0
        %2366 = vmatprep.subr.bf16.mxu0 0
        %2367 = vmatpush1.bf16.msra.mxu0 0
        %2368 = vmatprep.subr.bf16.mxu0 0
        %2369 = vmatpush1.bf16.msra.mxu0 0
        %2370 = vmatprep.subr.bf16.mxu0 0
        %2371 = vmatpush1.bf16.msra.mxu0 0
        %2372 = vmatprep.subr.bf16.mxu0 0
        %2373 = vmatpush1.bf16.msra.mxu0 0
        %2374 = vmatprep.subr.bf16.mxu0 0
        %2375 = vmatpush1.bf16.msra.mxu0 0
        %2376 = vmatprep.subr.bf16.mxu0 0
        %2377 = vmatpush1.bf16.msra.mxu0 0
        %2378 = vmatprep.mubr.bf16.mxu0 0
        %2379 = vmatmul.mubr.bf16.gmra.mrb[0].mxu0 %v1815
        %v2380 = vpop.f32.mrb[0].mxu0
        %v2381 = vadd.f32 %v2172, %v2380
        %v2382 = vpop.f32.mrb[0].mxu0
        %v2383 = vpop.f32.mrb[0].mxu0
        %v2384 = vadd.f32 %v2175, %v2383
        %v2385 = vpop.f32.mrb[0].mxu0
        %2386 = vmatprep.mubr.bf16.mxu0 0
        %2387 = vmatmul.mubr.bf16.gmra.mrb[0].mxu0 %v1816
        %v2388 = vpop.f32.mrb[0].mxu0
        %v2389 = vadd.f32 %v2180, %v2388
        %v2390 = vpop.f32.mrb[0].mxu0
        %v2391 = vpop.f32.mrb[0].mxu0
        %v2392 = vadd.f32 %v2183, %v2391
        %v2393 = vpop.f32.mrb[0].mxu0
        %2394 = vmatprep.mubr.bf16.mxu0 0
        %2395 = vmatmul.mubr.bf16.gmra.mrb[0].mxu0 %v1817
        %v2396 = vpop.f32.mrb[0].mxu0
        %v2397 = vadd.f32 %v2188, %v2396
        %v2398 = vpop.f32.mrb[0].mxu0
        %v2399 = vpop.f32.mrb[0].mxu0
        %v2400 = vadd.f32 %v2191, %v2399
        %v2401 = vpop.f32.mrb[0].mxu0
        %2402 = vmatprep.mubr.bf16.mxu0 0
        %2403 = vmatmul.mubr.bf16.gmra.mrb[0].mxu0 %v1818
        %v2404 = vpop.f32.mrb[0].mxu0
        %v2405 = vadd.f32 %v2196, %v2404
        %v2406 = vpop.f32.mrb[0].mxu0
        %v2407 = vpop.f32.mrb[0].mxu0
        %v2408 = vadd.f32 %v2199, %v2407
        %v2409 = vpop.f32.mrb[0].mxu0
        %2410 = vmatprep.mubr.bf16.mxu0 0
        %2411 = vmatmul.mubr.bf16.gmra.mrb[0].mxu0 %v1819
        %v2412 = vpop.f32.mrb[0].mxu0
        %v2413 = vadd.f32 %v2204, %v2412
        %v2414 = vpop.f32.mrb[0].mxu0
        %v2415 = vpop.f32.mrb[0].mxu0
        %v2416 = vadd.f32 %v2207, %v2415
        %v2417 = vpop.f32.mrb[0].mxu0
        %2418 = vmatprep.mubr.bf16.mxu0 0
        %2419 = vmatmul.mubr.bf16.gmra.mrb[0].mxu0 %v1820
        %v2420 = vpop.f32.mrb[0].mxu0
        %v2421 = vadd.f32 %v2212, %v2420
        %v2422 = vpop.f32.mrb[0].mxu0
        %v2423 = vpop.f32.mrb[0].mxu0
        %v2424 = vadd.f32 %v2215, %v2423
        %v2425 = vpop.f32.mrb[0].mxu0
        %2426 = vmatprep.mubr.bf16.mxu0 0
        %2427 = vmatmul.mubr.bf16.gmra.mrb[0].mxu0 %v1821
        %v2428 = vpop.f32.mrb[0].mxu0
        %v2429 = vadd.f32 %v2220, %v2428
        %v2430 = vpop.f32.mrb[0].mxu0
        %v2431 = vpop.f32.mrb[0].mxu0
        %v2432 = vadd.f32 %v2223, %v2431
        %v2433 = vpop.f32.mrb[0].mxu0
        %2434 = vmatprep.mubr.bf16.mxu0 0
        %2435 = vmatmul.mubr.bf16.gmra.mrb[0].mxu0 %v1822
        %v2436 = vpop.f32.mrb[0].mxu0
        %v2437 = vadd.f32 %v2228, %v2436
        %v2438 = vpop.f32.mrb[0].mxu0
        %v2439 = vpop.f32.mrb[0].mxu0
        %v2440 = vadd.f32 %v2231, %v2439
        %v2441 = vpop.f32.mrb[0].mxu0
        %2442 = vmatprep.mubr.bf16.mxu0 0
        %2443 = vmatmul.mubr.bf16.gmra.mrb[0].mxu0 %v1823
        %v2444 = vpop.f32.mrb[0].mxu0
        %v2445 = vadd.f32 %v2236, %v2444
        %v2446 = vpop.f32.mrb[0].mxu0
        %v2447 = vpop.f32.mrb[0].mxu0
        %v2448 = vadd.f32 %v2239, %v2447
        %v2449 = vpop.f32.mrb[0].mxu0
        %2450 = vmatprep.mubr.bf16.mxu0 0
        %2451 = vmatmul.mubr.bf16.gmra.mrb[0].mxu0 %v1824
        %v2452 = vpop.f32.mrb[0].mxu0
        %v2453 = vadd.f32 %v2244, %v2452
        %v2454 = vpop.f32.mrb[0].mxu0
        %v2455 = vpop.f32.mrb[0].mxu0
        %v2456 = vadd.f32 %v2247, %v2455
        %v2457 = vpop.f32.mrb[0].mxu0
        %2458 = vmatprep.mubr.bf16.mxu0 0
        %2459 = vmatmul.mubr.bf16.gmra.mrb[0].mxu0 %v1825
        %v2460 = vpop.f32.mrb[0].mxu0
        %v2461 = vadd.f32 %v2252, %v2460
        %v2462 = vpop.f32.mrb[0].mxu0
        %v2463 = vpop.f32.mrb[0].mxu0
        %v2464 = vadd.f32 %v2255, %v2463
        %v2465 = vpop.f32.mrb[0].mxu0
        %2466 = vmatprep.mubr.bf16.mxu0 0
        %2467 = vmatmul.mubr.bf16.gmra.mrb[0].mxu0 %v1826
        %v2468 = vpop.f32.mrb[0].mxu0
        %v2469 = vadd.f32 %v2260, %v2468
        %v2470 = vpop.f32.mrb[0].mxu0
        %v2471 = vpop.f32.mrb[0].mxu0
        %v2472 = vadd.f32 %v2263, %v2471
        %v2473 = vpop.f32.mrb[0].mxu0
        %2474 = vmatprep.mubr.bf16.mxu0 0
        %2475 = vmatmul.mubr.bf16.gmra.mrb[0].mxu0 %v1827
        %v2476 = vpop.f32.mrb[0].mxu0
        %v2477 = vadd.f32 %v2268, %v2476
        %v2478 = vpop.f32.mrb[0].mxu0
        %v2479 = vpop.f32.mrb[0].mxu0
        %v2480 = vadd.f32 %v2271, %v2479
        %v2481 = vpop.f32.mrb[0].mxu0
        %2482 = vmatprep.mubr.bf16.mxu0 0
        %2483 = vmatmul.mubr.bf16.gmra.mrb[0].mxu0 %v1828
        %v2484 = vpop.f32.mrb[0].mxu0
        %v2485 = vadd.f32 %v2276, %v2484
        %v2486 = vpop.f32.mrb[0].mxu0
        %v2487 = vpop.f32.mrb[0].mxu0
        %v2488 = vadd.f32 %v2279, %v2487
        %v2489 = vpop.f32.mrb[0].mxu0
        %2490 = vmatprep.mubr.bf16.mxu0 0
        %2491 = vmatmul.mubr.bf16.gmra.mrb[0].mxu0 %v1829
        %v2492 = vpop.f32.mrb[0].mxu0
        %v2493 = vadd.f32 %v2284, %v2492
        %v2494 = vpop.f32.mrb[0].mxu0
        %v2495 = vpop.f32.mrb[0].mxu0
        %v2496 = vadd.f32 %v2287, %v2495
        %v2497 = vpop.f32.mrb[0].mxu0
        %2498 = vmatprep.mubr.bf16.mxu0 0
        %2499 = vmatmul.mubr.bf16.gmra.mrb[0].mxu0 %v1830
        %v2500 = vpop.f32.mrb[0].mxu0
        %v2501 = vadd.f32 %v2292, %v2500
        %v2502 = vpop.f32.mrb[0].mxu0
        %v2503 = vpop.f32.mrb[0].mxu0
        %v2504 = vadd.f32 %v2295, %v2503
        %v2505 = vpop.f32.mrb[0].mxu0
        %2506 = vdwg.mxu0
        %v2507 = vld [vmem:[#allocation2] sm:$0xfe]
        %v2508 = vld [vmem:[#allocation2 + $0x10] sm:$0xfe]
        %v2509 = vld [vmem:[#allocation2 + $0x20] sm:$0xfe]
        %v2510 = vld [vmem:[#allocation2 + $0x30] sm:$0xfe]
        %v2511 = vld [vmem:[#allocation2 + $0x40] sm:$0xfe]
        %v2512 = vld [vmem:[#allocation2 + $0x50] sm:$0xfe]
        %v2513 = vld [vmem:[#allocation2 + $0x60] sm:$0xfe]
        %v2514 = vld [vmem:[#allocation2 + $0x70] sm:$0xfe]
        %v2515 = vld [vmem:[#allocation2 + $0x80] sm:$0xfe]
        %v2516 = vld [vmem:[#allocation2 + $0x90] sm:$0xfe]
        %v2517 = vld [vmem:[#allocation2 + $0xa0] sm:$0xfe]
        %v2518 = vld [vmem:[#allocation2 + $0xb0] sm:$0xfe]
        %v2519 = vld [vmem:[#allocation2 + $0xc0] sm:$0xfe]
        %v2520 = vld [vmem:[#allocation2 + $0xd0] sm:$0xfe]
        %v2521 = vld [vmem:[#allocation2 + $0xe0] sm:$0xfe]
        %v2522 = vld [vmem:[#allocation2 + $0xf0] sm:$0xfe]
        %vm2555 = vcmask 1046528
        %v2556 = vrot.slane %v2507, 1
        %v2557 = vrot.slane %v1847, 1
        %v2558 = vsel %vm2555, %v2556, %v2557
        %v2559 = vrot.slane %v2508, 1
        %v2560 = vrot.slane %v1848, 1
        %v2561 = vsel %vm2555, %v2559, %v2560
        %v2562 = vrot.slane %v2509, 1
        %v2563 = vrot.slane %v1849, 1
        %v2564 = vsel %vm2555, %v2562, %v2563
        %v2565 = vrot.slane %v2510, 1
        %v2566 = vrot.slane %v1850, 1
        %v2567 = vsel %vm2555, %v2565, %v2566
        %v2568 = vrot.slane %v2511, 1
        %v2569 = vrot.slane %v1851, 1
        %v2570 = vsel %vm2555, %v2568, %v2569
        %v2571 = vrot.slane %v2512, 1
        %v2572 = vrot.slane %v1852, 1
        %v2573 = vsel %vm2555, %v2571, %v2572
        %v2574 = vrot.slane %v2513, 1
        %v2575 = vrot.slane %v1853, 1
        %v2576 = vsel %vm2555, %v2574, %v2575
        %v2577 = vrot.slane %v2514, 1
        %v2578 = vrot.slane %v1854, 1
        %v2579 = vsel %vm2555, %v2577, %v2578
        %v2580 = vrot.slane %v2515, 1
        %v2581 = vrot.slane %v1855, 1
        %v2582 = vsel %vm2555, %v2580, %v2581
        %v2583 = vrot.slane %v2516, 1
        %v2584 = vrot.slane %v1856, 1
        %v2585 = vsel %vm2555, %v2583, %v2584
        %v2586 = vrot.slane %v2517, 1
        %v2587 = vrot.slane %v1857, 1
        %v2588 = vsel %vm2555, %v2586, %v2587
        %v2589 = vrot.slane %v2518, 1
        %v2590 = vrot.slane %v1858, 1
        %v2591 = vsel %vm2555, %v2589, %v2590
        %v2592 = vrot.slane %v2519, 1
        %v2593 = vrot.slane %v1859, 1
        %v2594 = vsel %vm2555, %v2592, %v2593
        %v2595 = vrot.slane %v2520, 1
        %v2596 = vrot.slane %v1860, 1
        %v2597 = vsel %vm2555, %v2595, %v2596
        %v2598 = vrot.slane %v2521, 1
        %v2599 = vrot.slane %v1861, 1
        %v2600 = vsel %vm2555, %v2598, %v2599
        %v2601 = vrot.slane %v2522, 1
        %v2602 = vrot.slane %v1862, 1
        %v2603 = vsel %vm2555, %v2601, %v2602
        %s2620 = scalar_lea.vmem [#allocation3], 128
        %v2621 = vld [vmem:[%s2620] sm:$0xf]
        %v2622 = vld [vmem:[%s2620 + $0x4] sm:$0xf]
        %v2623 = vld [vmem:[%s2620 + $0x8] sm:$0xf]
        %v2624 = vld [vmem:[%s2620 + $0xc] sm:$0xf]
        %v2625 = vld [vmem:[%s2620 + $0x10] sm:$0xf]
        %v2626 = vld [vmem:[%s2620 + $0x14] sm:$0xf]
        %v2627 = vld [vmem:[%s2620 + $0x18] sm:$0xf]
        %v2628 = vld [vmem:[%s2620 + $0x1c] sm:$0xf]
        %v2629 = vld [vmem:[%s2620 + $0x20] sm:$0xf]
        %v2630 = vld [vmem:[%s2620 + $0x24] sm:$0xf]
        %v2631 = vld [vmem:[%s2620 + $0x28] sm:$0xf]
        %v2632 = vld [vmem:[%s2620 + $0x2c] sm:$0xf]
        %v2633 = vld [vmem:[%s2620 + $0x30] sm:$0xf]
        %v2634 = vld [vmem:[%s2620 + $0x34] sm:$0xf]
        %v2635 = vld [vmem:[%s2620 + $0x38] sm:$0xf]
        %v2636 = vld [vmem:[%s2620 + $0x3c] sm:$0xf]
        %v2653 = vunpack.c.l.b16 %v2621
        %v2654 = vunpack.c.l.b16 %v2622
        %v2655 = vunpack.c.l.b16 %v2623
        %v2656 = vunpack.c.l.b16 %v2624
        %v2657 = vunpack.c.l.b16 %v2625
        %v2658 = vunpack.c.l.b16 %v2626
        %v2659 = vunpack.c.l.b16 %v2627
        %v2660 = vunpack.c.l.b16 %v2628
        %v2661 = vunpack.c.l.b16 %v2629
        %v2662 = vunpack.c.l.b16 %v2630
        %v2663 = vunpack.c.l.b16 %v2631
        %v2664 = vunpack.c.l.b16 %v2632
        %v2665 = vunpack.c.l.b16 %v2633
        %v2666 = vunpack.c.l.b16 %v2634
        %v2667 = vunpack.c.l.b16 %v2635
        %v2668 = vunpack.c.l.b16 %v2636
        %v2669 = vpack.c.b16 %v2654, %v2653
        %v2670 = vpack.c.b16 %v2656, %v2655
        %v2671 = vpack.c.b16 %v2658, %v2657
        %v2672 = vpack.c.b16 %v2660, %v2659
        %v2673 = vpack.c.b16 %v2662, %v2661
        %v2674 = vpack.c.b16 %v2664, %v2663
        %v2675 = vpack.c.b16 %v2666, %v2665
        %v2676 = vpack.c.b16 %v2668, %v2667
        %2685 = vmatprep.subr.bf16.mxu0 0
        %2686 = vmatpush1.bf16.msra.mxu0 %v2669
        %2687 = vmatprep.subr.bf16.mxu0 0
        %2688 = vmatpush1.bf16.msra.mxu0 %v2670
        %2689 = vmatprep.subr.bf16.mxu0 0
        %2690 = vmatpush1.bf16.msra.mxu0 %v2671
        %2691 = vmatprep.subr.bf16.mxu0 0
        %2692 = vmatpush1.bf16.msra.mxu0 %v2672
        %2693 = vmatprep.subr.bf16.mxu0 0
        %2694 = vmatpush1.bf16.msra.mxu0 %v2673
        %2695 = vmatprep.subr.bf16.mxu0 0
        %2696 = vmatpush1.bf16.msra.mxu0 %v2674
        %2697 = vmatprep.subr.bf16.mxu0 0
        %2698 = vmatpush1.bf16.msra.mxu0 %v2675
        %2699 = vmatprep.subr.bf16.mxu0 0
        %2700 = vmatpush1.bf16.msra.mxu0 %v2676
        %2701 = vmatprep.subr.bf16.mxu0 0
        %2702 = vmatpush1.bf16.msra.mxu0 0
        %2703 = vmatprep.subr.bf16.mxu0 0
        %2704 = vmatpush1.bf16.msra.mxu0 0
        %2705 = vmatprep.subr.bf16.mxu0 0
        %2706 = vmatpush1.bf16.msra.mxu0 0
        %2707 = vmatprep.subr.bf16.mxu0 0
        %2708 = vmatpush1.bf16.msra.mxu0 0
        %2709 = vmatprep.subr.bf16.mxu0 0
        %2710 = vmatpush1.bf16.msra.mxu0 0
        %2711 = vmatprep.subr.bf16.mxu0 0
        %2712 = vmatpush1.bf16.msra.mxu0 0
        %2713 = vmatprep.subr.bf16.mxu0 0
        %2714 = vmatpush1.bf16.msra.mxu0 0
        %2715 = vmatprep.subr.bf16.mxu0 0
        %2716 = vmatpush1.bf16.msra.mxu0 0
        %2717 = vmatprep.mubr.bf16.mxu0 0
        %2718 = vmatmul.mubr.bf16.gmra.mrb[0].mxu0 %v2558
        %v2719 = vpop.f32.mrb[0].mxu0
        %v2720 = vadd.f32 0.0, %v2719
        %v2721 = vpop.f32.mrb[0].mxu0
        %v2722 = vpop.f32.mrb[0].mxu0
        %v2723 = vadd.f32 0.0, %v2722
        %v2724 = vpop.f32.mrb[0].mxu0
        %2725 = vmatprep.mubr.bf16.mxu0 0
        %2726 = vmatmul.mubr.bf16.gmra.mrb[0].mxu0 %v2561
        %v2727 = vpop.f32.mrb[0].mxu0
        %v2728 = vadd.f32 0.0, %v2727
        %v2729 = vpop.f32.mrb[0].mxu0
        %v2730 = vpop.f32.mrb[0].mxu0
        %v2731 = vadd.f32 0.0, %v2730
        %v2732 = vpop.f32.mrb[0].mxu0
        %2733 = vmatprep.mubr.bf16.mxu0 0
        %2734 = vmatmul.mubr.bf16.gmra.mrb[0].mxu0 %v2564
        %v2735 = vpop.f32.mrb[0].mxu0
        %v2736 = vadd.f32 0.0, %v2735
        %v2737 = vpop.f32.mrb[0].mxu0
        %v2738 = vpop.f32.mrb[0].mxu0
        %v2739 = vadd.f32 0.0, %v2738
        %v2740 = vpop.f32.mrb[0].mxu0
        %2741 = vmatprep.mubr.bf16.mxu0 0
        %2742 = vmatmul.mubr.bf16.gmra.mrb[0].mxu0 %v2567
        %v2743 = vpop.f32.mrb[0].mxu0
        %v2744 = vadd.f32 0.0, %v2743
        %v2745 = vpop.f32.mrb[0].mxu0
        %v2746 = vpop.f32.mrb[0].mxu0
        %v2747 = vadd.f32 0.0, %v2746
        %v2748 = vpop.f32.mrb[0].mxu0
        %2749 = vmatprep.mubr.bf16.mxu0 0
        %2750 = vmatmul.mubr.bf16.gmra.mrb[0].mxu0 %v2570
        %v2751 = vpop.f32.mrb[0].mxu0
        %v2752 = vadd.f32 0.0, %v2751
        %v2753 = vpop.f32.mrb[0].mxu0
        %v2754 = vpop.f32.mrb[0].mxu0
        %v2755 = vadd.f32 0.0, %v2754
        %v2756 = vpop.f32.mrb[0].mxu0
        %2757 = vmatprep.mubr.bf16.mxu0 0
        %2758 = vmatmul.mubr.bf16.gmra.mrb[0].mxu0 %v2573
        %v2759 = vpop.f32.mrb[0].mxu0
        %v2760 = vadd.f32 0.0, %v2759
        %v2761 = vpop.f32.mrb[0].mxu0
        %v2762 = vpop.f32.mrb[0].mxu0
        %v2763 = vadd.f32 0.0, %v2762
        %v2764 = vpop.f32.mrb[0].mxu0
        %2765 = vmatprep.mubr.bf16.mxu0 0
        %2766 = vmatmul.mubr.bf16.gmra.mrb[0].mxu0 %v2576
        %v2767 = vpop.f32.mrb[0].mxu0
        %v2768 = vadd.f32 0.0, %v2767
        %v2769 = vpop.f32.mrb[0].mxu0
        %v2770 = vpop.f32.mrb[0].mxu0
        %v2771 = vadd.f32 0.0, %v2770
        %v2772 = vpop.f32.mrb[0].mxu0
        %2773 = vmatprep.mubr.bf16.mxu0 0
        %2774 = vmatmul.mubr.bf16.gmra.mrb[0].mxu0 %v2579
        %v2775 = vpop.f32.mrb[0].mxu0
        %v2776 = vadd.f32 0.0, %v2775
        %v2777 = vpop.f32.mrb[0].mxu0
        %v2778 = vpop.f32.mrb[0].mxu0
        %v2779 = vadd.f32 0.0, %v2778
        %v2780 = vpop.f32.mrb[0].mxu0
        %2781 = vmatprep.mubr.bf16.mxu0 0
        %2782 = vmatmul.mubr.bf16.gmra.mrb[0].mxu0 %v2582
        %v2783 = vpop.f32.mrb[0].mxu0
        %v2784 = vadd.f32 0.0, %v2783
        %v2785 = vpop.f32.mrb[0].mxu0
        %v2786 = vpop.f32.mrb[0].mxu0
        %v2787 = vadd.f32 0.0, %v2786
        %v2788 = vpop.f32.mrb[0].mxu0
        %2789 = vmatprep.mubr.bf16.mxu0 0
        %2790 = vmatmul.mubr.bf16.gmra.mrb[0].mxu0 %v2585
        %v2791 = vpop.f32.mrb[0].mxu0
        %v2792 = vadd.f32 0.0, %v2791
        %v2793 = vpop.f32.mrb[0].mxu0
        %v2794 = vpop.f32.mrb[0].mxu0
        %v2795 = vadd.f32 0.0, %v2794
        %v2796 = vpop.f32.mrb[0].mxu0
        %2797 = vmatprep.mubr.bf16.mxu0 0
        %2798 = vmatmul.mubr.bf16.gmra.mrb[0].mxu0 %v2588
        %v2799 = vpop.f32.mrb[0].mxu0
        %v2800 = vadd.f32 0.0, %v2799
        %v2801 = vpop.f32.mrb[0].mxu0
        %v2802 = vpop.f32.mrb[0].mxu0
        %v2803 = vadd.f32 0.0, %v2802
        %v2804 = vpop.f32.mrb[0].mxu0
        %2805 = vmatprep.mubr.bf16.mxu0 0
        %2806 = vmatmul.mubr.bf16.gmra.mrb[0].mxu0 %v2591
        %v2807 = vpop.f32.mrb[0].mxu0
        %v2808 = vadd.f32 0.0, %v2807
        %v2809 = vpop.f32.mrb[0].mxu0
        %v2810 = vpop.f32.mrb[0].mxu0
        %v2811 = vadd.f32 0.0, %v2810
        %v2812 = vpop.f32.mrb[0].mxu0
        %2813 = vmatprep.mubr.bf16.mxu0 0
        %2814 = vmatmul.mubr.bf16.gmra.mrb[0].mxu0 %v2594
        %v2815 = vpop.f32.mrb[0].mxu0
        %v2816 = vadd.f32 0.0, %v2815
        %v2817 = vpop.f32.mrb[0].mxu0
        %v2818 = vpop.f32.mrb[0].mxu0
        %v2819 = vadd.f32 0.0, %v2818
        %v2820 = vpop.f32.mrb[0].mxu0
        %2821 = vmatprep.mubr.bf16.mxu0 0
        %2822 = vmatmul.mubr.bf16.gmra.mrb[0].mxu0 %v2597
        %v2823 = vpop.f32.mrb[0].mxu0
        %v2824 = vadd.f32 0.0, %v2823
        %v2825 = vpop.f32.mrb[0].mxu0
        %v2826 = vpop.f32.mrb[0].mxu0
        %v2827 = vadd.f32 0.0, %v2826
        %v2828 = vpop.f32.mrb[0].mxu0
        %2829 = vmatprep.mubr.bf16.mxu0 0
        %2830 = vmatmul.mubr.bf16.gmra.mrb[0].mxu0 %v2600
        %v2831 = vpop.f32.mrb[0].mxu0
        %v2832 = vadd.f32 0.0, %v2831
        %v2833 = vpop.f32.mrb[0].mxu0
        %v2834 = vpop.f32.mrb[0].mxu0
        %v2835 = vadd.f32 0.0, %v2834
        %v2836 = vpop.f32.mrb[0].mxu0
        %2837 = vmatprep.mubr.bf16.mxu0 0
        %2838 = vmatmul.mubr.bf16.gmra.mrb[0].mxu0 %v2603
        %v2839 = vpop.f32.mrb[0].mxu0
        %v2840 = vadd.f32 0.0, %v2839
        %v2841 = vpop.f32.mrb[0].mxu0
        %v2842 = vpop.f32.mrb[0].mxu0
        %v2843 = vadd.f32 0.0, %v2842
        %v2844 = vpop.f32.mrb[0].mxu0
        %2845 = vdwg.mxu0
        %v2846 = vadd.f32 %v2381, %v2720
        %v2847 = vadd.f32 %v2384, %v2723
        %v2848 = vadd.f32 %v2389, %v2728
        %v2849 = vadd.f32 %v2392, %v2731
        %v2850 = vadd.f32 %v2397, %v2736
        %v2851 = vadd.f32 %v2400, %v2739
        %v2852 = vadd.f32 %v2405, %v2744
        %v2853 = vadd.f32 %v2408, %v2747
        %v2854 = vadd.f32 %v2413, %v2752
        %v2855 = vadd.f32 %v2416, %v2755
        %v2856 = vadd.f32 %v2421, %v2760
        %v2857 = vadd.f32 %v2424, %v2763
        %v2858 = vadd.f32 %v2429, %v2768
        %v2859 = vadd.f32 %v2432, %v2771
        %v2860 = vadd.f32 %v2437, %v2776
        %v2861 = vadd.f32 %v2440, %v2779
        %v2862 = vadd.f32 %v2445, %v2784
        %v2863 = vadd.f32 %v2448, %v2787
        %v2864 = vadd.f32 %v2453, %v2792
        %v2865 = vadd.f32 %v2456, %v2795
        %v2866 = vadd.f32 %v2461, %v2800
        %v2867 = vadd.f32 %v2464, %v2803
        %v2868 = vadd.f32 %v2469, %v2808
        %v2869 = vadd.f32 %v2472, %v2811
        %v2870 = vadd.f32 %v2477, %v2816
        %v2871 = vadd.f32 %v2480, %v2819
        %v2872 = vadd.f32 %v2485, %v2824
        %v2873 = vadd.f32 %v2488, %v2827
        %v2874 = vadd.f32 %v2493, %v2832
        %v2875 = vadd.f32 %v2496, %v2835
        %v2876 = vadd.f32 %v2501, %v2840
        %v2877 = vadd.f32 %v2504, %v2843
        %v2878 = vld [vmem:[%s1455] sm:$0xff]
        %v2879 = vld [vmem:[%s1455 + $0x10] sm:$0xff]
        %v2880 = vld [vmem:[%s1455 + $0x20] sm:$0xff]
        %v2881 = vld [vmem:[%s1455 + $0x30] sm:$0xff]
        %v2882 = vld [vmem:[%s1455 + $0x40] sm:$0xff]
        %v2883 = vld [vmem:[%s1455 + $0x50] sm:$0xff]
        %v2884 = vld [vmem:[%s1455 + $0x60] sm:$0xff]
        %v2885 = vld [vmem:[%s1455 + $0x70] sm:$0xff]
        %v2886 = vld [vmem:[%s1455 + $0x80] sm:$0xff]
        %v2887 = vld [vmem:[%s1455 + $0x90] sm:$0xff]
        %v2888 = vld [vmem:[%s1455 + $0xa0] sm:$0xff]
        %v2889 = vld [vmem:[%s1455 + $0xb0] sm:$0xff]
        %v2890 = vld [vmem:[%s1455 + $0xc0] sm:$0xff]
        %v2891 = vld [vmem:[%s1455 + $0xd0] sm:$0xff]
        %v2892 = vld [vmem:[%s1455 + $0xe0] sm:$0xff]
        %v2893 = vld [vmem:[%s1455 + $0xf0] sm:$0xff]
        %s2894 = scalar_lea.vmem [#allocation3], 192
        %v2895 = vld [vmem:[%s2894] sm:$0xf]
        %v2896 = vld [vmem:[%s2894 + $0x4] sm:$0xf]
        %v2897 = vld [vmem:[%s2894 + $0x8] sm:$0xf]
        %v2898 = vld [vmem:[%s2894 + $0xc] sm:$0xf]
        %v2899 = vld [vmem:[%s2894 + $0x10] sm:$0xf]
        %v2900 = vld [vmem:[%s2894 + $0x14] sm:$0xf]
        %v2901 = vld [vmem:[%s2894 + $0x18] sm:$0xf]
        %v2902 = vld [vmem:[%s2894 + $0x1c] sm:$0xf]
        %v2903 = vld [vmem:[%s2894 + $0x20] sm:$0xf]
        %v2904 = vld [vmem:[%s2894 + $0x24] sm:$0xf]
        %v2905 = vld [vmem:[%s2894 + $0x28] sm:$0xf]
        %v2906 = vld [vmem:[%s2894 + $0x2c] sm:$0xf]
        %v2907 = vld [vmem:[%s2894 + $0x30] sm:$0xf]
        %v2908 = vld [vmem:[%s2894 + $0x34] sm:$0xf]
        %v2909 = vld [vmem:[%s2894 + $0x38] sm:$0xf]
        %v2910 = vld [vmem:[%s2894 + $0x3c] sm:$0xf]
        %v2927 = vunpack.c.l.b16 %v2895
        %v2928 = vunpack.c.l.b16 %v2896
        %v2929 = vunpack.c.l.b16 %v2897
        %v2930 = vunpack.c.l.b16 %v2898
        %v2931 = vunpack.c.l.b16 %v2899
        %v2932 = vunpack.c.l.b16 %v2900
        %v2933 = vunpack.c.l.b16 %v2901
        %v2934 = vunpack.c.l.b16 %v2902
        %v2935 = vunpack.c.l.b16 %v2903
        %v2936 = vunpack.c.l.b16 %v2904
        %v2937 = vunpack.c.l.b16 %v2905
        %v2938 = vunpack.c.l.b16 %v2906
        %v2939 = vunpack.c.l.b16 %v2907
        %v2940 = vunpack.c.l.b16 %v2908
        %v2941 = vunpack.c.l.b16 %v2909
        %v2942 = vunpack.c.l.b16 %v2910
        %v2943 = vpack.c.b16 %v2928, %v2927
        %v2944 = vpack.c.b16 %v2930, %v2929
        %v2945 = vpack.c.b16 %v2932, %v2931
        %v2946 = vpack.c.b16 %v2934, %v2933
        %v2947 = vpack.c.b16 %v2936, %v2935
        %v2948 = vpack.c.b16 %v2938, %v2937
        %v2949 = vpack.c.b16 %v2940, %v2939
        %v2950 = vpack.c.b16 %v2942, %v2941
        %2959 = vmatprep.subr.bf16.mxu0 0
        %2960 = vmatpush1.bf16.msra.mxu0 %v2943
        %2961 = vmatprep.subr.bf16.mxu0 0
        %2962 = vmatpush1.bf16.msra.mxu0 %v2944
        %2963 = vmatprep.subr.bf16.mxu0 0
        %2964 = vmatpush1.bf16.msra.mxu0 %v2945
        %2965 = vmatprep.subr.bf16.mxu0 0
        %2966 = vmatpush1.bf16.msra.mxu0 %v2946
        %2967 = vmatprep.subr.bf16.mxu0 0
        %2968 = vmatpush1.bf16.msra.mxu0 %v2947
        %2969 = vmatprep.subr.bf16.mxu0 0
        %2970 = vmatpush1.bf16.msra.mxu0 %v2948
        %2971 = vmatprep.subr.bf16.mxu0 0
        %2972 = vmatpush1.bf16.msra.mxu0 %v2949
        %2973 = vmatprep.subr.bf16.mxu0 0
        %2974 = vmatpush1.bf16.msra.mxu0 %v2950
        %2975 = vmatprep.subr.bf16.mxu0 0
        %2976 = vmatpush1.bf16.msra.mxu0 0
        %2977 = vmatprep.subr.bf16.mxu0 0
        %2978 = vmatpush1.bf16.msra.mxu0 0
        %2979 = vmatprep.subr.bf16.mxu0 0
        %2980 = vmatpush1.bf16.msra.mxu0 0
        %2981 = vmatprep.subr.bf16.mxu0 0
        %2982 = vmatpush1.bf16.msra.mxu0 0
        %2983 = vmatprep.subr.bf16.mxu0 0
        %2984 = vmatpush1.bf16.msra.mxu0 0
        %2985 = vmatprep.subr.bf16.mxu0 0
        %2986 = vmatpush1.bf16.msra.mxu0 0
        %2987 = vmatprep.subr.bf16.mxu0 0
        %2988 = vmatpush1.bf16.msra.mxu0 0
        %2989 = vmatprep.subr.bf16.mxu0 0
        %2990 = vmatpush1.bf16.msra.mxu0 0
        %2991 = vmatprep.mubr.bf16.mxu0 0
        %2992 = vmatmul.mubr.bf16.gmra.mrb[0].mxu0 %v2878
        %v2993 = vpop.f32.mrb[0].mxu0
        %v2994 = vadd.f32 0.0, %v2993
        %v2995 = vpop.f32.mrb[0].mxu0
        %v2996 = vpop.f32.mrb[0].mxu0
        %v2997 = vadd.f32 0.0, %v2996
        %v2998 = vpop.f32.mrb[0].mxu0
        %2999 = vmatprep.mubr.bf16.mxu0 0
        %3000 = vmatmul.mubr.bf16.gmra.mrb[0].mxu0 %v2879
        %v3001 = vpop.f32.mrb[0].mxu0
        %v3002 = vadd.f32 0.0, %v3001
        %v3003 = vpop.f32.mrb[0].mxu0
        %v3004 = vpop.f32.mrb[0].mxu0
        %v3005 = vadd.f32 0.0, %v3004
        %v3006 = vpop.f32.mrb[0].mxu0
        %3007 = vmatprep.mubr.bf16.mxu0 0
        %3008 = vmatmul.mubr.bf16.gmra.mrb[0].mxu0 %v2880
        %v3009 = vpop.f32.mrb[0].mxu0
        %v3010 = vadd.f32 0.0, %v3009
        %v3011 = vpop.f32.mrb[0].mxu0
        %v3012 = vpop.f32.mrb[0].mxu0
        %v3013 = vadd.f32 0.0, %v3012
        %v3014 = vpop.f32.mrb[0].mxu0
        %3015 = vmatprep.mubr.bf16.mxu0 0
        %3016 = vmatmul.mubr.bf16.gmra.mrb[0].mxu0 %v2881
        %v3017 = vpop.f32.mrb[0].mxu0
        %v3018 = vadd.f32 0.0, %v3017
        %v3019 = vpop.f32.mrb[0].mxu0
        %v3020 = vpop.f32.mrb[0].mxu0
        %v3021 = vadd.f32 0.0, %v3020
        %v3022 = vpop.f32.mrb[0].mxu0
        %3023 = vmatprep.mubr.bf16.mxu0 0
        %3024 = vmatmul.mubr.bf16.gmra.mrb[0].mxu0 %v2882
        %v3025 = vpop.f32.mrb[0].mxu0
        %v3026 = vadd.f32 0.0, %v3025
        %v3027 = vpop.f32.mrb[0].mxu0
        %v3028 = vpop.f32.mrb[0].mxu0
        %v3029 = vadd.f32 0.0, %v3028
        %v3030 = vpop.f32.mrb[0].mxu0
        %3031 = vmatprep.mubr.bf16.mxu0 0
        %3032 = vmatmul.mubr.bf16.gmra.mrb[0].mxu0 %v2883
        %v3033 = vpop.f32.mrb[0].mxu0
        %v3034 = vadd.f32 0.0, %v3033
        %v3035 = vpop.f32.mrb[0].mxu0
        %v3036 = vpop.f32.mrb[0].mxu0
        %v3037 = vadd.f32 0.0, %v3036
        %v3038 = vpop.f32.mrb[0].mxu0
        %3039 = vmatprep.mubr.bf16.mxu0 0
        %3040 = vmatmul.mubr.bf16.gmra.mrb[0].mxu0 %v2884
        %v3041 = vpop.f32.mrb[0].mxu0
        %v3042 = vadd.f32 0.0, %v3041
        %v3043 = vpop.f32.mrb[0].mxu0
        %v3044 = vpop.f32.mrb[0].mxu0
        %v3045 = vadd.f32 0.0, %v3044
        %v3046 = vpop.f32.mrb[0].mxu0
        %3047 = vmatprep.mubr.bf16.mxu0 0
        %3048 = vmatmul.mubr.bf16.gmra.mrb[0].mxu0 %v2885
        %v3049 = vpop.f32.mrb[0].mxu0
        %v3050 = vadd.f32 0.0, %v3049
        %v3051 = vpop.f32.mrb[0].mxu0
        %v3052 = vpop.f32.mrb[0].mxu0
        %v3053 = vadd.f32 0.0, %v3052
        %v3054 = vpop.f32.mrb[0].mxu0
        %3055 = vmatprep.mubr.bf16.mxu0 0
        %3056 = vmatmul.mubr.bf16.gmra.mrb[0].mxu0 %v2886
        %v3057 = vpop.f32.mrb[0].mxu0
        %v3058 = vadd.f32 0.0, %v3057
        %v3059 = vpop.f32.mrb[0].mxu0
        %v3060 = vpop.f32.mrb[0].mxu0
        %v3061 = vadd.f32 0.0, %v3060
        %v3062 = vpop.f32.mrb[0].mxu0
        %3063 = vmatprep.mubr.bf16.mxu0 0
        %3064 = vmatmul.mubr.bf16.gmra.mrb[0].mxu0 %v2887
        %v3065 = vpop.f32.mrb[0].mxu0
        %v3066 = vadd.f32 0.0, %v3065
        %v3067 = vpop.f32.mrb[0].mxu0
        %v3068 = vpop.f32.mrb[0].mxu0
        %v3069 = vadd.f32 0.0, %v3068
        %v3070 = vpop.f32.mrb[0].mxu0
        %3071 = vmatprep.mubr.bf16.mxu0 0
        %3072 = vmatmul.mubr.bf16.gmra.mrb[0].mxu0 %v2888
        %v3073 = vpop.f32.mrb[0].mxu0
        %v3074 = vadd.f32 0.0, %v3073
        %v3075 = vpop.f32.mrb[0].mxu0
        %v3076 = vpop.f32.mrb[0].mxu0
        %v3077 = vadd.f32 0.0, %v3076
        %v3078 = vpop.f32.mrb[0].mxu0
        %3079 = vmatprep.mubr.bf16.mxu0 0
        %3080 = vmatmul.mubr.bf16.gmra.mrb[0].mxu0 %v2889
        %v3081 = vpop.f32.mrb[0].mxu0
        %v3082 = vadd.f32 0.0, %v3081
        %v3083 = vpop.f32.mrb[0].mxu0
        %v3084 = vpop.f32.mrb[0].mxu0
        %v3085 = vadd.f32 0.0, %v3084
        %v3086 = vpop.f32.mrb[0].mxu0
        %3087 = vmatprep.mubr.bf16.mxu0 0
        %3088 = vmatmul.mubr.bf16.gmra.mrb[0].mxu0 %v2890
        %v3089 = vpop.f32.mrb[0].mxu0
        %v3090 = vadd.f32 0.0, %v3089
        %v3091 = vpop.f32.mrb[0].mxu0
        %v3092 = vpop.f32.mrb[0].mxu0
        %v3093 = vadd.f32 0.0, %v3092
        %v3094 = vpop.f32.mrb[0].mxu0
        %3095 = vmatprep.mubr.bf16.mxu0 0
        %3096 = vmatmul.mubr.bf16.gmra.mrb[0].mxu0 %v2891
        %v3097 = vpop.f32.mrb[0].mxu0
        %v3098 = vadd.f32 0.0, %v3097
        %v3099 = vpop.f32.mrb[0].mxu0
        %v3100 = vpop.f32.mrb[0].mxu0
        %v3101 = vadd.f32 0.0, %v3100
        %v3102 = vpop.f32.mrb[0].mxu0
        %3103 = vmatprep.mubr.bf16.mxu0 0
        %3104 = vmatmul.mubr.bf16.gmra.mrb[0].mxu0 %v2892
        %v3105 = vpop.f32.mrb[0].mxu0
        %v3106 = vadd.f32 0.0, %v3105
        %v3107 = vpop.f32.mrb[0].mxu0
        %v3108 = vpop.f32.mrb[0].mxu0
        %v3109 = vadd.f32 0.0, %v3108
        %v3110 = vpop.f32.mrb[0].mxu0
        %3111 = vmatprep.mubr.bf16.mxu0 0
        %3112 = vmatmul.mubr.bf16.gmra.mrb[0].mxu0 %v2893
        %v3113 = vpop.f32.mrb[0].mxu0
        %v3114 = vadd.f32 0.0, %v3113
        %v3115 = vpop.f32.mrb[0].mxu0
        %v3116 = vpop.f32.mrb[0].mxu0
        %v3117 = vadd.f32 0.0, %v3116
        %v3118 = vpop.f32.mrb[0].mxu0
        %3119 = vdwg.mxu0
        %v3120 = vadd.f32 %v2846, %v2994
        %v3121 = vadd.f32 %v2847, %v2997
        %v3122 = vadd.f32 %v2848, %v3002
        %v3123 = vadd.f32 %v2849, %v3005
        %v3124 = vadd.f32 %v2850, %v3010
        %v3125 = vadd.f32 %v2851, %v3013
        %v3126 = vadd.f32 %v2852, %v3018
        %v3127 = vadd.f32 %v2853, %v3021
        %v3128 = vadd.f32 %v2854, %v3026
        %v3129 = vadd.f32 %v2855, %v3029
        %v3130 = vadd.f32 %v2856, %v3034
        %v3131 = vadd.f32 %v2857, %v3037
        %v3132 = vadd.f32 %v2858, %v3042
        %v3133 = vadd.f32 %v2859, %v3045
        %v3134 = vadd.f32 %v2860, %v3050
        %v3135 = vadd.f32 %v2861, %v3053
        %v3136 = vadd.f32 %v2862, %v3058
        %v3137 = vadd.f32 %v2863, %v3061
        %v3138 = vadd.f32 %v2864, %v3066
        %v3139 = vadd.f32 %v2865, %v3069
        %v3140 = vadd.f32 %v2866, %v3074
        %v3141 = vadd.f32 %v2867, %v3077
        %v3142 = vadd.f32 %v2868, %v3082
        %v3143 = vadd.f32 %v2869, %v3085
        %v3144 = vadd.f32 %v2870, %v3090
        %v3145 = vadd.f32 %v2871, %v3093
        %v3146 = vadd.f32 %v2872, %v3098
        %v3147 = vadd.f32 %v2873, %v3101
        %v3148 = vadd.f32 %v2874, %v3106
        %v3149 = vadd.f32 %v2875, %v3109
        %v3150 = vadd.f32 %v2876, %v3114
        %v3151 = vadd.f32 %v2877, %v3117
        %v3152 = vld [vmem:[%s1455] sm:$0xff]
        %v3153 = vld [vmem:[%s1455 + $0x8] sm:$0x1]
        %v3154 = vld [vmem:[%s1455 + $0x10] sm:$0xff]
        %v3155 = vld [vmem:[%s1455 + $0x18] sm:$0x1]
        %v3156 = vld [vmem:[%s1455 + $0x20] sm:$0xff]
        %v3157 = vld [vmem:[%s1455 + $0x28] sm:$0x1]
        %v3158 = vld [vmem:[%s1455 + $0x30] sm:$0xff]
        %v3159 = vld [vmem:[%s1455 + $0x38] sm:$0x1]
        %v3160 = vld [vmem:[%s1455 + $0x40] sm:$0xff]
        %v3161 = vld [vmem:[%s1455 + $0x48] sm:$0x1]
        %v3162 = vld [vmem:[%s1455 + $0x50] sm:$0xff]
        %v3163 = vld [vmem:[%s1455 + $0x58] sm:$0x1]
        %v3164 = vld [vmem:[%s1455 + $0x60] sm:$0xff]
        %v3165 = vld [vmem:[%s1455 + $0x68] sm:$0x1]
        %v3166 = vld [vmem:[%s1455 + $0x70] sm:$0xff]
        %v3167 = vld [vmem:[%s1455 + $0x78] sm:$0x1]
        %v3168 = vld [vmem:[%s1455 + $0x80] sm:$0xff]
        %v3169 = vld [vmem:[%s1455 + $0x88] sm:$0x1]
        %v3170 = vld [vmem:[%s1455 + $0x90] sm:$0xff]
        %v3171 = vld [vmem:[%s1455 + $0x98] sm:$0x1]
        %v3172 = vld [vmem:[%s1455 + $0xa0] sm:$0xff]
        %v3173 = vld [vmem:[%s1455 + $0xa8] sm:$0x1]
        %v3174 = vld [vmem:[%s1455 + $0xb0] sm:$0xff]
        %v3175 = vld [vmem:[%s1455 + $0xb8] sm:$0x1]
        %v3176 = vld [vmem:[%s1455 + $0xc0] sm:$0xff]
        %v3177 = vld [vmem:[%s1455 + $0xc8] sm:$0x1]
        %v3178 = vld [vmem:[%s1455 + $0xd0] sm:$0xff]
        %v3179 = vld [vmem:[%s1455 + $0xd8] sm:$0x1]
        %v3180 = vld [vmem:[%s1455 + $0xe0] sm:$0xff]
        %v3181 = vld [vmem:[%s1455 + $0xe8] sm:$0x1]
        %v3182 = vld [vmem:[%s1455 + $0xf0] sm:$0xff]
        %v3183 = vld [vmem:[%s1455 + $0xf8] sm:$0x1]
        %v3185 = vshrl.u32 %v3152, 16
        %v3187 = vshll.u32 %v3152, 16
        %v3189 = vrot.slane %v3187, 1
        %v3190 = vor.u32 %v3185, %v3189
        %v3192 = vshll.u32 %v3153, 16
        %v3194 = vrot.slane %v3192, 1
        %v3195 = vsel %vm1863, %v3190, %v3194
        %v3197 = vshrl.u32 %v3154, 16
        %v3199 = vshll.u32 %v3154, 16
        %v3201 = vrot.slane %v3199, 1
        %v3202 = vor.u32 %v3197, %v3201
        %v3204 = vshll.u32 %v3155, 16
        %v3206 = vrot.slane %v3204, 1
        %v3207 = vsel %vm1863, %v3202, %v3206
        %v3209 = vshrl.u32 %v3156, 16
        %v3211 = vshll.u32 %v3156, 16
        %v3213 = vrot.slane %v3211, 1
        %v3214 = vor.u32 %v3209, %v3213
        %v3216 = vshll.u32 %v3157, 16
        %v3218 = vrot.slane %v3216, 1
        %v3219 = vsel %vm1863, %v3214, %v3218
        %v3221 = vshrl.u32 %v3158, 16
        %v3223 = vshll.u32 %v3158, 16
        %v3225 = vrot.slane %v3223, 1
        %v3226 = vor.u32 %v3221, %v3225
        %v3228 = vshll.u32 %v3159, 16
        %v3230 = vrot.slane %v3228, 1
        %v3231 = vsel %vm1863, %v3226, %v3230
        %v3233 = vshrl.u32 %v3160, 16
        %v3235 = vshll.u32 %v3160, 16
        %v3237 = vrot.slane %v3235, 1
        %v3238 = vor.u32 %v3233, %v3237
        %v3240 = vshll.u32 %v3161, 16
        %v3242 = vrot.slane %v3240, 1
        %v3243 = vsel %vm1863, %v3238, %v3242
        %v3245 = vshrl.u32 %v3162, 16
        %v3247 = vshll.u32 %v3162, 16
        %v3249 = vrot.slane %v3247, 1
        %v3250 = vor.u32 %v3245, %v3249
        %v3252 = vshll.u32 %v3163, 16
        %v3254 = vrot.slane %v3252, 1
        %v3255 = vsel %vm1863, %v3250, %v3254
        %v3257 = vshrl.u32 %v3164, 16
        %v3259 = vshll.u32 %v3164, 16
        %v3261 = vrot.slane %v3259, 1
        %v3262 = vor.u32 %v3257, %v3261
        %v3264 = vshll.u32 %v3165, 16
        %v3266 = vrot.slane %v3264, 1
        %v3267 = vsel %vm1863, %v3262, %v3266
        %v3269 = vshrl.u32 %v3166, 16
        %v3271 = vshll.u32 %v3166, 16
        %v3273 = vrot.slane %v3271, 1
        %v3274 = vor.u32 %v3269, %v3273
        %v3276 = vshll.u32 %v3167, 16
        %v3278 = vrot.slane %v3276, 1
        %v3279 = vsel %vm1863, %v3274, %v3278
        %v3281 = vshrl.u32 %v3168, 16
        %v3283 = vshll.u32 %v3168, 16
        %v3285 = vrot.slane %v3283, 1
        %v3286 = vor.u32 %v3281, %v3285
        %v3288 = vshll.u32 %v3169, 16
        %v3290 = vrot.slane %v3288, 1
        %v3291 = vsel %vm1863, %v3286, %v3290
        %v3293 = vshrl.u32 %v3170, 16
        %v3295 = vshll.u32 %v3170, 16
        %v3297 = vrot.slane %v3295, 1
        %v3298 = vor.u32 %v3293, %v3297
        %v3300 = vshll.u32 %v3171, 16
        %v3302 = vrot.slane %v3300, 1
        %v3303 = vsel %vm1863, %v3298, %v3302
        %v3305 = vshrl.u32 %v3172, 16
        %v3307 = vshll.u32 %v3172, 16
        %v3309 = vrot.slane %v3307, 1
        %v3310 = vor.u32 %v3305, %v3309
        %v3312 = vshll.u32 %v3173, 16
        %v3314 = vrot.slane %v3312, 1
        %v3315 = vsel %vm1863, %v3310, %v3314
        %v3317 = vshrl.u32 %v3174, 16
        %v3319 = vshll.u32 %v3174, 16
        %v3321 = vrot.slane %v3319, 1
        %v3322 = vor.u32 %v3317, %v3321
        %v3324 = vshll.u32 %v3175, 16
        %v3326 = vrot.slane %v3324, 1
        %v3327 = vsel %vm1863, %v3322, %v3326
        %v3329 = vshrl.u32 %v3176, 16
        %v3331 = vshll.u32 %v3176, 16
        %v3333 = vrot.slane %v3331, 1
        %v3334 = vor.u32 %v3329, %v3333
        %v3336 = vshll.u32 %v3177, 16
        %v3338 = vrot.slane %v3336, 1
        %v3339 = vsel %vm1863, %v3334, %v3338
        %v3341 = vshrl.u32 %v3178, 16
        %v3343 = vshll.u32 %v3178, 16
        %v3345 = vrot.slane %v3343, 1
        %v3346 = vor.u32 %v3341, %v3345
        %v3348 = vshll.u32 %v3179, 16
        %v3350 = vrot.slane %v3348, 1
        %v3351 = vsel %vm1863, %v3346, %v3350
        %v3353 = vshrl.u32 %v3180, 16
        %v3355 = vshll.u32 %v3180, 16
        %v3357 = vrot.slane %v3355, 1
        %v3358 = vor.u32 %v3353, %v3357
        %v3360 = vshll.u32 %v3181, 16
        %v3362 = vrot.slane %v3360, 1
        %v3363 = vsel %vm1863, %v3358, %v3362
        %v3365 = vshrl.u32 %v3182, 16
        %v3367 = vshll.u32 %v3182, 16
        %v3369 = vrot.slane %v3367, 1
        %v3370 = vor.u32 %v3365, %v3369
        %v3372 = vshll.u32 %v3183, 16
        %v3374 = vrot.slane %v3372, 1
        %v3375 = vsel %vm1863, %v3370, %v3374
        %s3392 = scalar_lea.vmem [#allocation3], 256
        %v3393 = vld [vmem:[%s3392] sm:$0xf]
        %v3394 = vld [vmem:[%s3392 + $0x4] sm:$0xf]
        %v3395 = vld [vmem:[%s3392 + $0x8] sm:$0xf]
        %v3396 = vld [vmem:[%s3392 + $0xc] sm:$0xf]
        %v3397 = vld [vmem:[%s3392 + $0x10] sm:$0xf]
        %v3398 = vld [vmem:[%s3392 + $0x14] sm:$0xf]
        %v3399 = vld [vmem:[%s3392 + $0x18] sm:$0xf]
        %v3400 = vld [vmem:[%s3392 + $0x1c] sm:$0xf]
        %v3401 = vld [vmem:[%s3392 + $0x20] sm:$0xf]
        %v3402 = vld [vmem:[%s3392 + $0x24] sm:$0xf]
        %v3403 = vld [vmem:[%s3392 + $0x28] sm:$0xf]
        %v3404 = vld [vmem:[%s3392 + $0x2c] sm:$0xf]
        %v3405 = vld [vmem:[%s3392 + $0x30] sm:$0xf]
        %v3406 = vld [vmem:[%s3392 + $0x34] sm:$0xf]
        %v3407 = vld [vmem:[%s3392 + $0x38] sm:$0xf]
        %v3408 = vld [vmem:[%s3392 + $0x3c] sm:$0xf]
        %v3425 = vunpack.c.l.b16 %v3393
        %v3426 = vunpack.c.l.b16 %v3394
        %v3427 = vunpack.c.l.b16 %v3395
        %v3428 = vunpack.c.l.b16 %v3396
        %v3429 = vunpack.c.l.b16 %v3397
        %v3430 = vunpack.c.l.b16 %v3398
        %v3431 = vunpack.c.l.b16 %v3399
        %v3432 = vunpack.c.l.b16 %v3400
        %v3433 = vunpack.c.l.b16 %v3401
        %v3434 = vunpack.c.l.b16 %v3402
        %v3435 = vunpack.c.l.b16 %v3403
        %v3436 = vunpack.c.l.b16 %v3404
        %v3437 = vunpack.c.l.b16 %v3405
        %v3438 = vunpack.c.l.b16 %v3406
        %v3439 = vunpack.c.l.b16 %v3407
        %v3440 = vunpack.c.l.b16 %v3408
        %v3441 = vpack.c.b16 %v3426, %v3425
        %v3442 = vpack.c.b16 %v3428, %v3427
        %v3443 = vpack.c.b16 %v3430, %v3429
        %v3444 = vpack.c.b16 %v3432, %v3431
        %v3445 = vpack.c.b16 %v3434, %v3433
        %v3446 = vpack.c.b16 %v3436, %v3435
        %v3447 = vpack.c.b16 %v3438, %v3437
        %v3448 = vpack.c.b16 %v3440, %v3439
        %3457 = vmatprep.subr.bf16.mxu0 0
        %3458 = vmatpush1.bf16.msra.mxu0 %v3441
        %3459 = vmatprep.subr.bf16.mxu0 0
        %3460 = vmatpush1.bf16.msra.mxu0 %v3442
        %3461 = vmatprep.subr.bf16.mxu0 0
        %3462 = vmatpush1.bf16.msra.mxu0 %v3443
        %3463 = vmatprep.subr.bf16.mxu0 0
        %3464 = vmatpush1.bf16.msra.mxu0 %v3444
        %3465 = vmatprep.subr.bf16.mxu0 0
        %3466 = vmatpush1.bf16.msra.mxu0 %v3445
        %3467 = vmatprep.subr.bf16.mxu0 0
        %3468 = vmatpush1.bf16.msra.mxu0 %v3446
        %3469 = vmatprep.subr.bf16.mxu0 0
        %3470 = vmatpush1.bf16.msra.mxu0 %v3447
        %3471 = vmatprep.subr.bf16.mxu0 0
        %3472 = vmatpush1.bf16.msra.mxu0 %v3448
        %3473 = vmatprep.subr.bf16.mxu0 0
        %3474 = vmatpush1.bf16.msra.mxu0 0
        %3475 = vmatprep.subr.bf16.mxu0 0
        %3476 = vmatpush1.bf16.msra.mxu0 0
        %3477 = vmatprep.subr.bf16.mxu0 0
        %3478 = vmatpush1.bf16.msra.mxu0 0
        %3479 = vmatprep.subr.bf16.mxu0 0
        %3480 = vmatpush1.bf16.msra.mxu0 0
        %3481 = vmatprep.subr.bf16.mxu0 0
        %3482 = vmatpush1.bf16.msra.mxu0 0
        %3483 = vmatprep.subr.bf16.mxu0 0
        %3484 = vmatpush1.bf16.msra.mxu0 0
        %3485 = vmatprep.subr.bf16.mxu0 0
        %3486 = vmatpush1.bf16.msra.mxu0 0
        %3487 = vmatprep.subr.bf16.mxu0 0
        %3488 = vmatpush1.bf16.msra.mxu0 0
        %3489 = vmatprep.mubr.bf16.mxu0 0
        %3490 = vmatmul.mubr.bf16.gmra.mrb[0].mxu0 %v3195
        %v3491 = vpop.f32.mrb[0].mxu0
        %v3492 = vadd.f32 0.0, %v3491
        %v3493 = vpop.f32.mrb[0].mxu0
        %v3494 = vpop.f32.mrb[0].mxu0
        %v3495 = vadd.f32 0.0, %v3494
        %v3496 = vpop.f32.mrb[0].mxu0
        %3497 = vmatprep.mubr.bf16.mxu0 0
        %3498 = vmatmul.mubr.bf16.gmra.mrb[0].mxu0 %v3207
        %v3499 = vpop.f32.mrb[0].mxu0
        %v3500 = vadd.f32 0.0, %v3499
        %v3501 = vpop.f32.mrb[0].mxu0
        %v3502 = vpop.f32.mrb[0].mxu0
        %v3503 = vadd.f32 0.0, %v3502
        %v3504 = vpop.f32.mrb[0].mxu0
        %3505 = vmatprep.mubr.bf16.mxu0 0
        %3506 = vmatmul.mubr.bf16.gmra.mrb[0].mxu0 %v3219
        %v3507 = vpop.f32.mrb[0].mxu0
        %v3508 = vadd.f32 0.0, %v3507
        %v3509 = vpop.f32.mrb[0].mxu0
        %v3510 = vpop.f32.mrb[0].mxu0
        %v3511 = vadd.f32 0.0, %v3510
        %v3512 = vpop.f32.mrb[0].mxu0
        %3513 = vmatprep.mubr.bf16.mxu0 0
        %3514 = vmatmul.mubr.bf16.gmra.mrb[0].mxu0 %v3231
        %v3515 = vpop.f32.mrb[0].mxu0
        %v3516 = vadd.f32 0.0, %v3515
        %v3517 = vpop.f32.mrb[0].mxu0
        %v3518 = vpop.f32.mrb[0].mxu0
        %v3519 = vadd.f32 0.0, %v3518
        %v3520 = vpop.f32.mrb[0].mxu0
        %3521 = vmatprep.mubr.bf16.mxu0 0
        %3522 = vmatmul.mubr.bf16.gmra.mrb[0].mxu0 %v3243
        %v3523 = vpop.f32.mrb[0].mxu0
        %v3524 = vadd.f32 0.0, %v3523
        %v3525 = vpop.f32.mrb[0].mxu0
        %v3526 = vpop.f32.mrb[0].mxu0
        %v3527 = vadd.f32 0.0, %v3526
        %v3528 = vpop.f32.mrb[0].mxu0
        %3529 = vmatprep.mubr.bf16.mxu0 0
        %3530 = vmatmul.mubr.bf16.gmra.mrb[0].mxu0 %v3255
        %v3531 = vpop.f32.mrb[0].mxu0
        %v3532 = vadd.f32 0.0, %v3531
        %v3533 = vpop.f32.mrb[0].mxu0
        %v3534 = vpop.f32.mrb[0].mxu0
        %v3535 = vadd.f32 0.0, %v3534
        %v3536 = vpop.f32.mrb[0].mxu0
        %3537 = vmatprep.mubr.bf16.mxu0 0
        %3538 = vmatmul.mubr.bf16.gmra.mrb[0].mxu0 %v3267
        %v3539 = vpop.f32.mrb[0].mxu0
        %v3540 = vadd.f32 0.0, %v3539
        %v3541 = vpop.f32.mrb[0].mxu0
        %v3542 = vpop.f32.mrb[0].mxu0
        %v3543 = vadd.f32 0.0, %v3542
        %v3544 = vpop.f32.mrb[0].mxu0
        %3545 = vmatprep.mubr.bf16.mxu0 0
        %3546 = vmatmul.mubr.bf16.gmra.mrb[0].mxu0 %v3279
        %v3547 = vpop.f32.mrb[0].mxu0
        %v3548 = vadd.f32 0.0, %v3547
        %v3549 = vpop.f32.mrb[0].mxu0
        %v3550 = vpop.f32.mrb[0].mxu0
        %v3551 = vadd.f32 0.0, %v3550
        %v3552 = vpop.f32.mrb[0].mxu0
        %3553 = vmatprep.mubr.bf16.mxu0 0
        %3554 = vmatmul.mubr.bf16.gmra.mrb[0].mxu0 %v3291
        %v3555 = vpop.f32.mrb[0].mxu0
        %v3556 = vadd.f32 0.0, %v3555
        %v3557 = vpop.f32.mrb[0].mxu0
        %v3558 = vpop.f32.mrb[0].mxu0
        %v3559 = vadd.f32 0.0, %v3558
        %v3560 = vpop.f32.mrb[0].mxu0
        %3561 = vmatprep.mubr.bf16.mxu0 0
        %3562 = vmatmul.mubr.bf16.gmra.mrb[0].mxu0 %v3303
        %v3563 = vpop.f32.mrb[0].mxu0
        %v3564 = vadd.f32 0.0, %v3563
        %v3565 = vpop.f32.mrb[0].mxu0
        %v3566 = vpop.f32.mrb[0].mxu0
        %v3567 = vadd.f32 0.0, %v3566
        %v3568 = vpop.f32.mrb[0].mxu0
        %3569 = vmatprep.mubr.bf16.mxu0 0
        %3570 = vmatmul.mubr.bf16.gmra.mrb[0].mxu0 %v3315
        %v3571 = vpop.f32.mrb[0].mxu0
        %v3572 = vadd.f32 0.0, %v3571
        %v3573 = vpop.f32.mrb[0].mxu0
        %v3574 = vpop.f32.mrb[0].mxu0
        %v3575 = vadd.f32 0.0, %v3574
        %v3576 = vpop.f32.mrb[0].mxu0
        %3577 = vmatprep.mubr.bf16.mxu0 0
        %3578 = vmatmul.mubr.bf16.gmra.mrb[0].mxu0 %v3327
        %v3579 = vpop.f32.mrb[0].mxu0
        %v3580 = vadd.f32 0.0, %v3579
        %v3581 = vpop.f32.mrb[0].mxu0
        %v3582 = vpop.f32.mrb[0].mxu0
        %v3583 = vadd.f32 0.0, %v3582
        %v3584 = vpop.f32.mrb[0].mxu0
        %3585 = vmatprep.mubr.bf16.mxu0 0
        %3586 = vmatmul.mubr.bf16.gmra.mrb[0].mxu0 %v3339
        %v3587 = vpop.f32.mrb[0].mxu0
        %v3588 = vadd.f32 0.0, %v3587
        %v3589 = vpop.f32.mrb[0].mxu0
        %v3590 = vpop.f32.mrb[0].mxu0
        %v3591 = vadd.f32 0.0, %v3590
        %v3592 = vpop.f32.mrb[0].mxu0
        %3593 = vmatprep.mubr.bf16.mxu0 0
        %3594 = vmatmul.mubr.bf16.gmra.mrb[0].mxu0 %v3351
        %v3595 = vpop.f32.mrb[0].mxu0
        %v3596 = vadd.f32 0.0, %v3595
        %v3597 = vpop.f32.mrb[0].mxu0
        %v3598 = vpop.f32.mrb[0].mxu0
        %v3599 = vadd.f32 0.0, %v3598
        %v3600 = vpop.f32.mrb[0].mxu0
        %3601 = vmatprep.mubr.bf16.mxu0 0
        %3602 = vmatmul.mubr.bf16.gmra.mrb[0].mxu0 %v3363
        %v3603 = vpop.f32.mrb[0].mxu0
        %v3604 = vadd.f32 0.0, %v3603
        %v3605 = vpop.f32.mrb[0].mxu0
        %v3606 = vpop.f32.mrb[0].mxu0
        %v3607 = vadd.f32 0.0, %v3606
        %v3608 = vpop.f32.mrb[0].mxu0
        %3609 = vmatprep.mubr.bf16.mxu0 0
        %3610 = vmatmul.mubr.bf16.gmra.mrb[0].mxu0 %v3375
        %v3611 = vpop.f32.mrb[0].mxu0
        %v3612 = vadd.f32 0.0, %v3611
        %v3613 = vpop.f32.mrb[0].mxu0
        %v3614 = vpop.f32.mrb[0].mxu0
        %v3615 = vadd.f32 0.0, %v3614
        %v3616 = vpop.f32.mrb[0].mxu0
        %3617 = vdwg.mxu0
        %v3618 = vadd.f32 %v3120, %v3492
        %v3619 = vadd.f32 %v3121, %v3495
        %v3620 = vadd.f32 %v3122, %v3500
        %v3621 = vadd.f32 %v3123, %v3503
        %v3622 = vadd.f32 %v3124, %v3508
        %v3623 = vadd.f32 %v3125, %v3511
        %v3624 = vadd.f32 %v3126, %v3516
        %v3625 = vadd.f32 %v3127, %v3519
        %v3626 = vadd.f32 %v3128, %v3524
        %v3627 = vadd.f32 %v3129, %v3527
        %v3628 = vadd.f32 %v3130, %v3532
        %v3629 = vadd.f32 %v3131, %v3535
        %v3630 = vadd.f32 %v3132, %v3540
        %v3631 = vadd.f32 %v3133, %v3543
        %v3632 = vadd.f32 %v3134, %v3548
        %v3633 = vadd.f32 %v3135, %v3551
        %v3634 = vadd.f32 %v3136, %v3556
        %v3635 = vadd.f32 %v3137, %v3559
        %v3636 = vadd.f32 %v3138, %v3564
        %v3637 = vadd.f32 %v3139, %v3567
        %v3638 = vadd.f32 %v3140, %v3572
        %v3639 = vadd.f32 %v3141, %v3575
        %v3640 = vadd.f32 %v3142, %v3580
        %v3641 = vadd.f32 %v3143, %v3583
        %v3642 = vadd.f32 %v3144, %v3588
        %v3643 = vadd.f32 %v3145, %v3591
        %v3644 = vadd.f32 %v3146, %v3596
        %v3645 = vadd.f32 %v3147, %v3599
        %v3646 = vadd.f32 %v3148, %v3604
        %v3647 = vadd.f32 %v3149, %v3607
        %v3648 = vadd.f32 %v3150, %v3612
        %v3649 = vadd.f32 %v3151, %v3615
        %v3650 = vld [vmem:[%s1455] sm:$0xfe]
        %v3651 = vld [vmem:[%s1455 + $0x10] sm:$0xfe]
        %v3652 = vld [vmem:[%s1455 + $0x20] sm:$0xfe]
        %v3653 = vld [vmem:[%s1455 + $0x30] sm:$0xfe]
        %v3654 = vld [vmem:[%s1455 + $0x40] sm:$0xfe]
        %v3655 = vld [vmem:[%s1455 + $0x50] sm:$0xfe]
        %v3656 = vld [vmem:[%s1455 + $0x60] sm:$0xfe]
        %v3657 = vld [vmem:[%s1455 + $0x70] sm:$0xfe]
        %v3658 = vld [vmem:[%s1455 + $0x80] sm:$0xfe]
        %v3659 = vld [vmem:[%s1455 + $0x90] sm:$0xfe]
        %v3660 = vld [vmem:[%s1455 + $0xa0] sm:$0xfe]
        %v3661 = vld [vmem:[%s1455 + $0xb0] sm:$0xfe]
        %v3662 = vld [vmem:[%s1455 + $0xc0] sm:$0xfe]
        %v3663 = vld [vmem:[%s1455 + $0xd0] sm:$0xfe]
        %v3664 = vld [vmem:[%s1455 + $0xe0] sm:$0xfe]
        %v3665 = vld [vmem:[%s1455 + $0xf0] sm:$0xfe]
        %v3698 = vrot.slane %v3650, 1
        %v3699 = vrot.slane %v3153, 1
        %v3700 = vsel %vm2555, %v3698, %v3699
        %v3701 = vrot.slane %v3651, 1
        %v3702 = vrot.slane %v3155, 1
        %v3703 = vsel %vm2555, %v3701, %v3702
        %v3704 = vrot.slane %v3652, 1
        %v3705 = vrot.slane %v3157, 1
        %v3706 = vsel %vm2555, %v3704, %v3705
        %v3707 = vrot.slane %v3653, 1
        %v3708 = vrot.slane %v3159, 1
        %v3709 = vsel %vm2555, %v3707, %v3708
        %v3710 = vrot.slane %v3654, 1
        %v3711 = vrot.slane %v3161, 1
        %v3712 = vsel %vm2555, %v3710, %v3711
        %v3713 = vrot.slane %v3655, 1
        %v3714 = vrot.slane %v3163, 1
        %v3715 = vsel %vm2555, %v3713, %v3714
        %v3716 = vrot.slane %v3656, 1
        %v3717 = vrot.slane %v3165, 1
        %v3718 = vsel %vm2555, %v3716, %v3717
        %v3719 = vrot.slane %v3657, 1
        %v3720 = vrot.slane %v3167, 1
        %v3721 = vsel %vm2555, %v3719, %v3720
        %v3722 = vrot.slane %v3658, 1
        %v3723 = vrot.slane %v3169, 1
        %v3724 = vsel %vm2555, %v3722, %v3723
        %v3725 = vrot.slane %v3659, 1
        %v3726 = vrot.slane %v3171, 1
        %v3727 = vsel %vm2555, %v3725, %v3726
        %v3728 = vrot.slane %v3660, 1
        %v3729 = vrot.slane %v3173, 1
        %v3730 = vsel %vm2555, %v3728, %v3729
        %v3731 = vrot.slane %v3661, 1
        %v3732 = vrot.slane %v3175, 1
        %v3733 = vsel %vm2555, %v3731, %v3732
        %v3734 = vrot.slane %v3662, 1
        %v3735 = vrot.slane %v3177, 1
        %v3736 = vsel %vm2555, %v3734, %v3735
        %v3737 = vrot.slane %v3663, 1
        %v3738 = vrot.slane %v3179, 1
        %v3739 = vsel %vm2555, %v3737, %v3738
        %v3740 = vrot.slane %v3664, 1
        %v3741 = vrot.slane %v3181, 1
        %v3742 = vsel %vm2555, %v3740, %v3741
        %v3743 = vrot.slane %v3665, 1
        %v3744 = vrot.slane %v3183, 1
        %v3745 = vsel %vm2555, %v3743, %v3744
        %s3762 = scalar_lea.vmem [#allocation3], 320
        %v3763 = vld [vmem:[%s3762] sm:$0xf]
        %v3764 = vld [vmem:[%s3762 + $0x4] sm:$0xf]
        %v3765 = vld [vmem:[%s3762 + $0x8] sm:$0xf]
        %v3766 = vld [vmem:[%s3762 + $0xc] sm:$0xf]
        %v3767 = vld [vmem:[%s3762 + $0x10] sm:$0xf]
        %v3768 = vld [vmem:[%s3762 + $0x14] sm:$0xf]
        %v3769 = vld [vmem:[%s3762 + $0x18] sm:$0xf]
        %v3770 = vld [vmem:[%s3762 + $0x1c] sm:$0xf]
        %v3771 = vld [vmem:[%s3762 + $0x20] sm:$0xf]
        %v3772 = vld [vmem:[%s3762 + $0x24] sm:$0xf]
        %v3773 = vld [vmem:[%s3762 + $0x28] sm:$0xf]
        %v3774 = vld [vmem:[%s3762 + $0x2c] sm:$0xf]
        %v3775 = vld [vmem:[%s3762 + $0x30] sm:$0xf]
        %v3776 = vld [vmem:[%s3762 + $0x34] sm:$0xf]
        %v3777 = vld [vmem:[%s3762 + $0x38] sm:$0xf]
        %v3778 = vld [vmem:[%s3762 + $0x3c] sm:$0xf]
        %v3795 = vunpack.c.l.b16 %v3763
        %v3796 = vunpack.c.l.b16 %v3764
        %v3797 = vunpack.c.l.b16 %v3765
        %v3798 = vunpack.c.l.b16 %v3766
        %v3799 = vunpack.c.l.b16 %v3767
        %v3800 = vunpack.c.l.b16 %v3768
        %v3801 = vunpack.c.l.b16 %v3769
        %v3802 = vunpack.c.l.b16 %v3770
        %v3803 = vunpack.c.l.b16 %v3771
        %v3804 = vunpack.c.l.b16 %v3772
        %v3805 = vunpack.c.l.b16 %v3773
        %v3806 = vunpack.c.l.b16 %v3774
        %v3807 = vunpack.c.l.b16 %v3775
        %v3808 = vunpack.c.l.b16 %v3776
        %v3809 = vunpack.c.l.b16 %v3777
        %v3810 = vunpack.c.l.b16 %v3778
        %v3811 = vpack.c.b16 %v3796, %v3795
        %v3812 = vpack.c.b16 %v3798, %v3797
        %v3813 = vpack.c.b16 %v3800, %v3799
        %v3814 = vpack.c.b16 %v3802, %v3801
        %v3815 = vpack.c.b16 %v3804, %v3803
        %v3816 = vpack.c.b16 %v3806, %v3805
        %v3817 = vpack.c.b16 %v3808, %v3807
        %v3818 = vpack.c.b16 %v3810, %v3809
        %3827 = vmatprep.subr.bf16.mxu0 0
        %3828 = vmatpush1.bf16.msra.mxu0 %v3811
        %3829 = vmatprep.subr.bf16.mxu0 0
        %3830 = vmatpush1.bf16.msra.mxu0 %v3812
        %3831 = vmatprep.subr.bf16.mxu0 0
        %3832 = vmatpush1.bf16.msra.mxu0 %v3813
        %3833 = vmatprep.subr.bf16.mxu0 0
        %3834 = vmatpush1.bf16.msra.mxu0 %v3814
        %3835 = vmatprep.subr.bf16.mxu0 0
        %3836 = vmatpush1.bf16.msra.mxu0 %v3815
        %3837 = vmatprep.subr.bf16.mxu0 0
        %3838 = vmatpush1.bf16.msra.mxu0 %v3816
        %3839 = vmatprep.subr.bf16.mxu0 0
        %3840 = vmatpush1.bf16.msra.mxu0 %v3817
        %3841 = vmatprep.subr.bf16.mxu0 0
        %3842 = vmatpush1.bf16.msra.mxu0 %v3818
        %3843 = vmatprep.subr.bf16.mxu0 0
        %3844 = vmatpush1.bf16.msra.mxu0 0
        %3845 = vmatprep.subr.bf16.mxu0 0
        %3846 = vmatpush1.bf16.msra.mxu0 0
        %3847 = vmatprep.subr.bf16.mxu0 0
        %3848 = vmatpush1.bf16.msra.mxu0 0
        %3849 = vmatprep.subr.bf16.mxu0 0
        %3850 = vmatpush1.bf16.msra.mxu0 0
        %3851 = vmatprep.subr.bf16.mxu0 0
        %3852 = vmatpush1.bf16.msra.mxu0 0
        %3853 = vmatprep.subr.bf16.mxu0 0
        %3854 = vmatpush1.bf16.msra.mxu0 0
        %3855 = vmatprep.subr.bf16.mxu0 0
        %3856 = vmatpush1.bf16.msra.mxu0 0
        %3857 = vmatprep.subr.bf16.mxu0 0
        %3858 = vmatpush1.bf16.msra.mxu0 0
        %3859 = vmatprep.mubr.bf16.mxu0 0
        %3860 = vmatmul.mubr.bf16.gmra.mrb[0].mxu0 %v3700
        %v3861 = vpop.f32.mrb[0].mxu0
        %v3862 = vadd.f32 0.0, %v3861
        %v3863 = vpop.f32.mrb[0].mxu0
        %v3864 = vpop.f32.mrb[0].mxu0
        %v3865 = vadd.f32 0.0, %v3864
        %v3866 = vpop.f32.mrb[0].mxu0
        %3867 = vmatprep.mubr.bf16.mxu0 0
        %3868 = vmatmul.mubr.bf16.gmra.mrb[0].mxu0 %v3703
        %v3869 = vpop.f32.mrb[0].mxu0
        %v3870 = vadd.f32 0.0, %v3869
        %v3871 = vpop.f32.mrb[0].mxu0
        %v3872 = vpop.f32.mrb[0].mxu0
        %v3873 = vadd.f32 0.0, %v3872
        %v3874 = vpop.f32.mrb[0].mxu0
        %3875 = vmatprep.mubr.bf16.mxu0 0
        %3876 = vmatmul.mubr.bf16.gmra.mrb[0].mxu0 %v3706
        %v3877 = vpop.f32.mrb[0].mxu0
        %v3878 = vadd.f32 0.0, %v3877
        %v3879 = vpop.f32.mrb[0].mxu0
        %v3880 = vpop.f32.mrb[0].mxu0
        %v3881 = vadd.f32 0.0, %v3880
        %v3882 = vpop.f32.mrb[0].mxu0
        %3883 = vmatprep.mubr.bf16.mxu0 0
        %3884 = vmatmul.mubr.bf16.gmra.mrb[0].mxu0 %v3709
        %v3885 = vpop.f32.mrb[0].mxu0
        %v3886 = vadd.f32 0.0, %v3885
        %v3887 = vpop.f32.mrb[0].mxu0
        %v3888 = vpop.f32.mrb[0].mxu0
        %v3889 = vadd.f32 0.0, %v3888
        %v3890 = vpop.f32.mrb[0].mxu0
        %3891 = vmatprep.mubr.bf16.mxu0 0
        %3892 = vmatmul.mubr.bf16.gmra.mrb[0].mxu0 %v3712
        %v3893 = vpop.f32.mrb[0].mxu0
        %v3894 = vadd.f32 0.0, %v3893
        %v3895 = vpop.f32.mrb[0].mxu0
        %v3896 = vpop.f32.mrb[0].mxu0
        %v3897 = vadd.f32 0.0, %v3896
        %v3898 = vpop.f32.mrb[0].mxu0
        %3899 = vmatprep.mubr.bf16.mxu0 0
        %3900 = vmatmul.mubr.bf16.gmra.mrb[0].mxu0 %v3715
        %v3901 = vpop.f32.mrb[0].mxu0
        %v3902 = vadd.f32 0.0, %v3901
        %v3903 = vpop.f32.mrb[0].mxu0
        %v3904 = vpop.f32.mrb[0].mxu0
        %v3905 = vadd.f32 0.0, %v3904
        %v3906 = vpop.f32.mrb[0].mxu0
        %3907 = vmatprep.mubr.bf16.mxu0 0
        %3908 = vmatmul.mubr.bf16.gmra.mrb[0].mxu0 %v3718
        %v3909 = vpop.f32.mrb[0].mxu0
        %v3910 = vadd.f32 0.0, %v3909
        %v3911 = vpop.f32.mrb[0].mxu0
        %v3912 = vpop.f32.mrb[0].mxu0
        %v3913 = vadd.f32 0.0, %v3912
        %v3914 = vpop.f32.mrb[0].mxu0
        %3915 = vmatprep.mubr.bf16.mxu0 0
        %3916 = vmatmul.mubr.bf16.gmra.mrb[0].mxu0 %v3721
        %v3917 = vpop.f32.mrb[0].mxu0
        %v3918 = vadd.f32 0.0, %v3917
        %v3919 = vpop.f32.mrb[0].mxu0
        %v3920 = vpop.f32.mrb[0].mxu0
        %v3921 = vadd.f32 0.0, %v3920
        %v3922 = vpop.f32.mrb[0].mxu0
        %3923 = vmatprep.mubr.bf16.mxu0 0
        %3924 = vmatmul.mubr.bf16.gmra.mrb[0].mxu0 %v3724
        %v3925 = vpop.f32.mrb[0].mxu0
        %v3926 = vadd.f32 0.0, %v3925
        %v3927 = vpop.f32.mrb[0].mxu0
        %v3928 = vpop.f32.mrb[0].mxu0
        %v3929 = vadd.f32 0.0, %v3928
        %v3930 = vpop.f32.mrb[0].mxu0
        %3931 = vmatprep.mubr.bf16.mxu0 0
        %3932 = vmatmul.mubr.bf16.gmra.mrb[0].mxu0 %v3727
        %v3933 = vpop.f32.mrb[0].mxu0
        %v3934 = vadd.f32 0.0, %v3933
        %v3935 = vpop.f32.mrb[0].mxu0
        %v3936 = vpop.f32.mrb[0].mxu0
        %v3937 = vadd.f32 0.0, %v3936
        %v3938 = vpop.f32.mrb[0].mxu0
        %3939 = vmatprep.mubr.bf16.mxu0 0
        %3940 = vmatmul.mubr.bf16.gmra.mrb[0].mxu0 %v3730
        %v3941 = vpop.f32.mrb[0].mxu0
        %v3942 = vadd.f32 0.0, %v3941
        %v3943 = vpop.f32.mrb[0].mxu0
        %v3944 = vpop.f32.mrb[0].mxu0
        %v3945 = vadd.f32 0.0, %v3944
        %v3946 = vpop.f32.mrb[0].mxu0
        %3947 = vmatprep.mubr.bf16.mxu0 0
        %3948 = vmatmul.mubr.bf16.gmra.mrb[0].mxu0 %v3733
        %v3949 = vpop.f32.mrb[0].mxu0
        %v3950 = vadd.f32 0.0, %v3949
        %v3951 = vpop.f32.mrb[0].mxu0
        %v3952 = vpop.f32.mrb[0].mxu0
        %v3953 = vadd.f32 0.0, %v3952
        %v3954 = vpop.f32.mrb[0].mxu0
        %3955 = vmatprep.mubr.bf16.mxu0 0
        %3956 = vmatmul.mubr.bf16.gmra.mrb[0].mxu0 %v3736
        %v3957 = vpop.f32.mrb[0].mxu0
        %v3958 = vadd.f32 0.0, %v3957
        %v3959 = vpop.f32.mrb[0].mxu0
        %v3960 = vpop.f32.mrb[0].mxu0
        %v3961 = vadd.f32 0.0, %v3960
        %v3962 = vpop.f32.mrb[0].mxu0
        %3963 = vmatprep.mubr.bf16.mxu0 0
        %3964 = vmatmul.mubr.bf16.gmra.mrb[0].mxu0 %v3739
        %v3965 = vpop.f32.mrb[0].mxu0
        %v3966 = vadd.f32 0.0, %v3965
        %v3967 = vpop.f32.mrb[0].mxu0
        %v3968 = vpop.f32.mrb[0].mxu0
        %v3969 = vadd.f32 0.0, %v3968
        %v3970 = vpop.f32.mrb[0].mxu0
        %3971 = vmatprep.mubr.bf16.mxu0 0
        %3972 = vmatmul.mubr.bf16.gmra.mrb[0].mxu0 %v3742
        %v3973 = vpop.f32.mrb[0].mxu0
        %v3974 = vadd.f32 0.0, %v3973
        %v3975 = vpop.f32.mrb[0].mxu0
        %v3976 = vpop.f32.mrb[0].mxu0
        %v3977 = vadd.f32 0.0, %v3976
        %v3978 = vpop.f32.mrb[0].mxu0
        %3979 = vmatprep.mubr.bf16.mxu0 0
        %3980 = vmatmul.mubr.bf16.gmra.mrb[0].mxu0 %v3745
        %v3981 = vpop.f32.mrb[0].mxu0
        %v3982 = vadd.f32 0.0, %v3981
        %v3983 = vpop.f32.mrb[0].mxu0
        %v3984 = vpop.f32.mrb[0].mxu0
        %v3985 = vadd.f32 0.0, %v3984
        %v3986 = vpop.f32.mrb[0].mxu0
        %3987 = vdwg.mxu0
        %v3988 = vadd.f32 %v3618, %v3862
        %v3989 = vadd.f32 %v3619, %v3865
        %v3990 = vadd.f32 %v3620, %v3870
        %v3991 = vadd.f32 %v3621, %v3873
        %v3992 = vadd.f32 %v3622, %v3878
        %v3993 = vadd.f32 %v3623, %v3881
        %v3994 = vadd.f32 %v3624, %v3886
        %v3995 = vadd.f32 %v3625, %v3889
        %v3996 = vadd.f32 %v3626, %v3894
        %v3997 = vadd.f32 %v3627, %v3897
        %v3998 = vadd.f32 %v3628, %v3902
        %v3999 = vadd.f32 %v3629, %v3905
        %v4000 = vadd.f32 %v3630, %v3910
        %v4001 = vadd.f32 %v3631, %v3913
        %v4002 = vadd.f32 %v3632, %v3918
        %v4003 = vadd.f32 %v3633, %v3921
        %v4004 = vadd.f32 %v3634, %v3926
        %v4005 = vadd.f32 %v3635, %v3929
        %v4006 = vadd.f32 %v3636, %v3934
        %v4007 = vadd.f32 %v3637, %v3937
        %v4008 = vadd.f32 %v3638, %v3942
        %v4009 = vadd.f32 %v3639, %v3945
        %v4010 = vadd.f32 %v3640, %v3950
        %v4011 = vadd.f32 %v3641, %v3953
        %v4012 = vadd.f32 %v3642, %v3958
        %v4013 = vadd.f32 %v3643, %v3961
        %v4014 = vadd.f32 %v3644, %v3966
        %v4015 = vadd.f32 %v3645, %v3969
        %v4016 = vadd.f32 %v3646, %v3974
        %v4017 = vadd.f32 %v3647, %v3977
        %v4018 = vadd.f32 %v3648, %v3982
        %v4019 = vadd.f32 %v3649, %v3985
        %s4020 = scalar_lea.vmem [#allocation2], 32
        %v4021 = vld [vmem:[%s4020] sm:$0xff]
        %v4022 = vld [vmem:[%s4020 + $0x10] sm:$0xff]
        %v4023 = vld [vmem:[%s4020 + $0x20] sm:$0xff]
        %v4024 = vld [vmem:[%s4020 + $0x30] sm:$0xff]
        %v4025 = vld [vmem:[%s4020 + $0x40] sm:$0xff]
        %v4026 = vld [vmem:[%s4020 + $0x50] sm:$0xff]
        %v4027 = vld [vmem:[%s4020 + $0x60] sm:$0xff]
        %v4028 = vld [vmem:[%s4020 + $0x70] sm:$0xff]
        %v4029 = vld [vmem:[%s4020 + $0x80] sm:$0xff]
        %v4030 = vld [vmem:[%s4020 + $0x90] sm:$0xff]
        %v4031 = vld [vmem:[%s4020 + $0xa0] sm:$0xff]
        %v4032 = vld [vmem:[%s4020 + $0xb0] sm:$0xff]
        %v4033 = vld [vmem:[%s4020 + $0xc0] sm:$0xff]
        %v4034 = vld [vmem:[%s4020 + $0xd0] sm:$0xff]
        %v4035 = vld [vmem:[%s4020 + $0xe0] sm:$0xff]
        %v4036 = vld [vmem:[%s4020 + $0xf0] sm:$0xff]
        %s4037 = scalar_lea.vmem [#allocation3], 384
        %v4038 = vld [vmem:[%s4037] sm:$0xf]
        %v4039 = vld [vmem:[%s4037 + $0x4] sm:$0xf]
        %v4040 = vld [vmem:[%s4037 + $0x8] sm:$0xf]
        %v4041 = vld [vmem:[%s4037 + $0xc] sm:$0xf]
        %v4042 = vld [vmem:[%s4037 + $0x10] sm:$0xf]
        %v4043 = vld [vmem:[%s4037 + $0x14] sm:$0xf]
        %v4044 = vld [vmem:[%s4037 + $0x18] sm:$0xf]
        %v4045 = vld [vmem:[%s4037 + $0x1c] sm:$0xf]
        %v4046 = vld [vmem:[%s4037 + $0x20] sm:$0xf]
        %v4047 = vld [vmem:[%s4037 + $0x24] sm:$0xf]
        %v4048 = vld [vmem:[%s4037 + $0x28] sm:$0xf]
        %v4049 = vld [vmem:[%s4037 + $0x2c] sm:$0xf]
        %v4050 = vld [vmem:[%s4037 + $0x30] sm:$0xf]
        %v4051 = vld [vmem:[%s4037 + $0x34] sm:$0xf]
        %v4052 = vld [vmem:[%s4037 + $0x38] sm:$0xf]
        %v4053 = vld [vmem:[%s4037 + $0x3c] sm:$0xf]
        %v4070 = vunpack.c.l.b16 %v4038
        %v4071 = vunpack.c.l.b16 %v4039
        %v4072 = vunpack.c.l.b16 %v4040
        %v4073 = vunpack.c.l.b16 %v4041
        %v4074 = vunpack.c.l.b16 %v4042
        %v4075 = vunpack.c.l.b16 %v4043
        %v4076 = vunpack.c.l.b16 %v4044
        %v4077 = vunpack.c.l.b16 %v4045
        %v4078 = vunpack.c.l.b16 %v4046
        %v4079 = vunpack.c.l.b16 %v4047
        %v4080 = vunpack.c.l.b16 %v4048
        %v4081 = vunpack.c.l.b16 %v4049
        %v4082 = vunpack.c.l.b16 %v4050
        %v4083 = vunpack.c.l.b16 %v4051
        %v4084 = vunpack.c.l.b16 %v4052
        %v4085 = vunpack.c.l.b16 %v4053
        %v4086 = vpack.c.b16 %v4071, %v4070
        %v4087 = vpack.c.b16 %v4073, %v4072
        %v4088 = vpack.c.b16 %v4075, %v4074
        %v4089 = vpack.c.b16 %v4077, %v4076
        %v4090 = vpack.c.b16 %v4079, %v4078
        %v4091 = vpack.c.b16 %v4081, %v4080
        %v4092 = vpack.c.b16 %v4083, %v4082
        %v4093 = vpack.c.b16 %v4085, %v4084
        %4102 = vmatprep.subr.bf16.mxu0 0
        %4103 = vmatpush1.bf16.msra.mxu0 %v4086
        %4104 = vmatprep.subr.bf16.mxu0 0
        %4105 = vmatpush1.bf16.msra.mxu0 %v4087
        %4106 = vmatprep.subr.bf16.mxu0 0
        %4107 = vmatpush1.bf16.msra.mxu0 %v4088
        %4108 = vmatprep.subr.bf16.mxu0 0
        %4109 = vmatpush1.bf16.msra.mxu0 %v4089
        %4110 = vmatprep.subr.bf16.mxu0 0
        %4111 = vmatpush1.bf16.msra.mxu0 %v4090
        %4112 = vmatprep.subr.bf16.mxu0 0
        %4113 = vmatpush1.bf16.msra.mxu0 %v4091
        %4114 = vmatprep.subr.bf16.mxu0 0
        %4115 = vmatpush1.bf16.msra.mxu0 %v4092
        %4116 = vmatprep.subr.bf16.mxu0 0
        %4117 = vmatpush1.bf16.msra.mxu0 %v4093
        %4118 = vmatprep.subr.bf16.mxu0 0
        %4119 = vmatpush1.bf16.msra.mxu0 0
        %4120 = vmatprep.subr.bf16.mxu0 0
        %4121 = vmatpush1.bf16.msra.mxu0 0
        %4122 = vmatprep.subr.bf16.mxu0 0
        %4123 = vmatpush1.bf16.msra.mxu0 0
        %4124 = vmatprep.subr.bf16.mxu0 0
        %4125 = vmatpush1.bf16.msra.mxu0 0
        %4126 = vmatprep.subr.bf16.mxu0 0
        %4127 = vmatpush1.bf16.msra.mxu0 0
        %4128 = vmatprep.subr.bf16.mxu0 0
        %4129 = vmatpush1.bf16.msra.mxu0 0
        %4130 = vmatprep.subr.bf16.mxu0 0
        %4131 = vmatpush1.bf16.msra.mxu0 0
        %4132 = vmatprep.subr.bf16.mxu0 0
        %4133 = vmatpush1.bf16.msra.mxu0 0
        %4134 = vmatprep.mubr.bf16.mxu0 0
        %4135 = vmatmul.mubr.bf16.gmra.mrb[0].mxu0 %v4021
        %v4136 = vpop.f32.mrb[0].mxu0
        %v4137 = vadd.f32 0.0, %v4136
        %v4138 = vpop.f32.mrb[0].mxu0
        %v4139 = vpop.f32.mrb[0].mxu0
        %v4140 = vadd.f32 0.0, %v4139
        %v4141 = vpop.f32.mrb[0].mxu0
        %4142 = vmatprep.mubr.bf16.mxu0 0
        %4143 = vmatmul.mubr.bf16.gmra.mrb[0].mxu0 %v4022
        %v4144 = vpop.f32.mrb[0].mxu0
        %v4145 = vadd.f32 0.0, %v4144
        %v4146 = vpop.f32.mrb[0].mxu0
        %v4147 = vpop.f32.mrb[0].mxu0
        %v4148 = vadd.f32 0.0, %v4147
        %v4149 = vpop.f32.mrb[0].mxu0
        %4150 = vmatprep.mubr.bf16.mxu0 0
        %4151 = vmatmul.mubr.bf16.gmra.mrb[0].mxu0 %v4023
        %v4152 = vpop.f32.mrb[0].mxu0
        %v4153 = vadd.f32 0.0, %v4152
        %v4154 = vpop.f32.mrb[0].mxu0
        %v4155 = vpop.f32.mrb[0].mxu0
        %v4156 = vadd.f32 0.0, %v4155
        %v4157 = vpop.f32.mrb[0].mxu0
        %4158 = vmatprep.mubr.bf16.mxu0 0
        %4159 = vmatmul.mubr.bf16.gmra.mrb[0].mxu0 %v4024
        %v4160 = vpop.f32.mrb[0].mxu0
        %v4161 = vadd.f32 0.0, %v4160
        %v4162 = vpop.f32.mrb[0].mxu0
        %v4163 = vpop.f32.mrb[0].mxu0
        %v4164 = vadd.f32 0.0, %v4163
        %v4165 = vpop.f32.mrb[0].mxu0
        %4166 = vmatprep.mubr.bf16.mxu0 0
        %4167 = vmatmul.mubr.bf16.gmra.mrb[0].mxu0 %v4025
        %v4168 = vpop.f32.mrb[0].mxu0
        %v4169 = vadd.f32 0.0, %v4168
        %v4170 = vpop.f32.mrb[0].mxu0
        %v4171 = vpop.f32.mrb[0].mxu0
        %v4172 = vadd.f32 0.0, %v4171
        %v4173 = vpop.f32.mrb[0].mxu0
        %4174 = vmatprep.mubr.bf16.mxu0 0
        %4175 = vmatmul.mubr.bf16.gmra.mrb[0].mxu0 %v4026
        %v4176 = vpop.f32.mrb[0].mxu0
        %v4177 = vadd.f32 0.0, %v4176
        %v4178 = vpop.f32.mrb[0].mxu0
        %v4179 = vpop.f32.mrb[0].mxu0
        %v4180 = vadd.f32 0.0, %v4179
        %v4181 = vpop.f32.mrb[0].mxu0
        %4182 = vmatprep.mubr.bf16.mxu0 0
        %4183 = vmatmul.mubr.bf16.gmra.mrb[0].mxu0 %v4027
        %v4184 = vpop.f32.mrb[0].mxu0
        %v4185 = vadd.f32 0.0, %v4184
        %v4186 = vpop.f32.mrb[0].mxu0
        %v4187 = vpop.f32.mrb[0].mxu0
        %v4188 = vadd.f32 0.0, %v4187
        %v4189 = vpop.f32.mrb[0].mxu0
        %4190 = vmatprep.mubr.bf16.mxu0 0
        %4191 = vmatmul.mubr.bf16.gmra.mrb[0].mxu0 %v4028
        %v4192 = vpop.f32.mrb[0].mxu0
        %v4193 = vadd.f32 0.0, %v4192
        %v4194 = vpop.f32.mrb[0].mxu0
        %v4195 = vpop.f32.mrb[0].mxu0
        %v4196 = vadd.f32 0.0, %v4195
        %v4197 = vpop.f32.mrb[0].mxu0
        %4198 = vmatprep.mubr.bf16.mxu0 0
        %4199 = vmatmul.mubr.bf16.gmra.mrb[0].mxu0 %v4029
        %v4200 = vpop.f32.mrb[0].mxu0
        %v4201 = vadd.f32 0.0, %v4200
        %v4202 = vpop.f32.mrb[0].mxu0
        %v4203 = vpop.f32.mrb[0].mxu0
        %v4204 = vadd.f32 0.0, %v4203
        %v4205 = vpop.f32.mrb[0].mxu0
        %4206 = vmatprep.mubr.bf16.mxu0 0
        %4207 = vmatmul.mubr.bf16.gmra.mrb[0].mxu0 %v4030
        %v4208 = vpop.f32.mrb[0].mxu0
        %v4209 = vadd.f32 0.0, %v4208
        %v4210 = vpop.f32.mrb[0].mxu0
        %v4211 = vpop.f32.mrb[0].mxu0
        %v4212 = vadd.f32 0.0, %v4211
        %v4213 = vpop.f32.mrb[0].mxu0
        %4214 = vmatprep.mubr.bf16.mxu0 0
        %4215 = vmatmul.mubr.bf16.gmra.mrb[0].mxu0 %v4031
        %v4216 = vpop.f32.mrb[0].mxu0
        %v4217 = vadd.f32 0.0, %v4216
        %v4218 = vpop.f32.mrb[0].mxu0
        %v4219 = vpop.f32.mrb[0].mxu0
        %v4220 = vadd.f32 0.0, %v4219
        %v4221 = vpop.f32.mrb[0].mxu0
        %4222 = vmatprep.mubr.bf16.mxu0 0
        %4223 = vmatmul.mubr.bf16.gmra.mrb[0].mxu0 %v4032
        %v4224 = vpop.f32.mrb[0].mxu0
        %v4225 = vadd.f32 0.0, %v4224
        %v4226 = vpop.f32.mrb[0].mxu0
        %v4227 = vpop.f32.mrb[0].mxu0
        %v4228 = vadd.f32 0.0, %v4227
        %v4229 = vpop.f32.mrb[0].mxu0
        %4230 = vmatprep.mubr.bf16.mxu0 0
        %4231 = vmatmul.mubr.bf16.gmra.mrb[0].mxu0 %v4033
        %v4232 = vpop.f32.mrb[0].mxu0
        %v4233 = vadd.f32 0.0, %v4232
        %v4234 = vpop.f32.mrb[0].mxu0
        %v4235 = vpop.f32.mrb[0].mxu0
        %v4236 = vadd.f32 0.0, %v4235
        %v4237 = vpop.f32.mrb[0].mxu0
        %4238 = vmatprep.mubr.bf16.mxu0 0
        %4239 = vmatmul.mubr.bf16.gmra.mrb[0].mxu0 %v4034
        %v4240 = vpop.f32.mrb[0].mxu0
        %v4241 = vadd.f32 0.0, %v4240
        %v4242 = vpop.f32.mrb[0].mxu0
        %v4243 = vpop.f32.mrb[0].mxu0
        %v4244 = vadd.f32 0.0, %v4243
        %v4245 = vpop.f32.mrb[0].mxu0
        %4246 = vmatprep.mubr.bf16.mxu0 0
        %4247 = vmatmul.mubr.bf16.gmra.mrb[0].mxu0 %v4035
        %v4248 = vpop.f32.mrb[0].mxu0
        %v4249 = vadd.f32 0.0, %v4248
        %v4250 = vpop.f32.mrb[0].mxu0
        %v4251 = vpop.f32.mrb[0].mxu0
        %v4252 = vadd.f32 0.0, %v4251
        %v4253 = vpop.f32.mrb[0].mxu0
        %4254 = vmatprep.mubr.bf16.mxu0 0
        %4255 = vmatmul.mubr.bf16.gmra.mrb[0].mxu0 %v4036
        %v4256 = vpop.f32.mrb[0].mxu0
        %v4257 = vadd.f32 0.0, %v4256
        %v4258 = vpop.f32.mrb[0].mxu0
        %v4259 = vpop.f32.mrb[0].mxu0
        %v4260 = vadd.f32 0.0, %v4259
        %v4261 = vpop.f32.mrb[0].mxu0
        %4262 = vdwg.mxu0
        %v4263 = vadd.f32 %v3988, %v4137
        %v4264 = vadd.f32 %v3989, %v4140
        %v4265 = vadd.f32 %v3990, %v4145
        %v4266 = vadd.f32 %v3991, %v4148
        %v4267 = vadd.f32 %v3992, %v4153
        %v4268 = vadd.f32 %v3993, %v4156
        %v4269 = vadd.f32 %v3994, %v4161
        %v4270 = vadd.f32 %v3995, %v4164
        %v4271 = vadd.f32 %v3996, %v4169
        %v4272 = vadd.f32 %v3997, %v4172
        %v4273 = vadd.f32 %v3998, %v4177
        %v4274 = vadd.f32 %v3999, %v4180
        %v4275 = vadd.f32 %v4000, %v4185
        %v4276 = vadd.f32 %v4001, %v4188
        %v4277 = vadd.f32 %v4002, %v4193
        %v4278 = vadd.f32 %v4003, %v4196
        %v4279 = vadd.f32 %v4004, %v4201
        %v4280 = vadd.f32 %v4005, %v4204
        %v4281 = vadd.f32 %v4006, %v4209
        %v4282 = vadd.f32 %v4007, %v4212
        %v4283 = vadd.f32 %v4008, %v4217
        %v4284 = vadd.f32 %v4009, %v4220
        %v4285 = vadd.f32 %v4010, %v4225
        %v4286 = vadd.f32 %v4011, %v4228
        %v4287 = vadd.f32 %v4012, %v4233
        %v4288 = vadd.f32 %v4013, %v4236
        %v4289 = vadd.f32 %v4014, %v4241
        %v4290 = vadd.f32 %v4015, %v4244
        %v4291 = vadd.f32 %v4016, %v4249
        %v4292 = vadd.f32 %v4017, %v4252
        %v4293 = vadd.f32 %v4018, %v4257
        %v4294 = vadd.f32 %v4019, %v4260
        %v4295 = vld [vmem:[%s4020] sm:$0xff]
        %v4296 = vld [vmem:[%s4020 + $0x8] sm:$0x1]
        %v4297 = vld [vmem:[%s4020 + $0x10] sm:$0xff]
        %v4298 = vld [vmem:[%s4020 + $0x18] sm:$0x1]
        %v4299 = vld [vmem:[%s4020 + $0x20] sm:$0xff]
        %v4300 = vld [vmem:[%s4020 + $0x28] sm:$0x1]
        %v4301 = vld [vmem:[%s4020 + $0x30] sm:$0xff]
        %v4302 = vld [vmem:[%s4020 + $0x38] sm:$0x1]
        %v4303 = vld [vmem:[%s4020 + $0x40] sm:$0xff]
        %v4304 = vld [vmem:[%s4020 + $0x48] sm:$0x1]
        %v4305 = vld [vmem:[%s4020 + $0x50] sm:$0xff]
        %v4306 = vld [vmem:[%s4020 + $0x58] sm:$0x1]
        %v4307 = vld [vmem:[%s4020 + $0x60] sm:$0xff]
        %v4308 = vld [vmem:[%s4020 + $0x68] sm:$0x1]
        %v4309 = vld [vmem:[%s4020 + $0x70] sm:$0xff]
        %v4310 = vld [vmem:[%s4020 + $0x78] sm:$0x1]
        %v4311 = vld [vmem:[%s4020 + $0x80] sm:$0xff]
        %v4312 = vld [vmem:[%s4020 + $0x88] sm:$0x1]
        %v4313 = vld [vmem:[%s4020 + $0x90] sm:$0xff]
        %v4314 = vld [vmem:[%s4020 + $0x98] sm:$0x1]
        %v4315 = vld [vmem:[%s4020 + $0xa0] sm:$0xff]
        %v4316 = vld [vmem:[%s4020 + $0xa8] sm:$0x1]
        %v4317 = vld [vmem:[%s4020 + $0xb0] sm:$0xff]
        %v4318 = vld [vmem:[%s4020 + $0xb8] sm:$0x1]
        %v4319 = vld [vmem:[%s4020 + $0xc0] sm:$0xff]
        %v4320 = vld [vmem:[%s4020 + $0xc8] sm:$0x1]
        %v4321 = vld [vmem:[%s4020 + $0xd0] sm:$0xff]
        %v4322 = vld [vmem:[%s4020 + $0xd8] sm:$0x1]
        %v4323 = vld [vmem:[%s4020 + $0xe0] sm:$0xff]
        %v4324 = vld [vmem:[%s4020 + $0xe8] sm:$0x1]
        %v4325 = vld [vmem:[%s4020 + $0xf0] sm:$0xff]
        %v4326 = vld [vmem:[%s4020 + $0xf8] sm:$0x1]
        %v4328 = vshrl.u32 %v4295, 16
        %v4330 = vshll.u32 %v4295, 16
        %v4332 = vrot.slane %v4330, 1
        %v4333 = vor.u32 %v4328, %v4332
        %v4335 = vshll.u32 %v4296, 16
        %v4337 = vrot.slane %v4335, 1
        %v4338 = vsel %vm1863, %v4333, %v4337
        %v4340 = vshrl.u32 %v4297, 16
        %v4342 = vshll.u32 %v4297, 16
        %v4344 = vrot.slane %v4342, 1
        %v4345 = vor.u32 %v4340, %v4344
        %v4347 = vshll.u32 %v4298, 16
        %v4349 = vrot.slane %v4347, 1
        %v4350 = vsel %vm1863, %v4345, %v4349
        %v4352 = vshrl.u32 %v4299, 16
        %v4354 = vshll.u32 %v4299, 16
        %v4356 = vrot.slane %v4354, 1
        %v4357 = vor.u32 %v4352, %v4356
        %v4359 = vshll.u32 %v4300, 16
        %v4361 = vrot.slane %v4359, 1
        %v4362 = vsel %vm1863, %v4357, %v4361
        %v4364 = vshrl.u32 %v4301, 16
        %v4366 = vshll.u32 %v4301, 16
        %v4368 = vrot.slane %v4366, 1
        %v4369 = vor.u32 %v4364, %v4368
        %v4371 = vshll.u32 %v4302, 16
        %v4373 = vrot.slane %v4371, 1
        %v4374 = vsel %vm1863, %v4369, %v4373
        %v4376 = vshrl.u32 %v4303, 16
        %v4378 = vshll.u32 %v4303, 16
        %v4380 = vrot.slane %v4378, 1
        %v4381 = vor.u32 %v4376, %v4380
        %v4383 = vshll.u32 %v4304, 16
        %v4385 = vrot.slane %v4383, 1
        %v4386 = vsel %vm1863, %v4381, %v4385
        %v4388 = vshrl.u32 %v4305, 16
        %v4390 = vshll.u32 %v4305, 16
        %v4392 = vrot.slane %v4390, 1
        %v4393 = vor.u32 %v4388, %v4392
        %v4395 = vshll.u32 %v4306, 16
        %v4397 = vrot.slane %v4395, 1
        %v4398 = vsel %vm1863, %v4393, %v4397
        %v4400 = vshrl.u32 %v4307, 16
        %v4402 = vshll.u32 %v4307, 16
        %v4404 = vrot.slane %v4402, 1
        %v4405 = vor.u32 %v4400, %v4404
        %v4407 = vshll.u32 %v4308, 16
        %v4409 = vrot.slane %v4407, 1
        %v4410 = vsel %vm1863, %v4405, %v4409
        %v4412 = vshrl.u32 %v4309, 16
        %v4414 = vshll.u32 %v4309, 16
        %v4416 = vrot.slane %v4414, 1
        %v4417 = vor.u32 %v4412, %v4416
        %v4419 = vshll.u32 %v4310, 16
        %v4421 = vrot.slane %v4419, 1
        %v4422 = vsel %vm1863, %v4417, %v4421
        %v4424 = vshrl.u32 %v4311, 16
        %v4426 = vshll.u32 %v4311, 16
        %v4428 = vrot.slane %v4426, 1
        %v4429 = vor.u32 %v4424, %v4428
        %v4431 = vshll.u32 %v4312, 16
        %v4433 = vrot.slane %v4431, 1
        %v4434 = vsel %vm1863, %v4429, %v4433
        %v4436 = vshrl.u32 %v4313, 16
        %v4438 = vshll.u32 %v4313, 16
        %v4440 = vrot.slane %v4438, 1
        %v4441 = vor.u32 %v4436, %v4440
        %v4443 = vshll.u32 %v4314, 16
        %v4445 = vrot.slane %v4443, 1
        %v4446 = vsel %vm1863, %v4441, %v4445
        %v4448 = vshrl.u32 %v4315, 16
        %v4450 = vshll.u32 %v4315, 16
        %v4452 = vrot.slane %v4450, 1
        %v4453 = vor.u32 %v4448, %v4452
        %v4455 = vshll.u32 %v4316, 16
        %v4457 = vrot.slane %v4455, 1
        %v4458 = vsel %vm1863, %v4453, %v4457
        %v4460 = vshrl.u32 %v4317, 16
        %v4462 = vshll.u32 %v4317, 16
        %v4464 = vrot.slane %v4462, 1
        %v4465 = vor.u32 %v4460, %v4464
        %v4467 = vshll.u32 %v4318, 16
        %v4469 = vrot.slane %v4467, 1
        %v4470 = vsel %vm1863, %v4465, %v4469
        %v4472 = vshrl.u32 %v4319, 16
        %v4474 = vshll.u32 %v4319, 16
        %v4476 = vrot.slane %v4474, 1
        %v4477 = vor.u32 %v4472, %v4476
        %v4479 = vshll.u32 %v4320, 16
        %v4481 = vrot.slane %v4479, 1
        %v4482 = vsel %vm1863, %v4477, %v4481
        %v4484 = vshrl.u32 %v4321, 16
        %v4486 = vshll.u32 %v4321, 16
        %v4488 = vrot.slane %v4486, 1
        %v4489 = vor.u32 %v4484, %v4488
        %v4491 = vshll.u32 %v4322, 16
        %v4493 = vrot.slane %v4491, 1
        %v4494 = vsel %vm1863, %v4489, %v4493
        %v4496 = vshrl.u32 %v4323, 16
        %v4498 = vshll.u32 %v4323, 16
        %v4500 = vrot.slane %v4498, 1
        %v4501 = vor.u32 %v4496, %v4500
        %v4503 = vshll.u32 %v4324, 16
        %v4505 = vrot.slane %v4503, 1
        %v4506 = vsel %vm1863, %v4501, %v4505
        %v4508 = vshrl.u32 %v4325, 16
        %v4510 = vshll.u32 %v4325, 16
        %v4512 = vrot.slane %v4510, 1
        %v4513 = vor.u32 %v4508, %v4512
        %v4515 = vshll.u32 %v4326, 16
        %v4517 = vrot.slane %v4515, 1
        %v4518 = vsel %vm1863, %v4513, %v4517
        %s4535 = scalar_lea.vmem [#allocation3], 448
        %v4536 = vld [vmem:[%s4535] sm:$0xf]
        %v4537 = vld [vmem:[%s4535 + $0x4] sm:$0xf]
        %v4538 = vld [vmem:[%s4535 + $0x8] sm:$0xf]
        %v4539 = vld [vmem:[%s4535 + $0xc] sm:$0xf]
        %v4540 = vld [vmem:[%s4535 + $0x10] sm:$0xf]
        %v4541 = vld [vmem:[%s4535 + $0x14] sm:$0xf]
        %v4542 = vld [vmem:[%s4535 + $0x18] sm:$0xf]
        %v4543 = vld [vmem:[%s4535 + $0x1c] sm:$0xf]
        %v4544 = vld [vmem:[%s4535 + $0x20] sm:$0xf]
        %v4545 = vld [vmem:[%s4535 + $0x24] sm:$0xf]
        %v4546 = vld [vmem:[%s4535 + $0x28] sm:$0xf]
        %v4547 = vld [vmem:[%s4535 + $0x2c] sm:$0xf]
        %v4548 = vld [vmem:[%s4535 + $0x30] sm:$0xf]
        %v4549 = vld [vmem:[%s4535 + $0x34] sm:$0xf]
        %v4550 = vld [vmem:[%s4535 + $0x38] sm:$0xf]
        %v4551 = vld [vmem:[%s4535 + $0x3c] sm:$0xf]
        %v4568 = vunpack.c.l.b16 %v4536
        %v4569 = vunpack.c.l.b16 %v4537
        %v4570 = vunpack.c.l.b16 %v4538
        %v4571 = vunpack.c.l.b16 %v4539
        %v4572 = vunpack.c.l.b16 %v4540
        %v4573 = vunpack.c.l.b16 %v4541
        %v4574 = vunpack.c.l.b16 %v4542
        %v4575 = vunpack.c.l.b16 %v4543
        %v4576 = vunpack.c.l.b16 %v4544
        %v4577 = vunpack.c.l.b16 %v4545
        %v4578 = vunpack.c.l.b16 %v4546
        %v4579 = vunpack.c.l.b16 %v4547
        %v4580 = vunpack.c.l.b16 %v4548
        %v4581 = vunpack.c.l.b16 %v4549
        %v4582 = vunpack.c.l.b16 %v4550
        %v4583 = vunpack.c.l.b16 %v4551
        %v4584 = vpack.c.b16 %v4569, %v4568
        %v4585 = vpack.c.b16 %v4571, %v4570
        %v4586 = vpack.c.b16 %v4573, %v4572
        %v4587 = vpack.c.b16 %v4575, %v4574
        %v4588 = vpack.c.b16 %v4577, %v4576
        %v4589 = vpack.c.b16 %v4579, %v4578
        %v4590 = vpack.c.b16 %v4581, %v4580
        %v4591 = vpack.c.b16 %v4583, %v4582
        %4600 = vmatprep.subr.bf16.mxu0 0
        %4601 = vmatpush1.bf16.msra.mxu0 %v4584
        %4602 = vmatprep.subr.bf16.mxu0 0
        %4603 = vmatpush1.bf16.msra.mxu0 %v4585
        %4604 = vmatprep.subr.bf16.mxu0 0
        %4605 = vmatpush1.bf16.msra.mxu0 %v4586
        %4606 = vmatprep.subr.bf16.mxu0 0
        %4607 = vmatpush1.bf16.msra.mxu0 %v4587
        %4608 = vmatprep.subr.bf16.mxu0 0
        %4609 = vmatpush1.bf16.msra.mxu0 %v4588
        %4610 = vmatprep.subr.bf16.mxu0 0
        %4611 = vmatpush1.bf16.msra.mxu0 %v4589
        %4612 = vmatprep.subr.bf16.mxu0 0
        %4613 = vmatpush1.bf16.msra.mxu0 %v4590
        %4614 = vmatprep.subr.bf16.mxu0 0
        %4615 = vmatpush1.bf16.msra.mxu0 %v4591
        %4616 = vmatprep.subr.bf16.mxu0 0
        %4617 = vmatpush1.bf16.msra.mxu0 0
        %4618 = vmatprep.subr.bf16.mxu0 0
        %4619 = vmatpush1.bf16.msra.mxu0 0
        %4620 = vmatprep.subr.bf16.mxu0 0
        %4621 = vmatpush1.bf16.msra.mxu0 0
        %4622 = vmatprep.subr.bf16.mxu0 0
        %4623 = vmatpush1.bf16.msra.mxu0 0
        %4624 = vmatprep.subr.bf16.mxu0 0
        %4625 = vmatpush1.bf16.msra.mxu0 0
        %4626 = vmatprep.subr.bf16.mxu0 0
        %4627 = vmatpush1.bf16.msra.mxu0 0
        %4628 = vmatprep.subr.bf16.mxu0 0
        %4629 = vmatpush1.bf16.msra.mxu0 0
        %4630 = vmatprep.subr.bf16.mxu0 0
        %4631 = vmatpush1.bf16.msra.mxu0 0
        %4632 = vmatprep.mubr.bf16.mxu0 0
        %4633 = vmatmul.mubr.bf16.gmra.mrb[0].mxu0 %v4338
        %v4634 = vpop.f32.mrb[0].mxu0
        %v4635 = vadd.f32 0.0, %v4634
        %v4636 = vpop.f32.mrb[0].mxu0
        %v4637 = vpop.f32.mrb[0].mxu0
        %v4638 = vadd.f32 0.0, %v4637
        %v4639 = vpop.f32.mrb[0].mxu0
        %4640 = vmatprep.mubr.bf16.mxu0 0
        %4641 = vmatmul.mubr.bf16.gmra.mrb[0].mxu0 %v4350
        %v4642 = vpop.f32.mrb[0].mxu0
        %v4643 = vadd.f32 0.0, %v4642
        %v4644 = vpop.f32.mrb[0].mxu0
        %v4645 = vpop.f32.mrb[0].mxu0
        %v4646 = vadd.f32 0.0, %v4645
        %v4647 = vpop.f32.mrb[0].mxu0
        %4648 = vmatprep.mubr.bf16.mxu0 0
        %4649 = vmatmul.mubr.bf16.gmra.mrb[0].mxu0 %v4362
        %v4650 = vpop.f32.mrb[0].mxu0
        %v4651 = vadd.f32 0.0, %v4650
        %v4652 = vpop.f32.mrb[0].mxu0
        %v4653 = vpop.f32.mrb[0].mxu0
        %v4654 = vadd.f32 0.0, %v4653
        %v4655 = vpop.f32.mrb[0].mxu0
        %4656 = vmatprep.mubr.bf16.mxu0 0
        %4657 = vmatmul.mubr.bf16.gmra.mrb[0].mxu0 %v4374
        %v4658 = vpop.f32.mrb[0].mxu0
        %v4659 = vadd.f32 0.0, %v4658
        %v4660 = vpop.f32.mrb[0].mxu0
        %v4661 = vpop.f32.mrb[0].mxu0
        %v4662 = vadd.f32 0.0, %v4661
        %v4663 = vpop.f32.mrb[0].mxu0
        %4664 = vmatprep.mubr.bf16.mxu0 0
        %4665 = vmatmul.mubr.bf16.gmra.mrb[0].mxu0 %v4386
        %v4666 = vpop.f32.mrb[0].mxu0
        %v4667 = vadd.f32 0.0, %v4666
        %v4668 = vpop.f32.mrb[0].mxu0
        %v4669 = vpop.f32.mrb[0].mxu0
        %v4670 = vadd.f32 0.0, %v4669
        %v4671 = vpop.f32.mrb[0].mxu0
        %4672 = vmatprep.mubr.bf16.mxu0 0
        %4673 = vmatmul.mubr.bf16.gmra.mrb[0].mxu0 %v4398
        %v4674 = vpop.f32.mrb[0].mxu0
        %v4675 = vadd.f32 0.0, %v4674
        %v4676 = vpop.f32.mrb[0].mxu0
        %v4677 = vpop.f32.mrb[0].mxu0
        %v4678 = vadd.f32 0.0, %v4677
        %v4679 = vpop.f32.mrb[0].mxu0
        %4680 = vmatprep.mubr.bf16.mxu0 0
        %4681 = vmatmul.mubr.bf16.gmra.mrb[0].mxu0 %v4410
        %v4682 = vpop.f32.mrb[0].mxu0
        %v4683 = vadd.f32 0.0, %v4682
        %v4684 = vpop.f32.mrb[0].mxu0
        %v4685 = vpop.f32.mrb[0].mxu0
        %v4686 = vadd.f32 0.0, %v4685
        %v4687 = vpop.f32.mrb[0].mxu0
        %4688 = vmatprep.mubr.bf16.mxu0 0
        %4689 = vmatmul.mubr.bf16.gmra.mrb[0].mxu0 %v4422
        %v4690 = vpop.f32.mrb[0].mxu0
        %v4691 = vadd.f32 0.0, %v4690
        %v4692 = vpop.f32.mrb[0].mxu0
        %v4693 = vpop.f32.mrb[0].mxu0
        %v4694 = vadd.f32 0.0, %v4693
        %v4695 = vpop.f32.mrb[0].mxu0
        %4696 = vmatprep.mubr.bf16.mxu0 0
        %4697 = vmatmul.mubr.bf16.gmra.mrb[0].mxu0 %v4434
        %v4698 = vpop.f32.mrb[0].mxu0
        %v4699 = vadd.f32 0.0, %v4698
        %v4700 = vpop.f32.mrb[0].mxu0
        %v4701 = vpop.f32.mrb[0].mxu0
        %v4702 = vadd.f32 0.0, %v4701
        %v4703 = vpop.f32.mrb[0].mxu0
        %4704 = vmatprep.mubr.bf16.mxu0 0
        %4705 = vmatmul.mubr.bf16.gmra.mrb[0].mxu0 %v4446
        %v4706 = vpop.f32.mrb[0].mxu0
        %v4707 = vadd.f32 0.0, %v4706
        %v4708 = vpop.f32.mrb[0].mxu0
        %v4709 = vpop.f32.mrb[0].mxu0
        %v4710 = vadd.f32 0.0, %v4709
        %v4711 = vpop.f32.mrb[0].mxu0
        %4712 = vmatprep.mubr.bf16.mxu0 0
        %4713 = vmatmul.mubr.bf16.gmra.mrb[0].mxu0 %v4458
        %v4714 = vpop.f32.mrb[0].mxu0
        %v4715 = vadd.f32 0.0, %v4714
        %v4716 = vpop.f32.mrb[0].mxu0
        %v4717 = vpop.f32.mrb[0].mxu0
        %v4718 = vadd.f32 0.0, %v4717
        %v4719 = vpop.f32.mrb[0].mxu0
        %4720 = vmatprep.mubr.bf16.mxu0 0
        %4721 = vmatmul.mubr.bf16.gmra.mrb[0].mxu0 %v4470
        %v4722 = vpop.f32.mrb[0].mxu0
        %v4723 = vadd.f32 0.0, %v4722
        %v4724 = vpop.f32.mrb[0].mxu0
        %v4725 = vpop.f32.mrb[0].mxu0
        %v4726 = vadd.f32 0.0, %v4725
        %v4727 = vpop.f32.mrb[0].mxu0
        %4728 = vmatprep.mubr.bf16.mxu0 0
        %4729 = vmatmul.mubr.bf16.gmra.mrb[0].mxu0 %v4482
        %v4730 = vpop.f32.mrb[0].mxu0
        %v4731 = vadd.f32 0.0, %v4730
        %v4732 = vpop.f32.mrb[0].mxu0
        %v4733 = vpop.f32.mrb[0].mxu0
        %v4734 = vadd.f32 0.0, %v4733
        %v4735 = vpop.f32.mrb[0].mxu0
        %4736 = vmatprep.mubr.bf16.mxu0 0
        %4737 = vmatmul.mubr.bf16.gmra.mrb[0].mxu0 %v4494
        %v4738 = vpop.f32.mrb[0].mxu0
        %v4739 = vadd.f32 0.0, %v4738
        %v4740 = vpop.f32.mrb[0].mxu0
        %v4741 = vpop.f32.mrb[0].mxu0
        %v4742 = vadd.f32 0.0, %v4741
        %v4743 = vpop.f32.mrb[0].mxu0
        %4744 = vmatprep.mubr.bf16.mxu0 0
        %4745 = vmatmul.mubr.bf16.gmra.mrb[0].mxu0 %v4506
        %v4746 = vpop.f32.mrb[0].mxu0
        %v4747 = vadd.f32 0.0, %v4746
        %v4748 = vpop.f32.mrb[0].mxu0
        %v4749 = vpop.f32.mrb[0].mxu0
        %v4750 = vadd.f32 0.0, %v4749
        %v4751 = vpop.f32.mrb[0].mxu0
        %4752 = vmatprep.mubr.bf16.mxu0 0
        %4753 = vmatmul.mubr.bf16.gmra.mrb[0].mxu0 %v4518
        %v4754 = vpop.f32.mrb[0].mxu0
        %v4755 = vadd.f32 0.0, %v4754
        %v4756 = vpop.f32.mrb[0].mxu0
        %v4757 = vpop.f32.mrb[0].mxu0
        %v4758 = vadd.f32 0.0, %v4757
        %v4759 = vpop.f32.mrb[0].mxu0
        %4760 = vdwg.mxu0
        %v4761 = vadd.f32 %v4263, %v4635
        %v4762 = vadd.f32 %v4264, %v4638
        %v4763 = vadd.f32 %v4265, %v4643
        %v4764 = vadd.f32 %v4266, %v4646
        %v4765 = vadd.f32 %v4267, %v4651
        %v4766 = vadd.f32 %v4268, %v4654
        %v4767 = vadd.f32 %v4269, %v4659
        %v4768 = vadd.f32 %v4270, %v4662
        %v4769 = vadd.f32 %v4271, %v4667
        %v4770 = vadd.f32 %v4272, %v4670
        %v4771 = vadd.f32 %v4273, %v4675
        %v4772 = vadd.f32 %v4274, %v4678
        %v4773 = vadd.f32 %v4275, %v4683
        %v4774 = vadd.f32 %v4276, %v4686
        %v4775 = vadd.f32 %v4277, %v4691
        %v4776 = vadd.f32 %v4278, %v4694
        %v4777 = vadd.f32 %v4279, %v4699
        %v4778 = vadd.f32 %v4280, %v4702
        %v4779 = vadd.f32 %v4281, %v4707
        %v4780 = vadd.f32 %v4282, %v4710
        %v4781 = vadd.f32 %v4283, %v4715
        %v4782 = vadd.f32 %v4284, %v4718
        %v4783 = vadd.f32 %v4285, %v4723
        %v4784 = vadd.f32 %v4286, %v4726
        %v4785 = vadd.f32 %v4287, %v4731
        %v4786 = vadd.f32 %v4288, %v4734
        %v4787 = vadd.f32 %v4289, %v4739
        %v4788 = vadd.f32 %v4290, %v4742
        %v4789 = vadd.f32 %v4291, %v4747
        %v4790 = vadd.f32 %v4292, %v4750
        %v4791 = vadd.f32 %v4293, %v4755
        %v4792 = vadd.f32 %v4294, %v4758
        %v4793 = vld [vmem:[%s4020] sm:$0xfe]
        %v4794 = vld [vmem:[%s4020 + $0x10] sm:$0xfe]
        %v4795 = vld [vmem:[%s4020 + $0x20] sm:$0xfe]
        %v4796 = vld [vmem:[%s4020 + $0x30] sm:$0xfe]
        %v4797 = vld [vmem:[%s4020 + $0x40] sm:$0xfe]
        %v4798 = vld [vmem:[%s4020 + $0x50] sm:$0xfe]
        %v4799 = vld [vmem:[%s4020 + $0x60] sm:$0xfe]
        %v4800 = vld [vmem:[%s4020 + $0x70] sm:$0xfe]
        %v4801 = vld [vmem:[%s4020 + $0x80] sm:$0xfe]
        %v4802 = vld [vmem:[%s4020 + $0x90] sm:$0xfe]
        %v4803 = vld [vmem:[%s4020 + $0xa0] sm:$0xfe]
        %v4804 = vld [vmem:[%s4020 + $0xb0] sm:$0xfe]
        %v4805 = vld [vmem:[%s4020 + $0xc0] sm:$0xfe]
        %v4806 = vld [vmem:[%s4020 + $0xd0] sm:$0xfe]
        %v4807 = vld [vmem:[%s4020 + $0xe0] sm:$0xfe]
        %v4808 = vld [vmem:[%s4020 + $0xf0] sm:$0xfe]
        %v4841 = vrot.slane %v4793, 1
        %v4842 = vrot.slane %v4296, 1
        %v4843 = vsel %vm2555, %v4841, %v4842
        %v4844 = vrot.slane %v4794, 1
        %v4845 = vrot.slane %v4298, 1
        %v4846 = vsel %vm2555, %v4844, %v4845
        %v4847 = vrot.slane %v4795, 1
        %v4848 = vrot.slane %v4300, 1
        %v4849 = vsel %vm2555, %v4847, %v4848
        %v4850 = vrot.slane %v4796, 1
        %v4851 = vrot.slane %v4302, 1
        %v4852 = vsel %vm2555, %v4850, %v4851
        %v4853 = vrot.slane %v4797, 1
        %v4854 = vrot.slane %v4304, 1
        %v4855 = vsel %vm2555, %v4853, %v4854
        %v4856 = vrot.slane %v4798, 1
        %v4857 = vrot.slane %v4306, 1
        %v4858 = vsel %vm2555, %v4856, %v4857
        %v4859 = vrot.slane %v4799, 1
        %v4860 = vrot.slane %v4308, 1
        %v4861 = vsel %vm2555, %v4859, %v4860
        %v4862 = vrot.slane %v4800, 1
        %v4863 = vrot.slane %v4310, 1
        %v4864 = vsel %vm2555, %v4862, %v4863
        %v4865 = vrot.slane %v4801, 1
        %v4866 = vrot.slane %v4312, 1
        %v4867 = vsel %vm2555, %v4865, %v4866
        %v4868 = vrot.slane %v4802, 1
        %v4869 = vrot.slane %v4314, 1
        %v4870 = vsel %vm2555, %v4868, %v4869
        %v4871 = vrot.slane %v4803, 1
        %v4872 = vrot.slane %v4316, 1
        %v4873 = vsel %vm2555, %v4871, %v4872
        %v4874 = vrot.slane %v4804, 1
        %v4875 = vrot.slane %v4318, 1
        %v4876 = vsel %vm2555, %v4874, %v4875
        %v4877 = vrot.slane %v4805, 1
        %v4878 = vrot.slane %v4320, 1
        %v4879 = vsel %vm2555, %v4877, %v4878
        %v4880 = vrot.slane %v4806, 1
        %v4881 = vrot.slane %v4322, 1
        %v4882 = vsel %vm2555, %v4880, %v4881
        %v4883 = vrot.slane %v4807, 1
        %v4884 = vrot.slane %v4324, 1
        %v4885 = vsel %vm2555, %v4883, %v4884
        %v4886 = vrot.slane %v4808, 1
        %v4887 = vrot.slane %v4326, 1
        %v4888 = vsel %vm2555, %v4886, %v4887
        %s4905 = scalar_lea.vmem [#allocation3], 512
        %v4906 = vld [vmem:[%s4905] sm:$0xf]
        %v4907 = vld [vmem:[%s4905 + $0x4] sm:$0xf]
        %v4908 = vld [vmem:[%s4905 + $0x8] sm:$0xf]
        %v4909 = vld [vmem:[%s4905 + $0xc] sm:$0xf]
        %v4910 = vld [vmem:[%s4905 + $0x10] sm:$0xf]
        %v4911 = vld [vmem:[%s4905 + $0x14] sm:$0xf]
        %v4912 = vld [vmem:[%s4905 + $0x18] sm:$0xf]
        %v4913 = vld [vmem:[%s4905 + $0x1c] sm:$0xf]
        %v4914 = vld [vmem:[%s4905 + $0x20] sm:$0xf]
        %v4915 = vld [vmem:[%s4905 + $0x24] sm:$0xf]
        %v4916 = vld [vmem:[%s4905 + $0x28] sm:$0xf]
        %v4917 = vld [vmem:[%s4905 + $0x2c] sm:$0xf]
        %v4918 = vld [vmem:[%s4905 + $0x30] sm:$0xf]
        %v4919 = vld [vmem:[%s4905 + $0x34] sm:$0xf]
        %v4920 = vld [vmem:[%s4905 + $0x38] sm:$0xf]
        %v4921 = vld [vmem:[%s4905 + $0x3c] sm:$0xf]
        %v4938 = vunpack.c.l.b16 %v4906
        %v4939 = vunpack.c.l.b16 %v4907
        %v4940 = vunpack.c.l.b16 %v4908
        %v4941 = vunpack.c.l.b16 %v4909
        %v4942 = vunpack.c.l.b16 %v4910
        %v4943 = vunpack.c.l.b16 %v4911
        %v4944 = vunpack.c.l.b16 %v4912
        %v4945 = vunpack.c.l.b16 %v4913
        %v4946 = vunpack.c.l.b16 %v4914
        %v4947 = vunpack.c.l.b16 %v4915
        %v4948 = vunpack.c.l.b16 %v4916
        %v4949 = vunpack.c.l.b16 %v4917
        %v4950 = vunpack.c.l.b16 %v4918
        %v4951 = vunpack.c.l.b16 %v4919
        %v4952 = vunpack.c.l.b16 %v4920
        %v4953 = vunpack.c.l.b16 %v4921
        %v4954 = vpack.c.b16 %v4939, %v4938
        %v4955 = vpack.c.b16 %v4941, %v4940
        %v4956 = vpack.c.b16 %v4943, %v4942
        %v4957 = vpack.c.b16 %v4945, %v4944
        %v4958 = vpack.c.b16 %v4947, %v4946
        %v4959 = vpack.c.b16 %v4949, %v4948
        %v4960 = vpack.c.b16 %v4951, %v4950
        %v4961 = vpack.c.b16 %v4953, %v4952
        %4970 = vmatprep.subr.bf16.mxu0 0
        %4971 = vmatpush1.bf16.msra.mxu0 %v4954
        %4972 = vmatprep.subr.bf16.mxu0 0
        %4973 = vmatpush1.bf16.msra.mxu0 %v4955
        %4974 = vmatprep.subr.bf16.mxu0 0
        %4975 = vmatpush1.bf16.msra.mxu0 %v4956
        %4976 = vmatprep.subr.bf16.mxu0 0
        %4977 = vmatpush1.bf16.msra.mxu0 %v4957
        %4978 = vmatprep.subr.bf16.mxu0 0
        %4979 = vmatpush1.bf16.msra.mxu0 %v4958
        %4980 = vmatprep.subr.bf16.mxu0 0
        %4981 = vmatpush1.bf16.msra.mxu0 %v4959
        %4982 = vmatprep.subr.bf16.mxu0 0
        %4983 = vmatpush1.bf16.msra.mxu0 %v4960
        %4984 = vmatprep.subr.bf16.mxu0 0
        %4985 = vmatpush1.bf16.msra.mxu0 %v4961
        %4986 = vmatprep.subr.bf16.mxu0 0
        %4987 = vmatpush1.bf16.msra.mxu0 0
        %4988 = vmatprep.subr.bf16.mxu0 0
        %4989 = vmatpush1.bf16.msra.mxu0 0
        %4990 = vmatprep.subr.bf16.mxu0 0
        %4991 = vmatpush1.bf16.msra.mxu0 0
        %4992 = vmatprep.subr.bf16.mxu0 0
        %4993 = vmatpush1.bf16.msra.mxu0 0
        %4994 = vmatprep.subr.bf16.mxu0 0
        %4995 = vmatpush1.bf16.msra.mxu0 0
        %4996 = vmatprep.subr.bf16.mxu0 0
        %4997 = vmatpush1.bf16.msra.mxu0 0
        %4998 = vmatprep.subr.bf16.mxu0 0
        %4999 = vmatpush1.bf16.msra.mxu0 0
        %5000 = vmatprep.subr.bf16.mxu0 0
        %5001 = vmatpush1.bf16.msra.mxu0 0
        %5002 = vmatprep.mubr.bf16.mxu0 0
        %5003 = vmatmul.mubr.bf16.gmra.mrb[0].mxu0 %v4843
        %v5004 = vpop.f32.mrb[0].mxu0
        %v5005 = vadd.f32 0.0, %v5004
        %v5006 = vpop.f32.mrb[0].mxu0
        %v5007 = vpop.f32.mrb[0].mxu0
        %v5008 = vadd.f32 0.0, %v5007
        %v5009 = vpop.f32.mrb[0].mxu0
        %5010 = vmatprep.mubr.bf16.mxu0 0
        %5011 = vmatmul.mubr.bf16.gmra.mrb[0].mxu0 %v4846
        %v5012 = vpop.f32.mrb[0].mxu0
        %v5013 = vadd.f32 0.0, %v5012
        %v5014 = vpop.f32.mrb[0].mxu0
        %v5015 = vpop.f32.mrb[0].mxu0
        %v5016 = vadd.f32 0.0, %v5015
        %v5017 = vpop.f32.mrb[0].mxu0
        %5018 = vmatprep.mubr.bf16.mxu0 0
        %5019 = vmatmul.mubr.bf16.gmra.mrb[0].mxu0 %v4849
        %v5020 = vpop.f32.mrb[0].mxu0
        %v5021 = vadd.f32 0.0, %v5020
        %v5022 = vpop.f32.mrb[0].mxu0
        %v5023 = vpop.f32.mrb[0].mxu0
        %v5024 = vadd.f32 0.0, %v5023
        %v5025 = vpop.f32.mrb[0].mxu0
        %5026 = vmatprep.mubr.bf16.mxu0 0
        %5027 = vmatmul.mubr.bf16.gmra.mrb[0].mxu0 %v4852
        %v5028 = vpop.f32.mrb[0].mxu0
        %v5029 = vadd.f32 0.0, %v5028
        %v5030 = vpop.f32.mrb[0].mxu0
        %v5031 = vpop.f32.mrb[0].mxu0
        %v5032 = vadd.f32 0.0, %v5031
        %v5033 = vpop.f32.mrb[0].mxu0
        %5034 = vmatprep.mubr.bf16.mxu0 0
        %5035 = vmatmul.mubr.bf16.gmra.mrb[0].mxu0 %v4855
        %v5036 = vpop.f32.mrb[0].mxu0
        %v5037 = vadd.f32 0.0, %v5036
        %v5038 = vpop.f32.mrb[0].mxu0
        %v5039 = vpop.f32.mrb[0].mxu0
        %v5040 = vadd.f32 0.0, %v5039
        %v5041 = vpop.f32.mrb[0].mxu0
        %5042 = vmatprep.mubr.bf16.mxu0 0
        %5043 = vmatmul.mubr.bf16.gmra.mrb[0].mxu0 %v4858
        %v5044 = vpop.f32.mrb[0].mxu0
        %v5045 = vadd.f32 0.0, %v5044
        %v5046 = vpop.f32.mrb[0].mxu0
        %v5047 = vpop.f32.mrb[0].mxu0
        %v5048 = vadd.f32 0.0, %v5047
        %v5049 = vpop.f32.mrb[0].mxu0
        %5050 = vmatprep.mubr.bf16.mxu0 0
        %5051 = vmatmul.mubr.bf16.gmra.mrb[0].mxu0 %v4861
        %v5052 = vpop.f32.mrb[0].mxu0
        %v5053 = vadd.f32 0.0, %v5052
        %v5054 = vpop.f32.mrb[0].mxu0
        %v5055 = vpop.f32.mrb[0].mxu0
        %v5056 = vadd.f32 0.0, %v5055
        %v5057 = vpop.f32.mrb[0].mxu0
        %5058 = vmatprep.mubr.bf16.mxu0 0
        %5059 = vmatmul.mubr.bf16.gmra.mrb[0].mxu0 %v4864
        %v5060 = vpop.f32.mrb[0].mxu0
        %v5061 = vadd.f32 0.0, %v5060
        %v5062 = vpop.f32.mrb[0].mxu0
        %v5063 = vpop.f32.mrb[0].mxu0
        %v5064 = vadd.f32 0.0, %v5063
        %v5065 = vpop.f32.mrb[0].mxu0
        %5066 = vmatprep.mubr.bf16.mxu0 0
        %5067 = vmatmul.mubr.bf16.gmra.mrb[0].mxu0 %v4867
        %v5068 = vpop.f32.mrb[0].mxu0
        %v5069 = vadd.f32 0.0, %v5068
        %v5070 = vpop.f32.mrb[0].mxu0
        %v5071 = vpop.f32.mrb[0].mxu0
        %v5072 = vadd.f32 0.0, %v5071
        %v5073 = vpop.f32.mrb[0].mxu0
        %5074 = vmatprep.mubr.bf16.mxu0 0
        %5075 = vmatmul.mubr.bf16.gmra.mrb[0].mxu0 %v4870
        %v5076 = vpop.f32.mrb[0].mxu0
        %v5077 = vadd.f32 0.0, %v5076
        %v5078 = vpop.f32.mrb[0].mxu0
        %v5079 = vpop.f32.mrb[0].mxu0
        %v5080 = vadd.f32 0.0, %v5079
        %v5081 = vpop.f32.mrb[0].mxu0
        %5082 = vmatprep.mubr.bf16.mxu0 0
        %5083 = vmatmul.mubr.bf16.gmra.mrb[0].mxu0 %v4873
        %v5084 = vpop.f32.mrb[0].mxu0
        %v5085 = vadd.f32 0.0, %v5084
        %v5086 = vpop.f32.mrb[0].mxu0
        %v5087 = vpop.f32.mrb[0].mxu0
        %v5088 = vadd.f32 0.0, %v5087
        %v5089 = vpop.f32.mrb[0].mxu0
        %5090 = vmatprep.mubr.bf16.mxu0 0
        %5091 = vmatmul.mubr.bf16.gmra.mrb[0].mxu0 %v4876
        %v5092 = vpop.f32.mrb[0].mxu0
        %v5093 = vadd.f32 0.0, %v5092
        %v5094 = vpop.f32.mrb[0].mxu0
        %v5095 = vpop.f32.mrb[0].mxu0
        %v5096 = vadd.f32 0.0, %v5095
        %v5097 = vpop.f32.mrb[0].mxu0
        %5098 = vmatprep.mubr.bf16.mxu0 0
        %5099 = vmatmul.mubr.bf16.gmra.mrb[0].mxu0 %v4879
        %v5100 = vpop.f32.mrb[0].mxu0
        %v5101 = vadd.f32 0.0, %v5100
        %v5102 = vpop.f32.mrb[0].mxu0
        %v5103 = vpop.f32.mrb[0].mxu0
        %v5104 = vadd.f32 0.0, %v5103
        %v5105 = vpop.f32.mrb[0].mxu0
        %5106 = vmatprep.mubr.bf16.mxu0 0
        %5107 = vmatmul.mubr.bf16.gmra.mrb[0].mxu0 %v4882
        %v5108 = vpop.f32.mrb[0].mxu0
        %v5109 = vadd.f32 0.0, %v5108
        %v5110 = vpop.f32.mrb[0].mxu0
        %v5111 = vpop.f32.mrb[0].mxu0
        %v5112 = vadd.f32 0.0, %v5111
        %v5113 = vpop.f32.mrb[0].mxu0
        %5114 = vmatprep.mubr.bf16.mxu0 0
        %5115 = vmatmul.mubr.bf16.gmra.mrb[0].mxu0 %v4885
        %v5116 = vpop.f32.mrb[0].mxu0
        %v5117 = vadd.f32 0.0, %v5116
        %v5118 = vpop.f32.mrb[0].mxu0
        %v5119 = vpop.f32.mrb[0].mxu0
        %v5120 = vadd.f32 0.0, %v5119
        %v5121 = vpop.f32.mrb[0].mxu0
        %5122 = vmatprep.mubr.bf16.mxu0 0
        %5123 = vmatmul.mubr.bf16.gmra.mrb[0].mxu0 %v4888
        %v5124 = vpop.f32.mrb[0].mxu0
        %v5125 = vadd.f32 0.0, %v5124
        %v5126 = vpop.f32.mrb[0].mxu0
        %v5127 = vpop.f32.mrb[0].mxu0
        %v5128 = vadd.f32 0.0, %v5127
        %v5129 = vpop.f32.mrb[0].mxu0
        %5130 = vdwg.mxu0
        %v5131 = vadd.f32 %v4761, %v5005
        %v5132 = vadd.f32 %v4762, %v5008
        %v5133 = vadd.f32 %v4763, %v5013
        %v5134 = vadd.f32 %v4764, %v5016
        %v5135 = vadd.f32 %v4765, %v5021
        %v5136 = vadd.f32 %v4766, %v5024
        %v5137 = vadd.f32 %v4767, %v5029
        %v5138 = vadd.f32 %v4768, %v5032
        %v5139 = vadd.f32 %v4769, %v5037
        %v5140 = vadd.f32 %v4770, %v5040
        %v5141 = vadd.f32 %v4771, %v5045
        %v5142 = vadd.f32 %v4772, %v5048
        %v5143 = vadd.f32 %v4773, %v5053
        %v5144 = vadd.f32 %v4774, %v5056
        %v5145 = vadd.f32 %v4775, %v5061
        %v5146 = vadd.f32 %v4776, %v5064
        %v5147 = vadd.f32 %v4777, %v5069
        %v5148 = vadd.f32 %v4778, %v5072
        %v5149 = vadd.f32 %v4779, %v5077
        %v5150 = vadd.f32 %v4780, %v5080
        %v5151 = vadd.f32 %v4781, %v5085
        %v5152 = vadd.f32 %v4782, %v5088
        %v5153 = vadd.f32 %v4783, %v5093
        %v5154 = vadd.f32 %v4784, %v5096
        %v5155 = vadd.f32 %v4785, %v5101
        %v5156 = vadd.f32 %v4786, %v5104
        %v5157 = vadd.f32 %v4787, %v5109
        %v5158 = vadd.f32 %v4788, %v5112
        %v5159 = vadd.f32 %v4789, %v5117
        %v5160 = vadd.f32 %v4790, %v5120
        %v5161 = vadd.f32 %v4791, %v5125
        %v5162 = vadd.f32 %v4792, %v5128
        %v5163 = vld [vmem:[%s4] sm:$0x1]
        %v5165 = vlaneseq
        %v5166 = vshrl.u32 %v5165, 7
        %v5167 = vsub.s32 0, %v5166
        %v5168 = vrot.slane %v5163, %v5167
        %v5170 = vadd.f32 %v5131, %v5168
        %v5171 = vadd.f32 %v5132, %v5168
        %v5172 = vadd.f32 %v5133, %v5168
        %v5173 = vadd.f32 %v5134, %v5168
        %v5174 = vadd.f32 %v5135, %v5168
        %v5175 = vadd.f32 %v5136, %v5168
        %v5176 = vadd.f32 %v5137, %v5168
        %v5177 = vadd.f32 %v5138, %v5168
        %v5178 = vadd.f32 %v5139, %v5168
        %v5179 = vadd.f32 %v5140, %v5168
        %v5180 = vadd.f32 %v5141, %v5168
        %v5181 = vadd.f32 %v5142, %v5168
        %v5182 = vadd.f32 %v5143, %v5168
        %v5183 = vadd.f32 %v5144, %v5168
        %v5184 = vadd.f32 %v5145, %v5168
        %v5185 = vadd.f32 %v5146, %v5168
        %v5186 = vadd.f32 %v5147, %v5168
        %v5187 = vadd.f32 %v5148, %v5168
        %v5188 = vadd.f32 %v5149, %v5168
        %v5189 = vadd.f32 %v5150, %v5168
        %v5190 = vadd.f32 %v5151, %v5168
        %v5191 = vadd.f32 %v5152, %v5168
        %v5192 = vadd.f32 %v5153, %v5168
        %v5193 = vadd.f32 %v5154, %v5168
        %v5194 = vadd.f32 %v5155, %v5168
        %v5195 = vadd.f32 %v5156, %v5168
        %v5196 = vadd.f32 %v5157, %v5168
        %v5197 = vadd.f32 %v5158, %v5168
        %v5198 = vadd.f32 %v5159, %v5168
        %v5199 = vadd.f32 %v5160, %v5168
        %v5200 = vadd.f32 %v5161, %v5168
        %v5201 = vadd.f32 %v5162, %v5168
        %v5202 = vmul.f32 %v5170, 0.5
        %v5203 = vmul.f32 %v5171, 0.5
        %v5204 = vmul.f32 %v5172, 0.5
        %v5205 = vmul.f32 %v5173, 0.5
        %v5206 = vmul.f32 %v5174, 0.5
        %v5207 = vmul.f32 %v5175, 0.5
        %v5208 = vmul.f32 %v5176, 0.5
        %v5209 = vmul.f32 %v5177, 0.5
        %v5210 = vmul.f32 %v5178, 0.5
        %v5211 = vmul.f32 %v5179, 0.5
        %v5212 = vmul.f32 %v5180, 0.5
        %v5213 = vmul.f32 %v5181, 0.5
        %v5214 = vmul.f32 %v5182, 0.5
        %v5215 = vmul.f32 %v5183, 0.5
        %v5216 = vmul.f32 %v5184, 0.5
        %v5217 = vmul.f32 %v5185, 0.5
        %v5218 = vmul.f32 %v5186, 0.5
        %v5219 = vmul.f32 %v5187, 0.5
        %v5220 = vmul.f32 %v5188, 0.5
        %v5221 = vmul.f32 %v5189, 0.5
        %v5222 = vmul.f32 %v5190, 0.5
        %v5223 = vmul.f32 %v5191, 0.5
        %v5224 = vmul.f32 %v5192, 0.5
        %v5225 = vmul.f32 %v5193, 0.5
        %v5226 = vmul.f32 %v5194, 0.5
        %v5227 = vmul.f32 %v5195, 0.5
        %v5228 = vmul.f32 %v5196, 0.5
        %v5229 = vmul.f32 %v5197, 0.5
        %v5230 = vmul.f32 %v5198, 0.5
        %v5231 = vmul.f32 %v5199, 0.5
        %v5232 = vmul.f32 %v5200, 0.5
        %v5233 = vmul.f32 %v5201, 0.5
        %v5234 = vmul.f32 %v5170, 0.70710677
        %v5235 = vmul.f32 %v5171, 0.70710677
        %v5236 = vmul.f32 %v5172, 0.70710677
        %v5237 = vmul.f32 %v5173, 0.70710677
        %v5238 = vmul.f32 %v5174, 0.70710677
        %v5239 = vmul.f32 %v5175, 0.70710677
        %v5240 = vmul.f32 %v5176, 0.70710677
        %v5241 = vmul.f32 %v5177, 0.70710677
        %v5242 = vmul.f32 %v5178, 0.70710677
        %v5243 = vmul.f32 %v5179, 0.70710677
        %v5244 = vmul.f32 %v5180, 0.70710677
        %v5245 = vmul.f32 %v5181, 0.70710677
        %v5246 = vmul.f32 %v5182, 0.70710677
        %v5247 = vmul.f32 %v5183, 0.70710677
        %v5248 = vmul.f32 %v5184, 0.70710677
        %v5249 = vmul.f32 %v5185, 0.70710677
        %v5250 = vmul.f32 %v5186, 0.70710677
        %v5251 = vmul.f32 %v5187, 0.70710677
        %v5252 = vmul.f32 %v5188, 0.70710677
        %v5253 = vmul.f32 %v5189, 0.70710677
        %v5254 = vmul.f32 %v5190, 0.70710677
        %v5255 = vmul.f32 %v5191, 0.70710677
        %v5256 = vmul.f32 %v5192, 0.70710677
        %v5257 = vmul.f32 %v5193, 0.70710677
        %v5258 = vmul.f32 %v5194, 0.70710677
        %v5259 = vmul.f32 %v5195, 0.70710677
        %v5260 = vmul.f32 %v5196, 0.70710677
        %v5261 = vmul.f32 %v5197, 0.70710677
        %v5262 = vmul.f32 %v5198, 0.70710677
        %v5263 = vmul.f32 %v5199, 0.70710677
        %v5264 = vmul.f32 %v5200, 0.70710677
        %v5265 = vmul.f32 %v5201, 0.70710677
        %v5266 = vand.u32 2147483647, %v5234
        %v5267 = vand.u32 2147483647, %v5235
        %v5268 = vand.u32 2147483647, %v5236
        %v5269 = vand.u32 2147483647, %v5237
        %v5270 = vand.u32 2147483647, %v5238
        %v5271 = vand.u32 2147483647, %v5239
        %v5272 = vand.u32 2147483647, %v5240
        %v5273 = vand.u32 2147483647, %v5241
        %v5274 = vand.u32 2147483647, %v5242
        %v5275 = vand.u32 2147483647, %v5243
        %v5276 = vand.u32 2147483647, %v5244
        %v5277 = vand.u32 2147483647, %v5245
        %v5278 = vand.u32 2147483647, %v5246
        %v5279 = vand.u32 2147483647, %v5247
        %v5280 = vand.u32 2147483647, %v5248
        %v5281 = vand.u32 2147483647, %v5249
        %v5282 = vand.u32 2147483647, %v5250
        %v5283 = vand.u32 2147483647, %v5251
        %v5284 = vand.u32 2147483647, %v5252
        %v5285 = vand.u32 2147483647, %v5253
        %v5286 = vand.u32 2147483647, %v5254
        %v5287 = vand.u32 2147483647, %v5255
        %v5288 = vand.u32 2147483647, %v5256
        %v5289 = vand.u32 2147483647, %v5257
        %v5290 = vand.u32 2147483647, %v5258
        %v5291 = vand.u32 2147483647, %v5259
        %v5292 = vand.u32 2147483647, %v5260
        %v5293 = vand.u32 2147483647, %v5261
        %v5294 = vand.u32 2147483647, %v5262
        %v5295 = vand.u32 2147483647, %v5263
        %v5296 = vand.u32 2147483647, %v5264
        %v5297 = vand.u32 2147483647, %v5265
        %v5298 = vmul.f32 %v5266, 0.3275911
        %v5299 = vmul.f32 %v5267, 0.3275911
        %v5300 = vmul.f32 %v5268, 0.3275911
        %v5301 = vmul.f32 %v5269, 0.3275911
        %v5302 = vmul.f32 %v5270, 0.3275911
        %v5303 = vmul.f32 %v5271, 0.3275911
        %v5304 = vmul.f32 %v5272, 0.3275911
        %v5305 = vmul.f32 %v5273, 0.3275911
        %v5306 = vmul.f32 %v5274, 0.3275911
        %v5307 = vmul.f32 %v5275, 0.3275911
        %v5308 = vmul.f32 %v5276, 0.3275911
        %v5309 = vmul.f32 %v5277, 0.3275911
        %v5310 = vmul.f32 %v5278, 0.3275911
        %v5311 = vmul.f32 %v5279, 0.3275911
        %v5312 = vmul.f32 %v5280, 0.3275911
        %v5313 = vmul.f32 %v5281, 0.3275911
        %v5314 = vmul.f32 %v5282, 0.3275911
        %v5315 = vmul.f32 %v5283, 0.3275911
        %v5316 = vmul.f32 %v5284, 0.3275911
        %v5317 = vmul.f32 %v5285, 0.3275911
        %v5318 = vmul.f32 %v5286, 0.3275911
        %v5319 = vmul.f32 %v5287, 0.3275911
        %v5320 = vmul.f32 %v5288, 0.3275911
        %v5321 = vmul.f32 %v5289, 0.3275911
        %v5322 = vmul.f32 %v5290, 0.3275911
        %v5323 = vmul.f32 %v5291, 0.3275911
        %v5324 = vmul.f32 %v5292, 0.3275911
        %v5325 = vmul.f32 %v5293, 0.3275911
        %v5326 = vmul.f32 %v5294, 0.3275911
        %v5327 = vmul.f32 %v5295, 0.3275911
        %v5328 = vmul.f32 %v5296, 0.3275911
        %v5329 = vmul.f32 %v5297, 0.3275911
        %v5330 = vadd.f32 %v5298, 1.0
        %v5331 = vadd.f32 %v5299, 1.0
        %v5332 = vadd.f32 %v5300, 1.0
        %v5333 = vadd.f32 %v5301, 1.0
        %v5334 = vadd.f32 %v5302, 1.0
        %v5335 = vadd.f32 %v5303, 1.0
        %v5336 = vadd.f32 %v5304, 1.0
        %v5337 = vadd.f32 %v5305, 1.0
        %v5338 = vadd.f32 %v5306, 1.0
        %v5339 = vadd.f32 %v5307, 1.0
        %v5340 = vadd.f32 %v5308, 1.0
        %v5341 = vadd.f32 %v5309, 1.0
        %v5342 = vadd.f32 %v5310, 1.0
        %v5343 = vadd.f32 %v5311, 1.0
        %v5344 = vadd.f32 %v5312, 1.0
        %v5345 = vadd.f32 %v5313, 1.0
        %v5346 = vadd.f32 %v5314, 1.0
        %v5347 = vadd.f32 %v5315, 1.0
        %v5348 = vadd.f32 %v5316, 1.0
        %v5349 = vadd.f32 %v5317, 1.0
        %v5350 = vadd.f32 %v5318, 1.0
        %v5351 = vadd.f32 %v5319, 1.0
        %v5352 = vadd.f32 %v5320, 1.0
        %v5353 = vadd.f32 %v5321, 1.0
        %v5354 = vadd.f32 %v5322, 1.0
        %v5355 = vadd.f32 %v5323, 1.0
        %v5356 = vadd.f32 %v5324, 1.0
        %v5357 = vadd.f32 %v5325, 1.0
        %v5358 = vadd.f32 %v5326, 1.0
        %v5359 = vadd.f32 %v5327, 1.0
        %v5360 = vadd.f32 %v5328, 1.0
        %v5361 = vadd.f32 %v5329, 1.0
        %v5362 = vrcp.pop %v5330
        %v5363 = vmul.f32 1.0, %v5362
        %v5364 = vrcp.pop %v5331
        %v5365 = vmul.f32 1.0, %v5364
        %v5366 = vrcp.pop %v5332
        %v5367 = vmul.f32 1.0, %v5366
        %v5368 = vrcp.pop %v5333
        %v5369 = vmul.f32 1.0, %v5368
        %v5370 = vrcp.pop %v5334
        %v5371 = vmul.f32 1.0, %v5370
        %v5372 = vrcp.pop %v5335
        %v5373 = vmul.f32 1.0, %v5372
        %v5374 = vrcp.pop %v5336
        %v5375 = vmul.f32 1.0, %v5374
        %v5376 = vrcp.pop %v5337
        %v5377 = vmul.f32 1.0, %v5376
        %v5378 = vrcp.pop %v5338
        %v5379 = vmul.f32 1.0, %v5378
        %v5380 = vrcp.pop %v5339
        %v5381 = vmul.f32 1.0, %v5380
        %v5382 = vrcp.pop %v5340
        %v5383 = vmul.f32 1.0, %v5382
        %v5384 = vrcp.pop %v5341
        %v5385 = vmul.f32 1.0, %v5384
        %v5386 = vrcp.pop %v5342
        %v5387 = vmul.f32 1.0, %v5386
        %v5388 = vrcp.pop %v5343
        %v5389 = vmul.f32 1.0, %v5388
        %v5390 = vrcp.pop %v5344
        %v5391 = vmul.f32 1.0, %v5390
        %v5392 = vrcp.pop %v5345
        %v5393 = vmul.f32 1.0, %v5392
        %v5394 = vrcp.pop %v5346
        %v5395 = vmul.f32 1.0, %v5394
        %v5396 = vrcp.pop %v5347
        %v5397 = vmul.f32 1.0, %v5396
        %v5398 = vrcp.pop %v5348
        %v5399 = vmul.f32 1.0, %v5398
        %v5400 = vrcp.pop %v5349
        %v5401 = vmul.f32 1.0, %v5400
        %v5402 = vrcp.pop %v5350
        %v5403 = vmul.f32 1.0, %v5402
        %v5404 = vrcp.pop %v5351
        %v5405 = vmul.f32 1.0, %v5404
        %v5406 = vrcp.pop %v5352
        %v5407 = vmul.f32 1.0, %v5406
        %v5408 = vrcp.pop %v5353
        %v5409 = vmul.f32 1.0, %v5408
        %v5410 = vrcp.pop %v5354
        %v5411 = vmul.f32 1.0, %v5410
        %v5412 = vrcp.pop %v5355
        %v5413 = vmul.f32 1.0, %v5412
        %v5414 = vrcp.pop %v5356
        %v5415 = vmul.f32 1.0, %v5414
        %v5416 = vrcp.pop %v5357
        %v5417 = vmul.f32 1.0, %v5416
        %v5418 = vrcp.pop %v5358
        %v5419 = vmul.f32 1.0, %v5418
        %v5420 = vrcp.pop %v5359
        %v5421 = vmul.f32 1.0, %v5420
        %v5422 = vrcp.pop %v5360
        %v5423 = vmul.f32 1.0, %v5422
        %v5424 = vrcp.pop %v5361
        %v5425 = vmul.f32 1.0, %v5424
        %v5426 = vmul.f32 %v5363, 1.0614054
        %v5427 = vmul.f32 %v5365, 1.0614054
        %v5428 = vmul.f32 %v5367, 1.0614054
        %v5429 = vmul.f32 %v5369, 1.0614054
        %v5430 = vmul.f32 %v5371, 1.0614054
        %v5431 = vmul.f32 %v5373, 1.0614054
        %v5432 = vmul.f32 %v5375, 1.0614054
        %v5433 = vmul.f32 %v5377, 1.0614054
        %v5434 = vmul.f32 %v5379, 1.0614054
        %v5435 = vmul.f32 %v5381, 1.0614054
        %v5436 = vmul.f32 %v5383, 1.0614054
        %v5437 = vmul.f32 %v5385, 1.0614054
        %v5438 = vmul.f32 %v5387, 1.0614054
        %v5439 = vmul.f32 %v5389, 1.0614054
        %v5440 = vmul.f32 %v5391, 1.0614054
        %v5441 = vmul.f32 %v5393, 1.0614054
        %v5442 = vmul.f32 %v5395, 1.0614054
        %v5443 = vmul.f32 %v5397, 1.0614054
        %v5444 = vmul.f32 %v5399, 1.0614054
        %v5445 = vmul.f32 %v5401, 1.0614054
        %v5446 = vmul.f32 %v5403, 1.0614054
        %v5447 = vmul.f32 %v5405, 1.0614054
        %v5448 = vmul.f32 %v5407, 1.0614054
        %v5449 = vmul.f32 %v5409, 1.0614054
        %v5450 = vmul.f32 %v5411, 1.0614054
        %v5451 = vmul.f32 %v5413, 1.0614054
        %v5452 = vmul.f32 %v5415, 1.0614054
        %v5453 = vmul.f32 %v5417, 1.0614054
        %v5454 = vmul.f32 %v5419, 1.0614054
        %v5455 = vmul.f32 %v5421, 1.0614054
        %v5456 = vmul.f32 %v5423, 1.0614054
        %v5457 = vmul.f32 %v5425, 1.0614054
        %v5458 = vadd.f32 %v5426, -1.4531521
        %v5459 = vadd.f32 %v5427, -1.4531521
        %v5460 = vadd.f32 %v5428, -1.4531521
        %v5461 = vadd.f32 %v5429, -1.4531521
        %v5462 = vadd.f32 %v5430, -1.4531521
        %v5463 = vadd.f32 %v5431, -1.4531521
        %v5464 = vadd.f32 %v5432, -1.4531521
        %v5465 = vadd.f32 %v5433, -1.4531521
        %v5466 = vadd.f32 %v5434, -1.4531521
        %v5467 = vadd.f32 %v5435, -1.4531521
        %v5468 = vadd.f32 %v5436, -1.4531521
        %v5469 = vadd.f32 %v5437, -1.4531521
        %v5470 = vadd.f32 %v5438, -1.4531521
        %v5471 = vadd.f32 %v5439, -1.4531521
        %v5472 = vadd.f32 %v5440, -1.4531521
        %v5473 = vadd.f32 %v5441, -1.4531521
        %v5474 = vadd.f32 %v5442, -1.4531521
        %v5475 = vadd.f32 %v5443, -1.4531521
        %v5476 = vadd.f32 %v5444, -1.4531521
        %v5477 = vadd.f32 %v5445, -1.4531521
        %v5478 = vadd.f32 %v5446, -1.4531521
        %v5479 = vadd.f32 %v5447, -1.4531521
        %v5480 = vadd.f32 %v5448, -1.4531521
        %v5481 = vadd.f32 %v5449, -1.4531521
        %v5482 = vadd.f32 %v5450, -1.4531521
        %v5483 = vadd.f32 %v5451, -1.4531521
        %v5484 = vadd.f32 %v5452, -1.4531521
        %v5485 = vadd.f32 %v5453, -1.4531521
        %v5486 = vadd.f32 %v5454, -1.4531521
        %v5487 = vadd.f32 %v5455, -1.4531521
        %v5488 = vadd.f32 %v5456, -1.4531521
        %v5489 = vadd.f32 %v5457, -1.4531521
        %v5490 = vmul.f32 %v5458, %v5363
        %v5491 = vmul.f32 %v5459, %v5365
        %v5492 = vmul.f32 %v5460, %v5367
        %v5493 = vmul.f32 %v5461, %v5369
        %v5494 = vmul.f32 %v5462, %v5371
        %v5495 = vmul.f32 %v5463, %v5373
        %v5496 = vmul.f32 %v5464, %v5375
        %v5497 = vmul.f32 %v5465, %v5377
        %v5498 = vmul.f32 %v5466, %v5379
        %v5499 = vmul.f32 %v5467, %v5381
        %v5500 = vmul.f32 %v5468, %v5383
        %v5501 = vmul.f32 %v5469, %v5385
        %v5502 = vmul.f32 %v5470, %v5387
        %v5503 = vmul.f32 %v5471, %v5389
        %v5504 = vmul.f32 %v5472, %v5391
        %v5505 = vmul.f32 %v5473, %v5393
        %v5506 = vmul.f32 %v5474, %v5395
        %v5507 = vmul.f32 %v5475, %v5397
        %v5508 = vmul.f32 %v5476, %v5399
        %v5509 = vmul.f32 %v5477, %v5401
        %v5510 = vmul.f32 %v5478, %v5403
        %v5511 = vmul.f32 %v5479, %v5405
        %v5512 = vmul.f32 %v5480, %v5407
        %v5513 = vmul.f32 %v5481, %v5409
        %v5514 = vmul.f32 %v5482, %v5411
        %v5515 = vmul.f32 %v5483, %v5413
        %v5516 = vmul.f32 %v5484, %v5415
        %v5517 = vmul.f32 %v5485, %v5417
        %v5518 = vmul.f32 %v5486, %v5419
        %v5519 = vmul.f32 %v5487, %v5421
        %v5520 = vmul.f32 %v5488, %v5423
        %v5521 = vmul.f32 %v5489, %v5425
        %v5522 = vadd.f32 %v5490, 1.4214138
        %v5523 = vadd.f32 %v5491, 1.4214138
        %v5524 = vadd.f32 %v5492, 1.4214138
        %v5525 = vadd.f32 %v5493, 1.4214138
        %v5526 = vadd.f32 %v5494, 1.4214138
        %v5527 = vadd.f32 %v5495, 1.4214138
        %v5528 = vadd.f32 %v5496, 1.4214138
        %v5529 = vadd.f32 %v5497, 1.4214138
        %v5530 = vadd.f32 %v5498, 1.4214138
        %v5531 = vadd.f32 %v5499, 1.4214138
        %v5532 = vadd.f32 %v5500, 1.4214138
        %v5533 = vadd.f32 %v5501, 1.4214138
        %v5534 = vadd.f32 %v5502, 1.4214138
        %v5535 = vadd.f32 %v5503, 1.4214138
        %v5536 = vadd.f32 %v5504, 1.4214138
        %v5537 = vadd.f32 %v5505, 1.4214138
        %v5538 = vadd.f32 %v5506, 1.4214138
        %v5539 = vadd.f32 %v5507, 1.4214138
        %v5540 = vadd.f32 %v5508, 1.4214138
        %v5541 = vadd.f32 %v5509, 1.4214138
        %v5542 = vadd.f32 %v5510, 1.4214138
        %v5543 = vadd.f32 %v5511, 1.4214138
        %v5544 = vadd.f32 %v5512, 1.4214138
        %v5545 = vadd.f32 %v5513, 1.4214138
        %v5546 = vadd.f32 %v5514, 1.4214138
        %v5547 = vadd.f32 %v5515, 1.4214138
        %v5548 = vadd.f32 %v5516, 1.4214138
        %v5549 = vadd.f32 %v5517, 1.4214138
        %v5550 = vadd.f32 %v5518, 1.4214138
        %v5551 = vadd.f32 %v5519, 1.4214138
        %v5552 = vadd.f32 %v5520, 1.4214138
        %v5553 = vadd.f32 %v5521, 1.4214138
        %v5554 = vmul.f32 %v5522, %v5363
        %v5555 = vmul.f32 %v5523, %v5365
        %v5556 = vmul.f32 %v5524, %v5367
        %v5557 = vmul.f32 %v5525, %v5369
        %v5558 = vmul.f32 %v5526, %v5371
        %v5559 = vmul.f32 %v5527, %v5373
        %v5560 = vmul.f32 %v5528, %v5375
        %v5561 = vmul.f32 %v5529, %v5377
        %v5562 = vmul.f32 %v5530, %v5379
        %v5563 = vmul.f32 %v5531, %v5381
        %v5564 = vmul.f32 %v5532, %v5383
        %v5565 = vmul.f32 %v5533, %v5385
        %v5566 = vmul.f32 %v5534, %v5387
        %v5567 = vmul.f32 %v5535, %v5389
        %v5568 = vmul.f32 %v5536, %v5391
        %v5569 = vmul.f32 %v5537, %v5393
        %v5570 = vmul.f32 %v5538, %v5395
        %v5571 = vmul.f32 %v5539, %v5397
        %v5572 = vmul.f32 %v5540, %v5399
        %v5573 = vmul.f32 %v5541, %v5401
        %v5574 = vmul.f32 %v5542, %v5403
        %v5575 = vmul.f32 %v5543, %v5405
        %v5576 = vmul.f32 %v5544, %v5407
        %v5577 = vmul.f32 %v5545, %v5409
        %v5578 = vmul.f32 %v5546, %v5411
        %v5579 = vmul.f32 %v5547, %v5413
        %v5580 = vmul.f32 %v5548, %v5415
        %v5581 = vmul.f32 %v5549, %v5417
        %v5582 = vmul.f32 %v5550, %v5419
        %v5583 = vmul.f32 %v5551, %v5421
        %v5584 = vmul.f32 %v5552, %v5423
        %v5585 = vmul.f32 %v5553, %v5425
        %v5586 = vadd.f32 %v5554, -0.28449672
        %v5587 = vadd.f32 %v5555, -0.28449672
        %v5588 = vadd.f32 %v5556, -0.28449672
        %v5589 = vadd.f32 %v5557, -0.28449672
        %v5590 = vadd.f32 %v5558, -0.28449672
        %v5591 = vadd.f32 %v5559, -0.28449672
        %v5592 = vadd.f32 %v5560, -0.28449672
        %v5593 = vadd.f32 %v5561, -0.28449672
        %v5594 = vadd.f32 %v5562, -0.28449672
        %v5595 = vadd.f32 %v5563, -0.28449672
        %v5596 = vadd.f32 %v5564, -0.28449672
        %v5597 = vadd.f32 %v5565, -0.28449672
        %v5598 = vadd.f32 %v5566, -0.28449672
        %v5599 = vadd.f32 %v5567, -0.28449672
        %v5600 = vadd.f32 %v5568, -0.28449672
        %v5601 = vadd.f32 %v5569, -0.28449672
        %v5602 = vadd.f32 %v5570, -0.28449672
        %v5603 = vadd.f32 %v5571, -0.28449672
        %v5604 = vadd.f32 %v5572, -0.28449672
        %v5605 = vadd.f32 %v5573, -0.28449672
        %v5606 = vadd.f32 %v5574, -0.28449672
        %v5607 = vadd.f32 %v5575, -0.28449672
        %v5608 = vadd.f32 %v5576, -0.28449672
        %v5609 = vadd.f32 %v5577, -0.28449672
        %v5610 = vadd.f32 %v5578, -0.28449672
        %v5611 = vadd.f32 %v5579, -0.28449672
        %v5612 = vadd.f32 %v5580, -0.28449672
        %v5613 = vadd.f32 %v5581, -0.28449672
        %v5614 = vadd.f32 %v5582, -0.28449672
        %v5615 = vadd.f32 %v5583, -0.28449672
        %v5616 = vadd.f32 %v5584, -0.28449672
        %v5617 = vadd.f32 %v5585, -0.28449672
        %v5618 = vmul.f32 %v5586, %v5363
        %v5619 = vmul.f32 %v5587, %v5365
        %v5620 = vmul.f32 %v5588, %v5367
        %v5621 = vmul.f32 %v5589, %v5369
        %v5622 = vmul.f32 %v5590, %v5371
        %v5623 = vmul.f32 %v5591, %v5373
        %v5624 = vmul.f32 %v5592, %v5375
        %v5625 = vmul.f32 %v5593, %v5377
        %v5626 = vmul.f32 %v5594, %v5379
        %v5627 = vmul.f32 %v5595, %v5381
        %v5628 = vmul.f32 %v5596, %v5383
        %v5629 = vmul.f32 %v5597, %v5385
        %v5630 = vmul.f32 %v5598, %v5387
        %v5631 = vmul.f32 %v5599, %v5389
        %v5632 = vmul.f32 %v5600, %v5391
        %v5633 = vmul.f32 %v5601, %v5393
        %v5634 = vmul.f32 %v5602, %v5395
        %v5635 = vmul.f32 %v5603, %v5397
        %v5636 = vmul.f32 %v5604, %v5399
        %v5637 = vmul.f32 %v5605, %v5401
        %v5638 = vmul.f32 %v5606, %v5403
        %v5639 = vmul.f32 %v5607, %v5405
        %v5640 = vmul.f32 %v5608, %v5407
        %v5641 = vmul.f32 %v5609, %v5409
        %v5642 = vmul.f32 %v5610, %v5411
        %v5643 = vmul.f32 %v5611, %v5413
        %v5644 = vmul.f32 %v5612, %v5415
        %v5645 = vmul.f32 %v5613, %v5417
        %v5646 = vmul.f32 %v5614, %v5419
        %v5647 = vmul.f32 %v5615, %v5421
        %v5648 = vmul.f32 %v5616, %v5423
        %v5649 = vmul.f32 %v5617, %v5425
        %v5650 = vadd.f32 %v5618, 0.2548296
        %v5651 = vadd.f32 %v5619, 0.2548296
        %v5652 = vadd.f32 %v5620, 0.2548296
        %v5653 = vadd.f32 %v5621, 0.2548296
        %v5654 = vadd.f32 %v5622, 0.2548296
        %v5655 = vadd.f32 %v5623, 0.2548296
        %v5656 = vadd.f32 %v5624, 0.2548296
        %v5657 = vadd.f32 %v5625, 0.2548296
        %v5658 = vadd.f32 %v5626, 0.2548296
        %v5659 = vadd.f32 %v5627, 0.2548296
        %v5660 = vadd.f32 %v5628, 0.2548296
        %v5661 = vadd.f32 %v5629, 0.2548296
        %v5662 = vadd.f32 %v5630, 0.2548296
        %v5663 = vadd.f32 %v5631, 0.2548296
        %v5664 = vadd.f32 %v5632, 0.2548296
        %v5665 = vadd.f32 %v5633, 0.2548296
        %v5666 = vadd.f32 %v5634, 0.2548296
        %v5667 = vadd.f32 %v5635, 0.2548296
        %v5668 = vadd.f32 %v5636, 0.2548296
        %v5669 = vadd.f32 %v5637, 0.2548296
        %v5670 = vadd.f32 %v5638, 0.2548296
        %v5671 = vadd.f32 %v5639, 0.2548296
        %v5672 = vadd.f32 %v5640, 0.2548296
        %v5673 = vadd.f32 %v5641, 0.2548296
        %v5674 = vadd.f32 %v5642, 0.2548296
        %v5675 = vadd.f32 %v5643, 0.2548296
        %v5676 = vadd.f32 %v5644, 0.2548296
        %v5677 = vadd.f32 %v5645, 0.2548296
        %v5678 = vadd.f32 %v5646, 0.2548296
        %v5679 = vadd.f32 %v5647, 0.2548296
        %v5680 = vadd.f32 %v5648, 0.2548296
        %v5681 = vadd.f32 %v5649, 0.2548296
        %v5682 = vmul.f32 %v5650, %v5363
        %v5683 = vmul.f32 %v5651, %v5365
        %v5684 = vmul.f32 %v5652, %v5367
        %v5685 = vmul.f32 %v5653, %v5369
        %v5686 = vmul.f32 %v5654, %v5371
        %v5687 = vmul.f32 %v5655, %v5373
        %v5688 = vmul.f32 %v5656, %v5375
        %v5689 = vmul.f32 %v5657, %v5377
        %v5690 = vmul.f32 %v5658, %v5379
        %v5691 = vmul.f32 %v5659, %v5381
        %v5692 = vmul.f32 %v5660, %v5383
        %v5693 = vmul.f32 %v5661, %v5385
        %v5694 = vmul.f32 %v5662, %v5387
        %v5695 = vmul.f32 %v5663, %v5389
        %v5696 = vmul.f32 %v5664, %v5391
        %v5697 = vmul.f32 %v5665, %v5393
        %v5698 = vmul.f32 %v5666, %v5395
        %v5699 = vmul.f32 %v5667, %v5397
        %v5700 = vmul.f32 %v5668, %v5399
        %v5701 = vmul.f32 %v5669, %v5401
        %v5702 = vmul.f32 %v5670, %v5403
        %v5703 = vmul.f32 %v5671, %v5405
        %v5704 = vmul.f32 %v5672, %v5407
        %v5705 = vmul.f32 %v5673, %v5409
        %v5706 = vmul.f32 %v5674, %v5411
        %v5707 = vmul.f32 %v5675, %v5413
        %v5708 = vmul.f32 %v5676, %v5415
        %v5709 = vmul.f32 %v5677, %v5417
        %v5710 = vmul.f32 %v5678, %v5419
        %v5711 = vmul.f32 %v5679, %v5421
        %v5712 = vmul.f32 %v5680, %v5423
        %v5713 = vmul.f32 %v5681, %v5425
        %v5714 = vsub.f32 0.0, %v5266
        %v5715 = vsub.f32 0.0, %v5267
        %v5716 = vsub.f32 0.0, %v5268
        %v5717 = vsub.f32 0.0, %v5269
        %v5718 = vsub.f32 0.0, %v5270
        %v5719 = vsub.f32 0.0, %v5271
        %v5720 = vsub.f32 0.0, %v5272
        %v5721 = vsub.f32 0.0, %v5273
        %v5722 = vsub.f32 0.0, %v5274
        %v5723 = vsub.f32 0.0, %v5275
        %v5724 = vsub.f32 0.0, %v5276
        %v5725 = vsub.f32 0.0, %v5277
        %v5726 = vsub.f32 0.0, %v5278
        %v5727 = vsub.f32 0.0, %v5279
        %v5728 = vsub.f32 0.0, %v5280
        %v5729 = vsub.f32 0.0, %v5281
        %v5730 = vsub.f32 0.0, %v5282
        %v5731 = vsub.f32 0.0, %v5283
        %v5732 = vsub.f32 0.0, %v5284
        %v5733 = vsub.f32 0.0, %v5285
        %v5734 = vsub.f32 0.0, %v5286
        %v5735 = vsub.f32 0.0, %v5287
        %v5736 = vsub.f32 0.0, %v5288
        %v5737 = vsub.f32 0.0, %v5289
        %v5738 = vsub.f32 0.0, %v5290
        %v5739 = vsub.f32 0.0, %v5291
        %v5740 = vsub.f32 0.0, %v5292
        %v5741 = vsub.f32 0.0, %v5293
        %v5742 = vsub.f32 0.0, %v5294
        %v5743 = vsub.f32 0.0, %v5295
        %v5744 = vsub.f32 0.0, %v5296
        %v5745 = vsub.f32 0.0, %v5297
        %v5746 = vmul.f32 %v5714, %v5266
        %v5747 = vmul.f32 %v5715, %v5267
        %v5748 = vmul.f32 %v5716, %v5268
        %v5749 = vmul.f32 %v5717, %v5269
        %v5750 = vmul.f32 %v5718, %v5270
        %v5751 = vmul.f32 %v5719, %v5271
        %v5752 = vmul.f32 %v5720, %v5272
        %v5753 = vmul.f32 %v5721, %v5273
        %v5754 = vmul.f32 %v5722, %v5274
        %v5755 = vmul.f32 %v5723, %v5275
        %v5756 = vmul.f32 %v5724, %v5276
        %v5757 = vmul.f32 %v5725, %v5277
        %v5758 = vmul.f32 %v5726, %v5278
        %v5759 = vmul.f32 %v5727, %v5279
        %v5760 = vmul.f32 %v5728, %v5280
        %v5761 = vmul.f32 %v5729, %v5281
        %v5762 = vmul.f32 %v5730, %v5282
        %v5763 = vmul.f32 %v5731, %v5283
        %v5764 = vmul.f32 %v5732, %v5284
        %v5765 = vmul.f32 %v5733, %v5285
        %v5766 = vmul.f32 %v5734, %v5286
        %v5767 = vmul.f32 %v5735, %v5287
        %v5768 = vmul.f32 %v5736, %v5288
        %v5769 = vmul.f32 %v5737, %v5289
        %v5770 = vmul.f32 %v5738, %v5290
        %v5771 = vmul.f32 %v5739, %v5291
        %v5772 = vmul.f32 %v5740, %v5292
        %v5773 = vmul.f32 %v5741, %v5293
        %v5774 = vmul.f32 %v5742, %v5294
        %v5775 = vmul.f32 %v5743, %v5295
        %v5776 = vmul.f32 %v5744, %v5296
        %v5777 = vmul.f32 %v5745, %v5297
        %v5778 = vmul.f32 %v5746, 1.442695
        %v5779 = vpow.pop %v5778
        %v5780 = vmul.f32 %v5747, 1.442695
        %v5781 = vpow.pop %v5780
        %v5782 = vmul.f32 %v5748, 1.442695
        %v5783 = vpow.pop %v5782
        %v5784 = vmul.f32 %v5749, 1.442695
        %v5785 = vpow.pop %v5784
        %v5786 = vmul.f32 %v5750, 1.442695
        %v5787 = vpow.pop %v5786
        %v5788 = vmul.f32 %v5751, 1.442695
        %v5789 = vpow.pop %v5788
        %v5790 = vmul.f32 %v5752, 1.442695
        %v5791 = vpow.pop %v5790
        %v5792 = vmul.f32 %v5753, 1.442695
        %v5793 = vpow.pop %v5792
        %v5794 = vmul.f32 %v5754, 1.442695
        %v5795 = vpow.pop %v5794
        %v5796 = vmul.f32 %v5755, 1.442695
        %v5797 = vpow.pop %v5796
        %v5798 = vmul.f32 %v5756, 1.442695
        %v5799 = vpow.pop %v5798
        %v5800 = vmul.f32 %v5757, 1.442695
        %v5801 = vpow.pop %v5800
        %v5802 = vmul.f32 %v5758, 1.442695
        %v5803 = vpow.pop %v5802
        %v5804 = vmul.f32 %v5759, 1.442695
        %v5805 = vpow.pop %v5804
        %v5806 = vmul.f32 %v5760, 1.442695
        %v5807 = vpow.pop %v5806
        %v5808 = vmul.f32 %v5761, 1.442695
        %v5809 = vpow.pop %v5808
        %v5810 = vmul.f32 %v5762, 1.442695
        %v5811 = vpow.pop %v5810
        %v5812 = vmul.f32 %v5763, 1.442695
        %v5813 = vpow.pop %v5812
        %v5814 = vmul.f32 %v5764, 1.442695
        %v5815 = vpow.pop %v5814
        %v5816 = vmul.f32 %v5765, 1.442695
        %v5817 = vpow.pop %v5816
        %v5818 = vmul.f32 %v5766, 1.442695
        %v5819 = vpow.pop %v5818
        %v5820 = vmul.f32 %v5767, 1.442695
        %v5821 = vpow.pop %v5820
        %v5822 = vmul.f32 %v5768, 1.442695
        %v5823 = vpow.pop %v5822
        %v5824 = vmul.f32 %v5769, 1.442695
        %v5825 = vpow.pop %v5824
        %v5826 = vmul.f32 %v5770, 1.442695
        %v5827 = vpow.pop %v5826
        %v5828 = vmul.f32 %v5771, 1.442695
        %v5829 = vpow.pop %v5828
        %v5830 = vmul.f32 %v5772, 1.442695
        %v5831 = vpow.pop %v5830
        %v5832 = vmul.f32 %v5773, 1.442695
        %v5833 = vpow.pop %v5832
        %v5834 = vmul.f32 %v5774, 1.442695
        %v5835 = vpow.pop %v5834
        %v5836 = vmul.f32 %v5775, 1.442695
        %v5837 = vpow.pop %v5836
        %v5838 = vmul.f32 %v5776, 1.442695
        %v5839 = vpow.pop %v5838
        %v5840 = vmul.f32 %v5777, 1.442695
        %v5841 = vpow.pop %v5840
        %v5842 = vmul.f32 %v5682, %v5779
        %v5843 = vmul.f32 %v5683, %v5781
        %v5844 = vmul.f32 %v5684, %v5783
        %v5845 = vmul.f32 %v5685, %v5785
        %v5846 = vmul.f32 %v5686, %v5787
        %v5847 = vmul.f32 %v5687, %v5789
        %v5848 = vmul.f32 %v5688, %v5791
        %v5849 = vmul.f32 %v5689, %v5793
        %v5850 = vmul.f32 %v5690, %v5795
        %v5851 = vmul.f32 %v5691, %v5797
        %v5852 = vmul.f32 %v5692, %v5799
        %v5853 = vmul.f32 %v5693, %v5801
        %v5854 = vmul.f32 %v5694, %v5803
        %v5855 = vmul.f32 %v5695, %v5805
        %v5856 = vmul.f32 %v5696, %v5807
        %v5857 = vmul.f32 %v5697, %v5809
        %v5858 = vmul.f32 %v5698, %v5811
        %v5859 = vmul.f32 %v5699, %v5813
        %v5860 = vmul.f32 %v5700, %v5815
        %v5861 = vmul.f32 %v5701, %v5817
        %v5862 = vmul.f32 %v5702, %v5819
        %v5863 = vmul.f32 %v5703, %v5821
        %v5864 = vmul.f32 %v5704, %v5823
        %v5865 = vmul.f32 %v5705, %v5825
        %v5866 = vmul.f32 %v5706, %v5827
        %v5867 = vmul.f32 %v5707, %v5829
        %v5868 = vmul.f32 %v5708, %v5831
        %v5869 = vmul.f32 %v5709, %v5833
        %v5870 = vmul.f32 %v5710, %v5835
        %v5871 = vmul.f32 %v5711, %v5837
        %v5872 = vmul.f32 %v5712, %v5839
        %v5873 = vmul.f32 %v5713, %v5841
        %v5874 = vsub.f32 1.0, %v5842
        %v5875 = vsub.f32 1.0, %v5843
        %v5876 = vsub.f32 1.0, %v5844
        %v5877 = vsub.f32 1.0, %v5845
        %v5878 = vsub.f32 1.0, %v5846
        %v5879 = vsub.f32 1.0, %v5847
        %v5880 = vsub.f32 1.0, %v5848
        %v5881 = vsub.f32 1.0, %v5849
        %v5882 = vsub.f32 1.0, %v5850
        %v5883 = vsub.f32 1.0, %v5851
        %v5884 = vsub.f32 1.0, %v5852
        %v5885 = vsub.f32 1.0, %v5853
        %v5886 = vsub.f32 1.0, %v5854
        %v5887 = vsub.f32 1.0, %v5855
        %v5888 = vsub.f32 1.0, %v5856
        %v5889 = vsub.f32 1.0, %v5857
        %v5890 = vsub.f32 1.0, %v5858
        %v5891 = vsub.f32 1.0, %v5859
        %v5892 = vsub.f32 1.0, %v5860
        %v5893 = vsub.f32 1.0, %v5861
        %v5894 = vsub.f32 1.0, %v5862
        %v5895 = vsub.f32 1.0, %v5863
        %v5896 = vsub.f32 1.0, %v5864
        %v5897 = vsub.f32 1.0, %v5865
        %v5898 = vsub.f32 1.0, %v5866
        %v5899 = vsub.f32 1.0, %v5867
        %v5900 = vsub.f32 1.0, %v5868
        %v5901 = vsub.f32 1.0, %v5869
        %v5902 = vsub.f32 1.0, %v5870
        %v5903 = vsub.f32 1.0, %v5871
        %v5904 = vsub.f32 1.0, %v5872
        %v5905 = vsub.f32 1.0, %v5873
        %vm5906 = vcmp.ge.f32.partialorder %v5234, 0.0
        %vm5907 = vcmp.ge.f32.partialorder %v5235, 0.0
        %vm5908 = vcmp.ge.f32.partialorder %v5236, 0.0
        %vm5909 = vcmp.ge.f32.partialorder %v5237, 0.0
        %vm5910 = vcmp.ge.f32.partialorder %v5238, 0.0
        %vm5911 = vcmp.ge.f32.partialorder %v5239, 0.0
        %vm5912 = vcmp.ge.f32.partialorder %v5240, 0.0
        %vm5913 = vcmp.ge.f32.partialorder %v5241, 0.0
        %vm5914 = vcmp.ge.f32.partialorder %v5242, 0.0
        %vm5915 = vcmp.ge.f32.partialorder %v5243, 0.0
        %vm5916 = vcmp.ge.f32.partialorder %v5244, 0.0
        %vm5917 = vcmp.ge.f32.partialorder %v5245, 0.0
        %vm5918 = vcmp.ge.f32.partialorder %v5246, 0.0
        %vm5919 = vcmp.ge.f32.partialorder %v5247, 0.0
        %vm5920 = vcmp.ge.f32.partialorder %v5248, 0.0
        %vm5921 = vcmp.ge.f32.partialorder %v5249, 0.0
        %vm5922 = vcmp.ge.f32.partialorder %v5250, 0.0
        %vm5923 = vcmp.ge.f32.partialorder %v5251, 0.0
        %vm5924 = vcmp.ge.f32.partialorder %v5252, 0.0
        %vm5925 = vcmp.ge.f32.partialorder %v5253, 0.0
        %vm5926 = vcmp.ge.f32.partialorder %v5254, 0.0
        %vm5927 = vcmp.ge.f32.partialorder %v5255, 0.0
        %vm5928 = vcmp.ge.f32.partialorder %v5256, 0.0
        %vm5929 = vcmp.ge.f32.partialorder %v5257, 0.0
        %vm5930 = vcmp.ge.f32.partialorder %v5258, 0.0
        %vm5931 = vcmp.ge.f32.partialorder %v5259, 0.0
        %vm5932 = vcmp.ge.f32.partialorder %v5260, 0.0
        %vm5933 = vcmp.ge.f32.partialorder %v5261, 0.0
        %vm5934 = vcmp.ge.f32.partialorder %v5262, 0.0
        %vm5935 = vcmp.ge.f32.partialorder %v5263, 0.0
        %vm5936 = vcmp.ge.f32.partialorder %v5264, 0.0
        %vm5937 = vcmp.ge.f32.partialorder %v5265, 0.0
        %v5938 = vsub.f32 0.0, %v5874
        %v5939 = vsub.f32 0.0, %v5875
        %v5940 = vsub.f32 0.0, %v5876
        %v5941 = vsub.f32 0.0, %v5877
        %v5942 = vsub.f32 0.0, %v5878
        %v5943 = vsub.f32 0.0, %v5879
        %v5944 = vsub.f32 0.0, %v5880
        %v5945 = vsub.f32 0.0, %v5881
        %v5946 = vsub.f32 0.0, %v5882
        %v5947 = vsub.f32 0.0, %v5883
        %v5948 = vsub.f32 0.0, %v5884
        %v5949 = vsub.f32 0.0, %v5885
        %v5950 = vsub.f32 0.0, %v5886
        %v5951 = vsub.f32 0.0, %v5887
        %v5952 = vsub.f32 0.0, %v5888
        %v5953 = vsub.f32 0.0, %v5889
        %v5954 = vsub.f32 0.0, %v5890
        %v5955 = vsub.f32 0.0, %v5891
        %v5956 = vsub.f32 0.0, %v5892
        %v5957 = vsub.f32 0.0, %v5893
        %v5958 = vsub.f32 0.0, %v5894
        %v5959 = vsub.f32 0.0, %v5895
        %v5960 = vsub.f32 0.0, %v5896
        %v5961 = vsub.f32 0.0, %v5897
        %v5962 = vsub.f32 0.0, %v5898
        %v5963 = vsub.f32 0.0, %v5899
        %v5964 = vsub.f32 0.0, %v5900
        %v5965 = vsub.f32 0.0, %v5901
        %v5966 = vsub.f32 0.0, %v5902
        %v5967 = vsub.f32 0.0, %v5903
        %v5968 = vsub.f32 0.0, %v5904
        %v5969 = vsub.f32 0.0, %v5905
        %v5970 = vsel %vm5906, %v5874, %v5938
        %v5971 = vsel %vm5907, %v5875, %v5939
        %v5972 = vsel %vm5908, %v5876, %v5940
        %v5973 = vsel %vm5909, %v5877, %v5941
        %v5974 = vsel %vm5910, %v5878, %v5942
        %v5975 = vsel %vm5911, %v5879, %v5943
        %v5976 = vsel %vm5912, %v5880, %v5944
        %v5977 = vsel %vm5913, %v5881, %v5945
        %v5978 = vsel %vm5914, %v5882, %v5946
        %v5979 = vsel %vm5915, %v5883, %v5947
        %v5980 = vsel %vm5916, %v5884, %v5948
        %v5981 = vsel %vm5917, %v5885, %v5949
        %v5982 = vsel %vm5918, %v5886, %v5950
        %v5983 = vsel %vm5919, %v5887, %v5951
        %v5984 = vsel %vm5920, %v5888, %v5952
        %v5985 = vsel %vm5921, %v5889, %v5953
        %v5986 = vsel %vm5922, %v5890, %v5954
        %v5987 = vsel %vm5923, %v5891, %v5955
        %v5988 = vsel %vm5924, %v5892, %v5956
        %v5989 = vsel %vm5925, %v5893, %v5957
        %v5990 = vsel %vm5926, %v5894, %v5958
        %v5991 = vsel %vm5927, %v5895, %v5959
        %v5992 = vsel %vm5928, %v5896, %v5960
        %v5993 = vsel %vm5929, %v5897, %v5961
        %v5994 = vsel %vm5930, %v5898, %v5962
        %v5995 = vsel %vm5931, %v5899, %v5963
        %v5996 = vsel %vm5932, %v5900, %v5964
        %v5997 = vsel %vm5933, %v5901, %v5965
        %v5998 = vsel %vm5934, %v5902, %v5966
        %v5999 = vsel %vm5935, %v5903, %v5967
        %v6000 = vsel %vm5936, %v5904, %v5968
        %v6001 = vsel %vm5937, %v5905, %v5969
        %v6002 = vadd.f32 %v5970, 1.0
        %v6003 = vadd.f32 %v5971, 1.0
        %v6004 = vadd.f32 %v5972, 1.0
        %v6005 = vadd.f32 %v5973, 1.0
        %v6006 = vadd.f32 %v5974, 1.0
        %v6007 = vadd.f32 %v5975, 1.0
        %v6008 = vadd.f32 %v5976, 1.0
        %v6009 = vadd.f32 %v5977, 1.0
        %v6010 = vadd.f32 %v5978, 1.0
        %v6011 = vadd.f32 %v5979, 1.0
        %v6012 = vadd.f32 %v5980, 1.0
        %v6013 = vadd.f32 %v5981, 1.0
        %v6014 = vadd.f32 %v5982, 1.0
        %v6015 = vadd.f32 %v5983, 1.0
        %v6016 = vadd.f32 %v5984, 1.0
        %v6017 = vadd.f32 %v5985, 1.0
        %v6018 = vadd.f32 %v5986, 1.0
        %v6019 = vadd.f32 %v5987, 1.0
        %v6020 = vadd.f32 %v5988, 1.0
        %v6021 = vadd.f32 %v5989, 1.0
        %v6022 = vadd.f32 %v5990, 1.0
        %v6023 = vadd.f32 %v5991, 1.0
        %v6024 = vadd.f32 %v5992, 1.0
        %v6025 = vadd.f32 %v5993, 1.0
        %v6026 = vadd.f32 %v5994, 1.0
        %v6027 = vadd.f32 %v5995, 1.0
        %v6028 = vadd.f32 %v5996, 1.0
        %v6029 = vadd.f32 %v5997, 1.0
        %v6030 = vadd.f32 %v5998, 1.0
        %v6031 = vadd.f32 %v5999, 1.0
        %v6032 = vadd.f32 %v6000, 1.0
        %v6033 = vadd.f32 %v6001, 1.0
        %v6034 = vmul.f32 %v5202, %v6002
        %v6035 = vmul.f32 %v5203, %v6003
        %v6036 = vmul.f32 %v5204, %v6004
        %v6037 = vmul.f32 %v5205, %v6005
        %v6038 = vmul.f32 %v5206, %v6006
        %v6039 = vmul.f32 %v5207, %v6007
        %v6040 = vmul.f32 %v5208, %v6008
        %v6041 = vmul.f32 %v5209, %v6009
        %v6042 = vmul.f32 %v5210, %v6010
        %v6043 = vmul.f32 %v5211, %v6011
        %v6044 = vmul.f32 %v5212, %v6012
        %v6045 = vmul.f32 %v5213, %v6013
        %v6046 = vmul.f32 %v5214, %v6014
        %v6047 = vmul.f32 %v5215, %v6015
        %v6048 = vmul.f32 %v5216, %v6016
        %v6049 = vmul.f32 %v5217, %v6017
        %v6050 = vmul.f32 %v5218, %v6018
        %v6051 = vmul.f32 %v5219, %v6019
        %v6052 = vmul.f32 %v5220, %v6020
        %v6053 = vmul.f32 %v5221, %v6021
        %v6054 = vmul.f32 %v5222, %v6022
        %v6055 = vmul.f32 %v5223, %v6023
        %v6056 = vmul.f32 %v5224, %v6024
        %v6057 = vmul.f32 %v5225, %v6025
        %v6058 = vmul.f32 %v5226, %v6026
        %v6059 = vmul.f32 %v5227, %v6027
        %v6060 = vmul.f32 %v5228, %v6028
        %v6061 = vmul.f32 %v5229, %v6029
        %v6062 = vmul.f32 %v5230, %v6030
        %v6063 = vmul.f32 %v5231, %v6031
        %v6064 = vmul.f32 %v5232, %v6032
        %v6065 = vmul.f32 %v5233, %v6033
        %6066 = vst.msk [vmem:[%s239] sm:$0xff] %vm376, %v6034
        %6067 = vst.msk [vmem:[%s239 + $0x8] sm:$0xff] %vm376, %v6035
        %6068 = vst.msk [vmem:[%s239 + $0x10] sm:$0xff] %vm376, %v6036
        %6069 = vst.msk [vmem:[%s239 + $0x18] sm:$0xff] %vm376, %v6037
        %6070 = vst.msk [vmem:[%s239 + $0x20] sm:$0xff] %vm376, %v6038
        %6071 = vst.msk [vmem:[%s239 + $0x28] sm:$0xff] %vm376, %v6039
        %6072 = vst.msk [vmem:[%s239 + $0x30] sm:$0xff] %vm376, %v6040
        %6073 = vst.msk [vmem:[%s239 + $0x38] sm:$0xff] %vm376, %v6041
        %6074 = vst.msk [vmem:[%s239 + $0x40] sm:$0xff] %vm376, %v6042
        %6075 = vst.msk [vmem:[%s239 + $0x48] sm:$0xff] %vm376, %v6043
        %6076 = vst.msk [vmem:[%s239 + $0x50] sm:$0xff] %vm376, %v6044
        %6077 = vst.msk [vmem:[%s239 + $0x58] sm:$0xff] %vm376, %v6045
        %6078 = vst.msk [vmem:[%s239 + $0x60] sm:$0xff] %vm376, %v6046
        %6079 = vst.msk [vmem:[%s239 + $0x68] sm:$0xff] %vm376, %v6047
        %6080 = vst.msk [vmem:[%s239 + $0x70] sm:$0xff] %vm376, %v6048
        %6081 = vst.msk [vmem:[%s239 + $0x78] sm:$0xff] %vm376, %v6049
        %6082 = vst.msk [vmem:[%s239 + $0x80] sm:$0xff] %vm376, %v6050
        %6083 = vst.msk [vmem:[%s239 + $0x88] sm:$0xff] %vm376, %v6051
        %6084 = vst.msk [vmem:[%s239 + $0x90] sm:$0xff] %vm376, %v6052
        %6085 = vst.msk [vmem:[%s239 + $0x98] sm:$0xff] %vm376, %v6053
        %6086 = vst.msk [vmem:[%s239 + $0xa0] sm:$0xff] %vm376, %v6054
        %6087 = vst.msk [vmem:[%s239 + $0xa8] sm:$0xff] %vm376, %v6055
        %6088 = vst.msk [vmem:[%s239 + $0xb0] sm:$0xff] %vm376, %v6056
        %6089 = vst.msk [vmem:[%s239 + $0xb8] sm:$0xff] %vm376, %v6057
        %6090 = vst.msk [vmem:[%s239 + $0xc0] sm:$0xff] %vm376, %v6058
        %6091 = vst.msk [vmem:[%s239 + $0xc8] sm:$0xff] %vm376, %v6059
        %6092 = vst.msk [vmem:[%s239 + $0xd0] sm:$0xff] %vm376, %v6060
        %6093 = vst.msk [vmem:[%s239 + $0xd8] sm:$0xff] %vm376, %v6061
        %6094 = vst.msk [vmem:[%s239 + $0xe0] sm:$0xff] %vm376, %v6062
        %6095 = vst.msk [vmem:[%s239 + $0xe8] sm:$0xff] %vm376, %v6063
        %6096 = vst.msk [vmem:[%s239 + $0xf0] sm:$0xff] %vm376, %v6064
        %6097 = vst.msk [vmem:[%s239 + $0xf8] sm:$0xff] %vm376, %v6065
        %p6098 = scmp.lt.s32.totalorder %s17, 1
        %s6099 = scalar_select %p6098, %s17, 1
        %s6100 = smul.addr %s6099, 32
        %s6101 = smul.addr %s6100, 8
        %s6102 = scalar_lea.vmem %s5, %s6101
        // Predicated region
        $region45: #{tpu_custom_call.1} parent=39 // pred_check
          %p6103 = pneg %p145
        $region46: #{tpu_custom_call.1} parent=39 // pred_check_branch
          %6105 = sbr.rel (%p6103) target = $region48
        $region47: #{tpu_custom_call.1} parent=39 // pred_region
          _
        $region48: #{tpu_custom_call.1} parent=39 // pred_fallthru
          _
      $region40: #{tpu_custom_call.1} parent=5 // pred_fallthru
        _
      %p6106 = scmp.le.s32.totalorder 2, %s12
      // Predicated region
      $region49: #{tpu_custom_call.1} parent=5 // pred_check
        %p6107 = pneg %p6106
      $region50: #{tpu_custom_call.1} parent=5 // pred_check_branch
        %6109 = sbr.rel (%p6107) target = $region52
      $region51: #{tpu_custom_call.1} parent=5 // pred_region
        %s6110 = ssub.s32 %s12, 2
        // Predicated region
        $region53: #{tpu_custom_call.1} parent=51 // pred_check
          %p6111 = pneg %p151
        $region54: #{tpu_custom_call.1} parent=51 // pred_check_branch
          %6113 = sbr.rel (%p6111) target = $region56
        $region55: #{tpu_custom_call.1} parent=51 // pred_region
          %p6114 = scmp.lt.s32.totalorder %s18, 1
          %s6115 = scalar_select %p6114, %s18, 1
          %s6116 = smul.addr %s6115, 32
          %s6117 = smul.addr %s6116, 8
          %s6118 = scalar_lea.vmem %s5, %s6117
        $region56: #{tpu_custom_call.1} parent=51 // pred_fallthru
          _
      $region52: #{tpu_custom_call.1} parent=5 // pred_fallthru
        _
    $region6: #{tpu_custom_call.1} parent=1 // loop_footer
      %s16 = sadd.s32 1, %s12
    $region7: #{tpu_custom_call.1} parent=1 // loop_footer_branch
      %11 = sbr.rel target = $region3
    $region8: #{tpu_custom_call.1} parent=1 // loop_exit
      _
    %6119 = vsyncpa [#allocation4], 1
    %s6120 = scalar_lea.sflag [#allocation4], 1
    %6121 = vsyncpa %s6120, 1

</llo_original>
